<compile_context>
chip_gen: v7x
topology: tpu7x:2x2x1
jax: 0.10.0
libtpu: 0.0.40
codegen_flags: <defaults>
</compile_context>

<pallas_src>
import functools
import math

import jax
import jax.numpy as jnp
from jax.experimental import pallas as pl
from jax.experimental.pallas import tpu as pltpu


# ---------------------------------------------------------------------------
# Pallas kernels
# ---------------------------------------------------------------------------

def _mm_bn_kernel(x_ref, w_ref, s_ref, b_ref, o_ref, *, relu):
    """out = [relu]((x @ w) * scale + bias)  -- conv(im2col) + folded BN."""
    acc = jnp.dot(x_ref[...], w_ref[...], preferred_element_type=jnp.float32)
    acc = acc * s_ref[...] + b_ref[...]
    if relu:
        acc = jnp.maximum(acc, 0.0)
    o_ref[...] = acc.astype(o_ref.dtype)


def _mm_bn_res_relu_kernel(x_ref, w_ref, s_ref, b_ref, r_ref, o_ref):
    """out = relu((x @ w) * scale + bias + residual)  -- bottleneck tail."""
    acc = jnp.dot(x_ref[...], w_ref[...], preferred_element_type=jnp.float32)
    acc = acc * s_ref[...] + b_ref[...] + r_ref[...]
    o_ref[...] = jnp.maximum(acc, 0.0).astype(o_ref.dtype)


def _max_reduce_kernel(p_ref, o_ref):
    """Max over the 49 pooling-window taps (leading axis)."""
    o_ref[...] = jnp.max(p_ref[...], axis=0)


def _sfem_kernel(f_ref, m1_ref, m2_ref, o_ref, *, inv_sqrt_c):
    """SFEM for one batch element.  f: [HW, C]; m1/m2: [HW, 1]."""
    f = f_ref[0]
    m1 = m1_ref[0]
    m2 = m2_ref[0]
    eps = 1e-8
    # Masked channel means v_s / v_ns : [1, C]
    v_s = jnp.sum(f * m1, axis=0, keepdims=True) / (jnp.sum(m1) + eps)
    v_ns = jnp.sum(f * m2, axis=0, keepdims=True) / (jnp.sum(m2) + eps)
    # scores = q @ k -> [HW, 2], done as lane reductions (keep thin matmuls
    # off the MXU).
    s1 = jnp.sum(f * v_s, axis=1, keepdims=True)
    s2 = jnp.sum(f * v_ns, axis=1, keepdims=True)
    m = jnp.maximum(s1, s2)
    e1 = jnp.exp(s1 - m)
    e2 = jnp.exp(s2 - m)
    inv_den = 1.0 / (e1 + e2)
    a1 = e1 * inv_den * inv_sqrt_c
    a2 = e2 * inv_den * inv_sqrt_c
    f_sa = a1 * v_s + a2 * v_ns                       # atten @ v : [HW, C]
    o_ref[...] = (f + f_sa * (m1 + m2))[None]


# ---------------------------------------------------------------------------
# Wrappers (tiling, im2col layout plumbing)
# ---------------------------------------------------------------------------

def _round_up(n, m):
    return ((n + m - 1) // m) * m


def _pick_row_tile(n_rows, k, cap=512, budget_bytes=2 * 1024 * 1024):
    """Largest multiple-of-8 row tile <= cap whose LHS slab fits the budget."""
    by_budget = max(8, (budget_bytes // max(k * 4, 1)) // 8 * 8)
    return int(min(cap, by_budget, _round_up(n_rows, 8)))


def _fused_matmul(x, w, scale, bias, *, relu, residual=None):
    """y = [relu]((x @ w) * scale + bias [+ residual]) with large row tiles."""
    n, k = x.shape
    cout = w.shape[1]
    tm = _pick_row_tile(n, k)
    n_pad = _round_up(n, tm)
    if n_pad != n:
        x = jnp.pad(x, ((0, n_pad - n), (0, 0)))
        if residual is not None:
            residual = jnp.pad(residual, ((0, n_pad - n), (0, 0)))
    grid = (n_pad // tm,)

    x_spec = pl.BlockSpec((tm, k), lambda i: (i, 0))
    w_spec = pl.BlockSpec((k, cout), lambda i: (0, 0))
    v_spec = pl.BlockSpec((1, cout), lambda i: (0, 0))
    o_spec = pl.BlockSpec((tm, cout), lambda i: (i, 0))

    scale2 = scale.reshape(1, cout).astype(jnp.float32)
    bias2 = bias.reshape(1, cout).astype(jnp.float32)
    out_shape = jax.ShapeDtypeStruct((n_pad, cout), x.dtype)
    cparams = pltpu.CompilerParams(dimension_semantics=("parallel",))

    if residual is None:
        out = pl.pallas_call(
            functools.partial(_mm_bn_kernel, relu=relu),
            out_shape=out_shape,
            grid_spec=pl.GridSpec(
                grid=grid,
                in_specs=[x_spec, w_spec, v_spec, v_spec],
                out_specs=o_spec),
            compiler_params=cparams,
        )(x, w, scale2, bias2)
    else:
        out = pl.pallas_call(
            _mm_bn_res_relu_kernel,
            out_shape=out_shape,
            grid_spec=pl.GridSpec(
                grid=grid,
                in_specs=[x_spec, w_spec, v_spec, v_spec, o_spec],
                out_specs=o_spec),
            compiler_params=cparams,
        )(x, w, scale2, bias2, residual)
    return out[:n]


def _im2col(x, ksize, stride, pad):
    """x: [B,H,W,C] NHWC -> patches [B,Ho,Wo,k*k*C] (layout plumbing only)."""
    b, h, w, c = x.shape
    ho = (h + 2 * pad - ksize) // stride + 1
    wo = (w + 2 * pad - ksize) // stride + 1
    xp = jnp.pad(x, ((0, 0), (pad, pad), (pad, pad), (0, 0)))
    taps = []
    for di in range(ksize):
        for dj in range(ksize):
            taps.append(xp[:, di:di + stride * ho:stride,
                           dj:dj + stride * wo:stride, :])
    return jnp.concatenate(taps, axis=-1), ho, wo


def _conv_bn(x, w_hwio, scale, bias, *, stride, pad, relu, residual=None):
    """Conv2d (no bias) + folded BN [+ residual] [+ ReLU] in one Pallas call."""
    b = x.shape[0]
    kh, kw, cin, cout = w_hwio.shape
    if kh == 1 and kw == 1 and pad == 0 and stride == 1:
        ho, wo = x.shape[1], x.shape[2]
        flat = x.reshape(b * ho * wo, cin)
    else:
        patches, ho, wo = _im2col(x, kh, stride, pad)
        flat = patches.reshape(b * ho * wo, kh * kw * cin)
    res_flat = None if residual is None else residual.reshape(b * ho * wo, cout)
    y = _fused_matmul(flat, w_hwio.reshape(kh * kw * cin, cout), scale, bias,
                      relu=relu, residual=res_flat)
    return y.reshape(b, ho, wo, cout)


def _maxpool_7x7_s2_p3(x):
    b, h, w, c = x.shape
    k, s, p = 7, 2, 3
    ho = (h + 2 * p - k) // s + 1
    wo = (w + 2 * p - k) // s + 1
    neg = jnp.finfo(x.dtype).min
    xp = jnp.pad(x, ((0, 0), (p, p), (p, p), (0, 0)), constant_values=neg)
    taps = []
    for di in range(k):
        for dj in range(k):
            taps.append(xp[:, di:di + s * ho:s, dj:dj + s * wo:s, :])
    patches = jnp.stack(taps, axis=0).reshape(k * k, b * ho * wo, c)

    n = b * ho * wo
    tn = int(min(512, _round_up(n, 8)))
    n_pad = _round_up(n, tn)
    if n_pad != n:
        patches = jnp.pad(patches, ((0, 0), (0, n_pad - n), (0, 0)),
                          constant_values=neg)
    out = pl.pallas_call(
        _max_reduce_kernel,
        out_shape=jax.ShapeDtypeStruct((n_pad, c), x.dtype),
        grid_spec=pl.GridSpec(
            grid=(n_pad // tn,),
            in_specs=[pl.BlockSpec((k * k, tn, c), lambda i: (0, i, 0))],
            out_specs=pl.BlockSpec((tn, c), lambda i: (i, 0))),
        compiler_params=pltpu.CompilerParams(dimension_semantics=("parallel",)),
    )(patches)
    return out[:n].reshape(b, ho, wo, c)


def _sfem(f, m1, m2):
    """f: [B,H,W,C] NHWC; m1,m2: [B,1,H,W] masks (as in the PyTorch module)."""
    b, h, w, c = f.shape
    hw = h * w
    f2 = f.reshape(b, hw, c)
    m1r = m1.reshape(b, hw, 1).astype(f.dtype)
    m2r = m2.reshape(b, hw, 1).astype(f.dtype)
    out = pl.pallas_call(
        functools.partial(_sfem_kernel, inv_sqrt_c=1.0 / math.sqrt(c)),
        out_shape=jax.ShapeDtypeStruct((b, hw, c), f.dtype),
        grid_spec=pl.GridSpec(
            grid=(b,),
            in_specs=[pl.BlockSpec((1, hw, c), lambda i: (i, 0, 0)),
                      pl.BlockSpec((1, hw, 1), lambda i: (i, 0, 0)),
                      pl.BlockSpec((1, hw, 1), lambda i: (i, 0, 0))],
            out_specs=pl.BlockSpec((1, hw, c), lambda i: (i, 0, 0))),
        compiler_params=pltpu.CompilerParams(dimension_semantics=("parallel",)),
    )(f2, m1r, m2r)
    return out.reshape(b, h, w, c)


# ---------------------------------------------------------------------------
# evo_encoder forward (Pallas)
# ---------------------------------------------------------------------------

def evo_encoder_forward(x, m1, m2, params):
    """x: [B,3,H,W] NCHW; m1,m2: [B,1,H/4,W/4]. Returns (l1, l2) in NCHW."""
    xh = jnp.transpose(x, (0, 2, 3, 1))                      # NHWC
    s, b = params["bn1"]
    l1 = _conv_bn(xh, params["conv1_w"], s, b, stride=2, pad=3, relu=True)
    l1 = _maxpool_7x7_s2_p3(l1)
    l1 = _sfem(l1, m1, m2)

    out = l1
    for blk in params["layer1"]:
        inp = out
        s1, b1 = blk["bn1"]
        h = _conv_bn(inp, blk["w1"], s1, b1, stride=1, pad=0, relu=True)
        s2, b2 = blk["bn2"]
        h = _conv_bn(h, blk["w2"], s2, b2, stride=1, pad=3, relu=True)
        if "wd" in blk:
            sd, bd = blk["bnd"]
            res = _conv_bn(inp, blk["wd"], sd, bd, stride=1, pad=0, relu=False)
        else:
            res = inp
        s3, b3 = blk["bn3"]
        out = _conv_bn(h, blk["w3"], s3, b3, stride=1, pad=0, relu=True,
                       residual=res)
    l2 = _sfem(out, m1, m2)
    return jnp.transpose(l1, (0, 3, 1, 2)), jnp.transpose(l2, (0, 3, 1, 2))


# ---------------------------------------------------------------------------
# Parameters & pure-JAX reference
# ---------------------------------------------------------------------------

def init_params(key):
    kit = iter(jax.random.split(key, 40))

    def conv_w(kh, kw, cin, cout):
        fan_in = kh * kw * cin
        return (jax.random.normal(next(kit), (kh, kw, cin, cout), jnp.float32)
                * jnp.sqrt(2.0 / fan_in))

    def bn(c):
        k1, k2 = jax.random.split(next(kit))
        scale = jax.random.uniform(k1, (c,), jnp.float32, 0.8, 1.2)
        bias = 0.05 * jax.random.normal(k2, (c,), jnp.float32)
        return scale, bias

    p = {"conv1_w": conv_w(7, 7, 3, 64), "bn1": bn(64)}
    blocks = []
    inplanes = 64
    for i in range(3):
        blk = {"w1": conv_w(1, 1, inplanes, 64), "bn1": bn(64),
               "w2": conv_w(7, 7, 64, 64), "bn2": bn(64),
               "w3": conv_w(1, 1, 64, 256), "bn3": bn(256)}
        if i == 0:
            blk["wd"] = conv_w(1, 1, inplanes, 256)
            blk["bnd"] = bn(256)
        blocks.append(blk)
        inplanes = 256
    p["layer1"] = blocks
    return p


def _conv_ref(x, w, stride, pad):
    return jax.lax.conv_general_dilated(
        x, w, window_strides=(stride, stride),
        padding=((pad, pad), (pad, pad)),
        dimension_numbers=("NHWC", "HWIO", "NHWC"),
        precision=jax.lax.Precision.HIGHEST)


def _sfem_ref(f, m1, m2):
    bsz, h, w, c = f.shape
    hw = h * w
    f2 = f.reshape(bsz, hw, c)
    m1r = m1.reshape(bsz, hw, 1)
    m2r = m2.reshape(bsz, hw, 1)
    v_s = jnp.sum(f2 * m1r, axis=1) / (jnp.sum(m1r, axis=1) + 1e-8)
    v_ns = jnp.sum(f2 * m2r, axis=1) / (jnp.sum(m2r, axis=1) + 1e-8)
    k = jnp.stack([v_s, v_ns], axis=-1)                        # [B, C, 2]
    v = jnp.transpose(k, (0, 2, 1))                            # [B, 2, C]
    scores = jnp.einsum("bnc,bck->bnk", f2, k,
                        precision=jax.lax.Precision.HIGHEST)
    atten = jax.nn.softmax(scores, axis=-1) / math.sqrt(c)
    f_sa = jnp.einsum("bnk,bkc->bnc", atten, v,
                      precision=jax.lax.Precision.HIGHEST)
    return (f2 + f_sa * (m1r + m2r)).reshape(bsz, h, w, c)


def evo_encoder_ref(x, m1, m2, params):
    xh = jnp.transpose(x, (0, 2, 3, 1))
    s, b = params["bn1"]
    h = jnp.maximum(_conv_ref(xh, params["conv1_w"], 2, 3) * s + b, 0.0)
    l1 = jax.lax.reduce_window(
        h, -jnp.inf, jax.lax.max, (1, 7, 7, 1), (1, 2, 2, 1),
        padding=((0, 0), (3, 3), (3, 3), (0, 0)))
    l1 = _sfem_ref(l1, m1, m2)
    out = l1
    for blk in params["layer1"]:
        inp = out
        s1, b1 = blk["bn1"]
        h = jnp.maximum(_conv_ref(inp, blk["w1"], 1, 0) * s1 + b1, 0.0)
        s2, b2 = blk["bn2"]
        h = jnp.maximum(_conv_ref(h, blk["w2"], 1, 3) * s2 + b2, 0.0)
        s3, b3 = blk["bn3"]
        h = _conv_ref(h, blk["w3"], 1, 0) * s3 + b3
        if "wd" in blk:
            sd, bd = blk["bnd"]
            res = _conv_ref(inp, blk["wd"], 1, 0) * sd + bd
        else:
            res = inp
        out = jnp.maximum(h + res, 0.0)
    l2 = _sfem_ref(out, m1, m2)
    return jnp.transpose(l1, (0, 3, 1, 2)), jnp.transpose(l2, (0, 3, 1, 2))


# ---------------------------------------------------------------------------
# Test
# ---------------------------------------------------------------------------

if __name__ == "__main__":
    B, H, W = 2, 16, 16
    key = jax.random.PRNGKey(0)
    kx, km, kp = jax.random.split(key, 3)
    x = jax.random.normal(kx, (B, 3, H, W), jnp.float32)
    hm, wm = H // 4, W // 4                      # feature-map resolution
    m1 = (jax.random.uniform(km, (B, 1, hm, wm)) > 0.5).astype(jnp.float32)
    m2 = 1.0 - m1
    params = init_params(kp)

    fwd = jax.jit(evo_encoder_forward)
    l1, l2 = jax.block_until_ready(fwd(x, m1, m2, params))

    r1, r2 = evo_encoder_ref(x, m1, m2, params)
    assert l1.shape == (B, 64, hm, wm) and l2.shape == (B, 256, hm, wm)

    def max_rel_err(a, b):
        return float(jnp.max(jnp.abs(a - b)) / (jnp.max(jnp.abs(b)) + 1e-6))

    assert max_rel_err(l1, r1) < 1e-2, "l1 mismatch vs reference"
    assert max_rel_err(l2, r2) < 1e-2, "l2 mismatch vs reference"
    print("KERNEL_OK")
</pallas_src>

<mosaic_0001>
module attributes {stable_mosaic.version = 11 : i64} {
  func.func @_mm_bn_kernel(%arg0: i32, %arg1: memref<128x147xf32, #tpu.memory_space<vmem>>, %arg2: memref<147x64xf32, #tpu.memory_space<vmem>>, %arg3: memref<1x64xf32, #tpu.memory_space<vmem>>, %arg4: memref<1x64xf32, #tpu.memory_space<vmem>>, %arg5: memref<128x64xf32, #tpu.memory_space<vmem>>) attributes {dimension_semantics = [#tpu.dimension_semantics<parallel>], iteration_bounds = array<i64: 1>, scalar_prefetch = 0 : i64, scratch_operands = 0 : i64, tpu.core_type = #tpu.core_type<tc>, window_params = [{transform_indices = @transform_0, window_bounds = array<i64: 128, 147>}, {pipeline_mode = #tpu.pipeline_mode<synchronous>, transform_indices = @transform_1, window_bounds = array<i64: 147, 64>}, {pipeline_mode = #tpu.pipeline_mode<synchronous>, transform_indices = @transform_2, window_bounds = array<i64: 1, 64>}, {pipeline_mode = #tpu.pipeline_mode<synchronous>, transform_indices = @transform_3, window_bounds = array<i64: 1, 64>}, {transform_indices = @transform_4, window_bounds = array<i64: 128, 64>}]} {
    %c0 = arith.constant 0 : index
    %c0_0 = arith.constant 0 : index
    %0 = vector.load %arg1[%c0, %c0_0] : memref<128x147xf32, #tpu.memory_space<vmem>>, vector<128x147xf32>
    %c0_1 = arith.constant 0 : index
    %c0_2 = arith.constant 0 : index
    %1 = vector.load %arg2[%c0_1, %c0_2] : memref<147x64xf32, #tpu.memory_space<vmem>>, vector<147x64xf32>
    %cst = arith.constant dense<0.000000e+00> : vector<128x64xf32>
    %2 = tpu.matmul %0, %1, %cst {dimension_numbers = #tpu.dot_dimension_numbers<[1], [0], [0], [1], [0, 0, 1, 1], [], []>} : vector<128x147xf32>, vector<147x64xf32>, vector<128x64xf32> -> vector<128x64xf32>
    %c0_3 = arith.constant 0 : index
    %c0_4 = arith.constant 0 : index
    %3 = vector.load %arg3[%c0_3, %c0_4] : memref<1x64xf32, #tpu.memory_space<vmem>>, vector<1x64xf32>
    %4 = vector.broadcast %3 : vector<1x64xf32> to vector<128x64xf32>
    %5 = arith.mulf %2, %4 : vector<128x64xf32>
    %c0_5 = arith.constant 0 : index
    %c0_6 = arith.constant 0 : index
    %6 = vector.load %arg4[%c0_5, %c0_6] : memref<1x64xf32, #tpu.memory_space<vmem>>, vector<1x64xf32>
    %7 = vector.broadcast %6 : vector<1x64xf32> to vector<128x64xf32>
    %8 = arith.addf %5, %7 : vector<128x64xf32>
    %cst_7 = arith.constant 0.000000e+00 : f32
    %9 = vector.broadcast %cst_7 : f32 to vector<128x64xf32>
    %10 = arith.maximumf %8, %9 : vector<128x64xf32>
    %c0_8 = arith.constant 0 : index
    %c0_9 = arith.constant 0 : index
    %11 = vector.load %arg5[%c0_8, %c0_9] : memref<128x64xf32, #tpu.memory_space<vmem>>, vector<128x64xf32>
    tpu.vector_store %arg5[%c0_8, %c0_9], %10 {strides = array<i32>} : memref<128x64xf32, #tpu.memory_space<vmem>>, vector<128x64xf32>,
    return
  }
  func.func @transform_0(%arg0: i32) -> (i32, i32) {
    %c0_i32 = arith.constant 0 : i32
    %c0_i32_0 = arith.constant 0 : i32
    return %arg0, %c0_i32 : i32, i32
  }
  func.func @transform_1(%arg0: i32) -> (i32, i32) {
    %c0_i32 = arith.constant 0 : i32
    %c0_i32_0 = arith.constant 0 : i32
    %c0_i32_1 = arith.constant 0 : i32
    return %c0_i32, %c0_i32_0 : i32, i32
  }
  func.func @transform_2(%arg0: i32) -> (i32, i32) {
    %c0_i32 = arith.constant 0 : i32
    %c0_i32_0 = arith.constant 0 : i32
    %c0_i32_1 = arith.constant 0 : i32
    return %c0_i32, %c0_i32_0 : i32, i32
  }
  func.func @transform_3(%arg0: i32) -> (i32, i32) {
    %c0_i32 = arith.constant 0 : i32
    %c0_i32_0 = arith.constant 0 : i32
    %c0_i32_1 = arith.constant 0 : i32
    return %c0_i32, %c0_i32_0 : i32, i32
  }
  func.func @transform_4(%arg0: i32) -> (i32, i32) {
    %c0_i32 = arith.constant 0 : i32
    %c0_i32_0 = arith.constant 0 : i32
    return %arg0, %c0_i32 : i32, i32
  }
}

module attributes {stable_mosaic.version = 11 : i64} {
  func.func @_sfem_kernel(%arg0: i32, %arg1: memref<1x16x64xf32, #tpu.memory_space<vmem>>, %arg2: memref<1x16x1xf32, #tpu.memory_space<vmem>>, %arg3: memref<1x16x1xf32, #tpu.memory_space<vmem>>, %arg4: memref<1x16x64xf32, #tpu.memory_space<vmem>>) attributes {dimension_semantics = [#tpu.dimension_semantics<parallel>], iteration_bounds = array<i64: 2>, scalar_prefetch = 0 : i64, scratch_operands = 0 : i64, tpu.core_type = #tpu.core_type<tc>, window_params = [{transform_indices = @transform_0, window_bounds = array<i64: 1, 16, 64>}, {transform_indices = @transform_1, window_bounds = array<i64: 1, 16, 1>}, {transform_indices = @transform_2, window_bounds = array<i64: 1, 16, 1>}, {transform_indices = @transform_3, window_bounds = array<i64: 1, 16, 64>}]} {
    %c0 = arith.constant 0 : index
    %c0_0 = arith.constant 0 : index
    %c0_1 = arith.constant 0 : index
    %0 = vector.load %arg1[%c0, %c0_0, %c0_1] : memref<1x16x64xf32, #tpu.memory_space<vmem>>, vector<1x16x64xf32>
    %1 = vector.shape_cast %0 : vector<1x16x64xf32> to vector<16x64xf32>
    %c0_2 = arith.constant 0 : index
    %c0_3 = arith.constant 0 : index
    %c0_4 = arith.constant 0 : index
    %2 = vector.load %arg2[%c0_2, %c0_3, %c0_4] : memref<1x16x1xf32, #tpu.memory_space<vmem>>, vector<1x16x1xf32>
    %3 = vector.shape_cast %2 : vector<1x16x1xf32> to vector<16x1xf32>
    %c0_5 = arith.constant 0 : index
    %c0_6 = arith.constant 0 : index
    %c0_7 = arith.constant 0 : index
    %4 = vector.load %arg3[%c0_5, %c0_6, %c0_7] : memref<1x16x1xf32, #tpu.memory_space<vmem>>, vector<1x16x1xf32>
    %5 = vector.shape_cast %4 : vector<1x16x1xf32> to vector<16x1xf32>
    %6 = vector.broadcast %3 : vector<16x1xf32> to vector<16x64xf32>
    %7 = arith.mulf %1, %6 : vector<16x64xf32>
    %cst = arith.constant dense<0.000000e+00> : vector<64xf32>
    %8 = vector.multi_reduction <add>, %7, %cst [0] : vector<16x64xf32> to vector<64xf32>
    %9 = vector.shape_cast %8 : vector<64xf32> to vector<1x64xf32>
    %10 = vector.shape_cast %3 : vector<16x1xf32> to vector<1x16x1xf32>
    %cst_8 = arith.constant dense<0.000000e+00> : vector<1xf32>
    %11 = vector.multi_reduction <add>, %10, %cst_8 [1, 2] : vector<1x16x1xf32> to vector<1xf32>
    %12 = vector.shape_cast %11 : vector<1xf32> to vector<1x1x1xf32>
    %13 = vector.extract %12[0, 0, 0] : f32 from vector<1x1x1xf32>
    %cst_9 = arith.constant 9.99999993E-9 : f32
    %14 = arith.addf %13, %cst_9 : f32
    %15 = vector.broadcast %14 : f32 to vector<1x64xf32>
    %16 = arith.divf %9, %15 : vector<1x64xf32>
    %17 = vector.broadcast %5 : vector<16x1xf32> to vector<16x64xf32>
    %18 = arith.mulf %1, %17 : vector<16x64xf32>
    %cst_10 = arith.constant dense<0.000000e+00> : vector<64xf32>
    %19 = vector.multi_reduction <add>, %18, %cst_10 [0] : vector<16x64xf32> to vector<64xf32>
    %20 = vector.shape_cast %19 : vector<64xf32> to vector<1x64xf32>
    %21 = vector.shape_cast %5 : vector<16x1xf32> to vector<1x16x1xf32>
    %cst_11 = arith.constant dense<0.000000e+00> : vector<1xf32>
    %22 = vector.multi_reduction <add>, %21, %cst_11 [1, 2] : vector<1x16x1xf32> to vector<1xf32>
    %23 = vector.shape_cast %22 : vector<1xf32> to vector<1x1x1xf32>
    %24 = vector.extract %23[0, 0, 0] : f32 from vector<1x1x1xf32>
    %cst_12 = arith.constant 9.99999993E-9 : f32
    %25 = arith.addf %24, %cst_12 : f32
    %26 = vector.broadcast %25 : f32 to vector<1x64xf32>
    %27 = arith.divf %20, %26 : vector<1x64xf32>
    %28 = vector.broadcast %16 : vector<1x64xf32> to vector<16x64xf32>
    %29 = arith.mulf %1, %28 : vector<16x64xf32>
    %cst_13 = arith.constant dense<0.000000e+00> : vector<16xf32>
    %30 = vector.multi_reduction <add>, %29, %cst_13 [1] : vector<16x64xf32> to vector<16xf32>
    %31 = vector.shape_cast %30 : vector<16xf32> to vector<16x1xf32>
    %32 = vector.broadcast %27 : vector<1x64xf32> to vector<16x64xf32>
    %33 = arith.mulf %1, %32 : vector<16x64xf32>
    %cst_14 = arith.constant dense<0.000000e+00> : vector<16xf32>
    %34 = vector.multi_reduction <add>, %33, %cst_14 [1] : vector<16x64xf32> to vector<16xf32>
    %35 = vector.shape_cast %34 : vector<16xf32> to vector<16x1xf32>
    %36 = arith.maximumf %31, %35 : vector<16x1xf32>
    %37 = arith.subf %31, %36 : vector<16x1xf32>
    %38 = math.exp %37 : vector<16x1xf32>
    %39 = arith.subf %35, %36 : vector<16x1xf32>
    %40 = math.exp %39 : vector<16x1xf32>
    %41 = arith.addf %38, %40 : vector<16x1xf32>
    %cst_15 = arith.constant 1.000000e+00 : f32
    %42 = vector.broadcast %cst_15 : f32 to vector<16x1xf32>
    %43 = arith.divf %42, %41 : vector<16x1xf32>
    %44 = arith.mulf %38, %43 : vector<16x1xf32>
    %cst_16 = arith.constant 1.250000e-01 : f32
    %45 = vector.broadcast %cst_16 : f32 to vector<16x1xf32>
    %46 = arith.mulf %44, %45 : vector<16x1xf32>
    %47 = arith.mulf %40, %43 : vector<16x1xf32>
    %cst_17 = arith.constant 1.250000e-01 : f32
    %48 = vector.broadcast %cst_17 : f32 to vector<16x1xf32>
    %49 = arith.mulf %47, %48 : vector<16x1xf32>
    %50 = vector.broadcast %46 : vector<16x1xf32> to vector<16x64xf32>
    %51 = vector.broadcast %16 : vector<1x64xf32> to vector<16x64xf32>
    %52 = arith.mulf %50, %51 : vector<16x64xf32>
    %53 = vector.broadcast %49 : vector<16x1xf32> to vector<16x64xf32>
    %54 = vector.broadcast %27 : vector<1x64xf32> to vector<16x64xf32>
    %55 = arith.mulf %53, %54 : vector<16x64xf32>
    %56 = arith.addf %52, %55 : vector<16x64xf32>
    %57 = arith.addf %3, %5 : vector<16x1xf32>
    %58 = vector.broadcast %57 : vector<16x1xf32> to vector<16x64xf32>
    %59 = arith.mulf %56, %58 : vector<16x64xf32>
    %60 = arith.addf %1, %59 : vector<16x64xf32>
    %61 = vector.shape_cast %60 : vector<16x64xf32> to vector<1x16x64xf32>
    %c0_18 = arith.constant 0 : index
    %c0_19 = arith.constant 0 : index
    %c0_20 = arith.constant 0 : index
    %62 = vector.load %arg4[%c0_18, %c0_19, %c0_20] : memref<1x16x64xf32, #tpu.memory_space<vmem>>, vector<1x16x64xf32>
    tpu.vector_store %arg4[%c0_18, %c0_19, %c0_20], %61 {strides = array<i32>} : memref<1x16x64xf32, #tpu.memory_space<vmem>>, vector<1x16x64xf32>,
    return
  }
  func.func @transform_0(%arg0: i32) -> (i32, i32, i32) {
    %c0_i32 = arith.constant 0 : i32
    %c0_i32_0 = arith.constant 0 : i32
    %c0_i32_1 = arith.constant 0 : i32
    return %arg0, %c0_i32, %c0_i32_0 : i32, i32, i32
  }
  func.func @transform_1(%arg0: i32) -> (i32, i32, i32) {
    %c0_i32 = arith.constant 0 : i32
    %c0_i32_0 = arith.constant 0 : i32
    %c0_i32_1 = arith.constant 0 : i32
    return %arg0, %c0_i32, %c0_i32_0 : i32, i32, i32
  }
  func.func @transform_2(%arg0: i32) -> (i32, i32, i32) {
    %c0_i32 = arith.constant 0 : i32
    %c0_i32_0 = arith.constant 0 : i32
    %c0_i32_1 = arith.constant 0 : i32
    return %arg0, %c0_i32, %c0_i32_0 : i32, i32, i32
  }
  func.func @transform_3(%arg0: i32) -> (i32, i32, i32) {
    %c0_i32 = arith.constant 0 : i32
    %c0_i32_0 = arith.constant 0 : i32
    %c0_i32_1 = arith.constant 0 : i32
    return %arg0, %c0_i32, %c0_i32_0 : i32, i32, i32
  }
}

module attributes {stable_mosaic.version = 11 : i64} {
  func.func @_max_reduce_kernel(%arg0: i32, %arg1: memref<49x32x64xf32, #tpu.memory_space<vmem>>, %arg2: memref<32x64xf32, #tpu.memory_space<vmem>>) attributes {dimension_semantics = [#tpu.dimension_semantics<parallel>], iteration_bounds = array<i64: 1>, scalar_prefetch = 0 : i64, scratch_operands = 0 : i64, tpu.core_type = #tpu.core_type<tc>, window_params = [{transform_indices = @transform_0, window_bounds = array<i64: 49, 32, 64>}, {transform_indices = @transform_1, window_bounds = array<i64: 32, 64>}]} {
    %c0 = arith.constant 0 : index
    %c0_0 = arith.constant 0 : index
    %c0_1 = arith.constant 0 : index
    %0 = vector.load %arg1[%c0, %c0_0, %c0_1] : memref<49x32x64xf32, #tpu.memory_space<vmem>>, vector<49x32x64xf32>
    %cst = arith.constant dense<0xFF800000> : vector<32x64xf32>
    %1 = vector.multi_reduction <maximumf>, %0, %cst [0] : vector<49x32x64xf32> to vector<32x64xf32>
    %c0_2 = arith.constant 0 : index
    %c0_3 = arith.constant 0 : index
    %2 = vector.load %arg2[%c0_2, %c0_3] : memref<32x64xf32, #tpu.memory_space<vmem>>, vector<32x64xf32>
    tpu.vector_store %arg2[%c0_2, %c0_3], %1 {strides = array<i32>} : memref<32x64xf32, #tpu.memory_space<vmem>>, vector<32x64xf32>,
    return
  }
  func.func @transform_0(%arg0: i32) -> (i32, i32, i32) {
    %c0_i32 = arith.constant 0 : i32
    %c0_i32_0 = arith.constant 0 : i32
    %c0_i32_1 = arith.constant 0 : i32
    return %c0_i32, %arg0, %c0_i32_0 : i32, i32, i32
  }
  func.func @transform_1(%arg0: i32) -> (i32, i32) {
    %c0_i32 = arith.constant 0 : i32
    %c0_i32_0 = arith.constant 0 : i32
    return %arg0, %c0_i32 : i32, i32
  }
}

module attributes {stable_mosaic.version = 11 : i64} {
  func.func @_mm_bn_kernel(%arg0: i32, %arg1: memref<32x64xf32, #tpu.memory_space<vmem>>, %arg2: memref<64x64xf32, #tpu.memory_space<vmem>>, %arg3: memref<1x64xf32, #tpu.memory_space<vmem>>, %arg4: memref<1x64xf32, #tpu.memory_space<vmem>>, %arg5: memref<32x64xf32, #tpu.memory_space<vmem>>) attributes {dimension_semantics = [#tpu.dimension_semantics<parallel>], iteration_bounds = array<i64: 1>, scalar_prefetch = 0 : i64, scratch_operands = 0 : i64, tpu.core_type = #tpu.core_type<tc>, window_params = [{transform_indices = @transform_0, window_bounds = array<i64: 32, 64>}, {pipeline_mode = #tpu.pipeline_mode<synchronous>, transform_indices = @transform_1, window_bounds = array<i64: 64, 64>}, {pipeline_mode = #tpu.pipeline_mode<synchronous>, transform_indices = @transform_2, window_bounds = array<i64: 1, 64>}, {pipeline_mode = #tpu.pipeline_mode<synchronous>, transform_indices = @transform_3, window_bounds = array<i64: 1, 64>}, {transform_indices = @transform_4, window_bounds = array<i64: 32, 64>}]} {
    %c0 = arith.constant 0 : index
    %c0_0 = arith.constant 0 : index
    %0 = vector.load %arg1[%c0, %c0_0] : memref<32x64xf32, #tpu.memory_space<vmem>>, vector<32x64xf32>
    %c0_1 = arith.constant 0 : index
    %c0_2 = arith.constant 0 : index
    %1 = vector.load %arg2[%c0_1, %c0_2] : memref<64x64xf32, #tpu.memory_space<vmem>>, vector<64x64xf32>
    %cst = arith.constant dense<0.000000e+00> : vector<32x64xf32>
    %2 = tpu.matmul %0, %1, %cst {dimension_numbers = #tpu.dot_dimension_numbers<[1], [0], [0], [1], [0, 0, 1, 1], [], []>} : vector<32x64xf32>, vector<64x64xf32>, vector<32x64xf32> -> vector<32x64xf32>
    %c0_3 = arith.constant 0 : index
    %c0_4 = arith.constant 0 : index
    %3 = vector.load %arg3[%c0_3, %c0_4] : memref<1x64xf32, #tpu.memory_space<vmem>>, vector<1x64xf32>
    %4 = vector.broadcast %3 : vector<1x64xf32> to vector<32x64xf32>
    %5 = arith.mulf %2, %4 : vector<32x64xf32>
    %c0_5 = arith.constant 0 : index
    %c0_6 = arith.constant 0 : index
    %6 = vector.load %arg4[%c0_5, %c0_6] : memref<1x64xf32, #tpu.memory_space<vmem>>, vector<1x64xf32>
    %7 = vector.broadcast %6 : vector<1x64xf32> to vector<32x64xf32>
    %8 = arith.addf %5, %7 : vector<32x64xf32>
    %cst_7 = arith.constant 0.000000e+00 : f32
    %9 = vector.broadcast %cst_7 : f32 to vector<32x64xf32>
    %10 = arith.maximumf %8, %9 : vector<32x64xf32>
    %c0_8 = arith.constant 0 : index
    %c0_9 = arith.constant 0 : index
    %11 = vector.load %arg5[%c0_8, %c0_9] : memref<32x64xf32, #tpu.memory_space<vmem>>, vector<32x64xf32>
    tpu.vector_store %arg5[%c0_8, %c0_9], %10 {strides = array<i32>} : memref<32x64xf32, #tpu.memory_space<vmem>>, vector<32x64xf32>,
    return
  }
  func.func @transform_0(%arg0: i32) -> (i32, i32) {
    %c0_i32 = arith.constant 0 : i32
    %c0_i32_0 = arith.constant 0 : i32
    return %arg0, %c0_i32 : i32, i32
  }
  func.func @transform_1(%arg0: i32) -> (i32, i32) {
    %c0_i32 = arith.constant 0 : i32
    %c0_i32_0 = arith.constant 0 : i32
    %c0_i32_1 = arith.constant 0 : i32
    return %c0_i32, %c0_i32_0 : i32, i32
  }
  func.func @transform_2(%arg0: i32) -> (i32, i32) {
    %c0_i32 = arith.constant 0 : i32
    %c0_i32_0 = arith.constant 0 : i32
    %c0_i32_1 = arith.constant 0 : i32
    return %c0_i32, %c0_i32_0 : i32, i32
  }
  func.func @transform_3(%arg0: i32) -> (i32, i32) {
    %c0_i32 = arith.constant 0 : i32
    %c0_i32_0 = arith.constant 0 : i32
    %c0_i32_1 = arith.constant 0 : i32
    return %c0_i32, %c0_i32_0 : i32, i32
  }
  func.func @transform_4(%arg0: i32) -> (i32, i32) {
    %c0_i32 = arith.constant 0 : i32
    %c0_i32_0 = arith.constant 0 : i32
    return %arg0, %c0_i32 : i32, i32
  }
}

module attributes {stable_mosaic.version = 11 : i64} {
  func.func @_mm_bn_kernel(%arg0: i32, %arg1: memref<32x3136xf32, #tpu.memory_space<vmem>>, %arg2: memref<3136x64xf32, #tpu.memory_space<vmem>>, %arg3: memref<1x64xf32, #tpu.memory_space<vmem>>, %arg4: memref<1x64xf32, #tpu.memory_space<vmem>>, %arg5: memref<32x64xf32, #tpu.memory_space<vmem>>) attributes {dimension_semantics = [#tpu.dimension_semantics<parallel>], iteration_bounds = array<i64: 1>, scalar_prefetch = 0 : i64, scratch_operands = 0 : i64, tpu.core_type = #tpu.core_type<tc>, window_params = [{transform_indices = @transform_0, window_bounds = array<i64: 32, 3136>}, {pipeline_mode = #tpu.pipeline_mode<synchronous>, transform_indices = @transform_1, window_bounds = array<i64: 3136, 64>}, {pipeline_mode = #tpu.pipeline_mode<synchronous>, transform_indices = @transform_2, window_bounds = array<i64: 1, 64>}, {pipeline_mode = #tpu.pipeline_mode<synchronous>, transform_indices = @transform_3, window_bounds = array<i64: 1, 64>}, {transform_indices = @transform_4, window_bounds = array<i64: 32, 64>}]} {
    %c0 = arith.constant 0 : index
    %c0_0 = arith.constant 0 : index
    %0 = vector.load %arg1[%c0, %c0_0] : memref<32x3136xf32, #tpu.memory_space<vmem>>, vector<32x3136xf32>
    %c0_1 = arith.constant 0 : index
    %c0_2 = arith.constant 0 : index
    %1 = vector.load %arg2[%c0_1, %c0_2] : memref<3136x64xf32, #tpu.memory_space<vmem>>, vector<3136x64xf32>
    %cst = arith.constant dense<0.000000e+00> : vector<32x64xf32>
    %2 = tpu.matmul %0, %1, %cst {dimension_numbers = #tpu.dot_dimension_numbers<[1], [0], [0], [1], [0, 0, 1, 1], [], []>} : vector<32x3136xf32>, vector<3136x64xf32>, vector<32x64xf32> -> vector<32x64xf32>
    %c0_3 = arith.constant 0 : index
    %c0_4 = arith.constant 0 : index
    %3 = vector.load %arg3[%c0_3, %c0_4] : memref<1x64xf32, #tpu.memory_space<vmem>>, vector<1x64xf32>
    %4 = vector.broadcast %3 : vector<1x64xf32> to vector<32x64xf32>
    %5 = arith.mulf %2, %4 : vector<32x64xf32>
    %c0_5 = arith.constant 0 : index
    %c0_6 = arith.constant 0 : index
    %6 = vector.load %arg4[%c0_5, %c0_6] : memref<1x64xf32, #tpu.memory_space<vmem>>, vector<1x64xf32>
    %7 = vector.broadcast %6 : vector<1x64xf32> to vector<32x64xf32>
    %8 = arith.addf %5, %7 : vector<32x64xf32>
    %cst_7 = arith.constant 0.000000e+00 : f32
    %9 = vector.broadcast %cst_7 : f32 to vector<32x64xf32>
    %10 = arith.maximumf %8, %9 : vector<32x64xf32>
    %c0_8 = arith.constant 0 : index
    %c0_9 = arith.constant 0 : index
    %11 = vector.load %arg5[%c0_8, %c0_9] : memref<32x64xf32, #tpu.memory_space<vmem>>, vector<32x64xf32>
    tpu.vector_store %arg5[%c0_8, %c0_9], %10 {strides = array<i32>} : memref<32x64xf32, #tpu.memory_space<vmem>>, vector<32x64xf32>,
    return
  }
  func.func @transform_0(%arg0: i32) -> (i32, i32) {
    %c0_i32 = arith.constant 0 : i32
    %c0_i32_0 = arith.constant 0 : i32
    return %arg0, %c0_i32 : i32, i32
  }
  func.func @transform_1(%arg0: i32) -> (i32, i32) {
    %c0_i32 = arith.constant 0 : i32
    %c0_i32_0 = arith.constant 0 : i32
    %c0_i32_1 = arith.constant 0 : i32
    return %c0_i32, %c0_i32_0 : i32, i32
  }
  func.func @transform_2(%arg0: i32) -> (i32, i32) {
    %c0_i32 = arith.constant 0 : i32
    %c0_i32_0 = arith.constant 0 : i32
    %c0_i32_1 = arith.constant 0 : i32
    return %c0_i32, %c0_i32_0 : i32, i32
  }
  func.func @transform_3(%arg0: i32) -> (i32, i32) {
    %c0_i32 = arith.constant 0 : i32
    %c0_i32_0 = arith.constant 0 : i32
    %c0_i32_1 = arith.constant 0 : i32
    return %c0_i32, %c0_i32_0 : i32, i32
  }
  func.func @transform_4(%arg0: i32) -> (i32, i32) {
    %c0_i32 = arith.constant 0 : i32
    %c0_i32_0 = arith.constant 0 : i32
    return %arg0, %c0_i32 : i32, i32
  }
}

module attributes {stable_mosaic.version = 11 : i64} {
  func.func @_mm_bn_kernel(%arg0: i32, %arg1: memref<32x64xf32, #tpu.memory_space<vmem>>, %arg2: memref<64x256xf32, #tpu.memory_space<vmem>>, %arg3: memref<1x256xf32, #tpu.memory_space<vmem>>, %arg4: memref<1x256xf32, #tpu.memory_space<vmem>>, %arg5: memref<32x256xf32, #tpu.memory_space<vmem>>) attributes {dimension_semantics = [#tpu.dimension_semantics<parallel>], iteration_bounds = array<i64: 1>, scalar_prefetch = 0 : i64, scratch_operands = 0 : i64, tpu.core_type = #tpu.core_type<tc>, window_params = [{transform_indices = @transform_0, window_bounds = array<i64: 32, 64>}, {pipeline_mode = #tpu.pipeline_mode<synchronous>, transform_indices = @transform_1, window_bounds = array<i64: 64, 256>}, {pipeline_mode = #tpu.pipeline_mode<synchronous>, transform_indices = @transform_2, window_bounds = array<i64: 1, 256>}, {pipeline_mode = #tpu.pipeline_mode<synchronous>, transform_indices = @transform_3, window_bounds = array<i64: 1, 256>}, {transform_indices = @transform_4, window_bounds = array<i64: 32, 256>}]} {
    %c0 = arith.constant 0 : index
    %c0_0 = arith.constant 0 : index
    %0 = vector.load %arg1[%c0, %c0_0] : memref<32x64xf32, #tpu.memory_space<vmem>>, vector<32x64xf32>
    %c0_1 = arith.constant 0 : index
    %c0_2 = arith.constant 0 : index
    %1 = vector.load %arg2[%c0_1, %c0_2] : memref<64x256xf32, #tpu.memory_space<vmem>>, vector<64x256xf32>
    %cst = arith.constant dense<0.000000e+00> : vector<32x256xf32>
    %2 = tpu.matmul %0, %1, %cst {dimension_numbers = #tpu.dot_dimension_numbers<[1], [0], [0], [1], [0, 0, 1, 1], [], []>} : vector<32x64xf32>, vector<64x256xf32>, vector<32x256xf32> -> vector<32x256xf32>
    %c0_3 = arith.constant 0 : index
    %c0_4 = arith.constant 0 : index
    %3 = vector.load %arg3[%c0_3, %c0_4] : memref<1x256xf32, #tpu.memory_space<vmem>>, vector<1x256xf32>
    %4 = vector.broadcast %3 : vector<1x256xf32> to vector<32x256xf32>
    %5 = arith.mulf %2, %4 : vector<32x256xf32>
    %c0_5 = arith.constant 0 : index
    %c0_6 = arith.constant 0 : index
    %6 = vector.load %arg4[%c0_5, %c0_6] : memref<1x256xf32, #tpu.memory_space<vmem>>, vector<1x256xf32>
    %7 = vector.broadcast %6 : vector<1x256xf32> to vector<32x256xf32>
    %8 = arith.addf %5, %7 : vector<32x256xf32>
    %c0_7 = arith.constant 0 : index
    %c0_8 = arith.constant 0 : index
    %9 = vector.load %arg5[%c0_7, %c0_8] : memref<32x256xf32, #tpu.memory_space<vmem>>, vector<32x256xf32>
    tpu.vector_store %arg5[%c0_7, %c0_8], %8 {strides = array<i32>} : memref<32x256xf32, #tpu.memory_space<vmem>>, vector<32x256xf32>,
    return
  }
  func.func @transform_0(%arg0: i32) -> (i32, i32) {
    %c0_i32 = arith.constant 0 : i32
    %c0_i32_0 = arith.constant 0 : i32
    return %arg0, %c0_i32 : i32, i32
  }
  func.func @transform_1(%arg0: i32) -> (i32, i32) {
    %c0_i32 = arith.constant 0 : i32
    %c0_i32_0 = arith.constant 0 : i32
    %c0_i32_1 = arith.constant 0 : i32
    return %c0_i32, %c0_i32_0 : i32, i32
  }
  func.func @transform_2(%arg0: i32) -> (i32, i32) {
    %c0_i32 = arith.constant 0 : i32
    %c0_i32_0 = arith.constant 0 : i32
    %c0_i32_1 = arith.constant 0 : i32
    return %c0_i32, %c0_i32_0 : i32, i32
  }
  func.func @transform_3(%arg0: i32) -> (i32, i32) {
    %c0_i32 = arith.constant 0 : i32
    %c0_i32_0 = arith.constant 0 : i32
    %c0_i32_1 = arith.constant 0 : i32
    return %c0_i32, %c0_i32_0 : i32, i32
  }
  func.func @transform_4(%arg0: i32) -> (i32, i32) {
    %c0_i32 = arith.constant 0 : i32
    %c0_i32_0 = arith.constant 0 : i32
    return %arg0, %c0_i32 : i32, i32
  }
}

module attributes {stable_mosaic.version = 11 : i64} {
  func.func @_mm_bn_res_relu_kernel(%arg0: i32, %arg1: memref<32x64xf32, #tpu.memory_space<vmem>>, %arg2: memref<64x256xf32, #tpu.memory_space<vmem>>, %arg3: memref<1x256xf32, #tpu.memory_space<vmem>>, %arg4: memref<1x256xf32, #tpu.memory_space<vmem>>, %arg5: memref<32x256xf32, #tpu.memory_space<vmem>>, %arg6: memref<32x256xf32, #tpu.memory_space<vmem>>) attributes {dimension_semantics = [#tpu.dimension_semantics<parallel>], iteration_bounds = array<i64: 1>, scalar_prefetch = 0 : i64, scratch_operands = 0 : i64, tpu.core_type = #tpu.core_type<tc>, window_params = [{transform_indices = @transform_0, window_bounds = array<i64: 32, 64>}, {pipeline_mode = #tpu.pipeline_mode<synchronous>, transform_indices = @transform_1, window_bounds = array<i64: 64, 256>}, {pipeline_mode = #tpu.pipeline_mode<synchronous>, transform_indices = @transform_2, window_bounds = array<i64: 1, 256>}, {pipeline_mode = #tpu.pipeline_mode<synchronous>, transform_indices = @transform_3, window_bounds = array<i64: 1, 256>}, {transform_indices = @transform_4, window_bounds = array<i64: 32, 256>}, {transform_indices = @transform_5, window_bounds = array<i64: 32, 256>}]} {
    %c0 = arith.constant 0 : index
    %c0_0 = arith.constant 0 : index
    %0 = vector.load %arg1[%c0, %c0_0] : memref<32x64xf32, #tpu.memory_space<vmem>>, vector<32x64xf32>
    %c0_1 = arith.constant 0 : index
    %c0_2 = arith.constant 0 : index
    %1 = vector.load %arg2[%c0_1, %c0_2] : memref<64x256xf32, #tpu.memory_space<vmem>>, vector<64x256xf32>
    %cst = arith.constant dense<0.000000e+00> : vector<32x256xf32>
    %2 = tpu.matmul %0, %1, %cst {dimension_numbers = #tpu.dot_dimension_numbers<[1], [0], [0], [1], [0, 0, 1, 1], [], []>} : vector<32x64xf32>, vector<64x256xf32>, vector<32x256xf32> -> vector<32x256xf32>
    %c0_3 = arith.constant 0 : index
    %c0_4 = arith.constant 0 : index
    %3 = vector.load %arg3[%c0_3, %c0_4] : memref<1x256xf32, #tpu.memory_space<vmem>>, vector<1x256xf32>
    %4 = vector.broadcast %3 : vector<1x256xf32> to vector<32x256xf32>
    %5 = arith.mulf %2, %4 : vector<32x256xf32>
    %c0_5 = arith.constant 0 : index
    %c0_6 = arith.constant 0 : index
    %6 = vector.load %arg4[%c0_5, %c0_6] : memref<1x256xf32, #tpu.memory_space<vmem>>, vector<1x256xf32>
    %7 = vector.broadcast %6 : vector<1x256xf32> to vector<32x256xf32>
    %8 = arith.addf %5, %7 : vector<32x256xf32>
    %c0_7 = arith.constant 0 : index
    %c0_8 = arith.constant 0 : index
    %9 = vector.load %arg5[%c0_7, %c0_8] : memref<32x256xf32, #tpu.memory_space<vmem>>, vector<32x256xf32>
    %10 = arith.addf %8, %9 : vector<32x256xf32>
    %cst_9 = arith.constant 0.000000e+00 : f32
    %11 = vector.broadcast %cst_9 : f32 to vector<32x256xf32>
    %12 = arith.maximumf %10, %11 : vector<32x256xf32>
    %c0_10 = arith.constant 0 : index
    %c0_11 = arith.constant 0 : index
    %13 = vector.load %arg6[%c0_10, %c0_11] : memref<32x256xf32, #tpu.memory_space<vmem>>, vector<32x256xf32>
    tpu.vector_store %arg6[%c0_10, %c0_11], %12 {strides = array<i32>} : memref<32x256xf32, #tpu.memory_space<vmem>>, vector<32x256xf32>,
    return
  }
  func.func @transform_0(%arg0: i32) -> (i32, i32) {
    %c0_i32 = arith.constant 0 : i32
    %c0_i32_0 = arith.constant 0 : i32
    return %arg0, %c0_i32 : i32, i32
  }
  func.func @transform_1(%arg0: i32) -> (i32, i32) {
    %c0_i32 = arith.constant 0 : i32
    %c0_i32_0 = arith.constant 0 : i32
    %c0_i32_1 = arith.constant 0 : i32
    return %c0_i32, %c0_i32_0 : i32, i32
  }
  func.func @transform_2(%arg0: i32) -> (i32, i32) {
    %c0_i32 = arith.constant 0 : i32
    %c0_i32_0 = arith.constant 0 : i32
    %c0_i32_1 = arith.constant 0 : i32
    return %c0_i32, %c0_i32_0 : i32, i32
  }
  func.func @transform_3(%arg0: i32) -> (i32, i32) {
    %c0_i32 = arith.constant 0 : i32
    %c0_i32_0 = arith.constant 0 : i32
    %c0_i32_1 = arith.constant 0 : i32
    return %c0_i32, %c0_i32_0 : i32, i32
  }
  func.func @transform_4(%arg0: i32) -> (i32, i32) {
    %c0_i32 = arith.constant 0 : i32
    %c0_i32_0 = arith.constant 0 : i32
    return %arg0, %c0_i32 : i32, i32
  }
  func.func @transform_5(%arg0: i32) -> (i32, i32) {
    %c0_i32 = arith.constant 0 : i32
    %c0_i32_0 = arith.constant 0 : i32
    return %arg0, %c0_i32 : i32, i32
  }
}

module attributes {stable_mosaic.version = 11 : i64} {
  func.func @_mm_bn_kernel(%arg0: i32, %arg1: memref<32x256xf32, #tpu.memory_space<vmem>>, %arg2: memref<256x64xf32, #tpu.memory_space<vmem>>, %arg3: memref<1x64xf32, #tpu.memory_space<vmem>>, %arg4: memref<1x64xf32, #tpu.memory_space<vmem>>, %arg5: memref<32x64xf32, #tpu.memory_space<vmem>>) attributes {dimension_semantics = [#tpu.dimension_semantics<parallel>], iteration_bounds = array<i64: 1>, scalar_prefetch = 0 : i64, scratch_operands = 0 : i64, tpu.core_type = #tpu.core_type<tc>, window_params = [{transform_indices = @transform_0, window_bounds = array<i64: 32, 256>}, {pipeline_mode = #tpu.pipeline_mode<synchronous>, transform_indices = @transform_1, window_bounds = array<i64: 256, 64>}, {pipeline_mode = #tpu.pipeline_mode<synchronous>, transform_indices = @transform_2, window_bounds = array<i64: 1, 64>}, {pipeline_mode = #tpu.pipeline_mode<synchronous>, transform_indices = @transform_3, window_bounds = array<i64: 1, 64>}, {transform_indices = @transform_4, window_bounds = array<i64: 32, 64>}]} {
    %c0 = arith.constant 0 : index
    %c0_0 = arith.constant 0 : index
    %0 = vector.load %arg1[%c0, %c0_0] : memref<32x256xf32, #tpu.memory_space<vmem>>, vector<32x256xf32>
    %c0_1 = arith.constant 0 : index
    %c0_2 = arith.constant 0 : index
    %1 = vector.load %arg2[%c0_1, %c0_2] : memref<256x64xf32, #tpu.memory_space<vmem>>, vector<256x64xf32>
    %cst = arith.constant dense<0.000000e+00> : vector<32x64xf32>
    %2 = tpu.matmul %0, %1, %cst {dimension_numbers = #tpu.dot_dimension_numbers<[1], [0], [0], [1], [0, 0, 1, 1], [], []>} : vector<32x256xf32>, vector<256x64xf32>, vector<32x64xf32> -> vector<32x64xf32>
    %c0_3 = arith.constant 0 : index
    %c0_4 = arith.constant 0 : index
    %3 = vector.load %arg3[%c0_3, %c0_4] : memref<1x64xf32, #tpu.memory_space<vmem>>, vector<1x64xf32>
    %4 = vector.broadcast %3 : vector<1x64xf32> to vector<32x64xf32>
    %5 = arith.mulf %2, %4 : vector<32x64xf32>
    %c0_5 = arith.constant 0 : index
    %c0_6 = arith.constant 0 : index
    %6 = vector.load %arg4[%c0_5, %c0_6] : memref<1x64xf32, #tpu.memory_space<vmem>>, vector<1x64xf32>
    %7 = vector.broadcast %6 : vector<1x64xf32> to vector<32x64xf32>
    %8 = arith.addf %5, %7 : vector<32x64xf32>
    %cst_7 = arith.constant 0.000000e+00 : f32
    %9 = vector.broadcast %cst_7 : f32 to vector<32x64xf32>
    %10 = arith.maximumf %8, %9 : vector<32x64xf32>
    %c0_8 = arith.constant 0 : index
    %c0_9 = arith.constant 0 : index
    %11 = vector.load %arg5[%c0_8, %c0_9] : memref<32x64xf32, #tpu.memory_space<vmem>>, vector<32x64xf32>
    tpu.vector_store %arg5[%c0_8, %c0_9], %10 {strides = array<i32>} : memref<32x64xf32, #tpu.memory_space<vmem>>, vector<32x64xf32>,
    return
  }
  func.func @transform_0(%arg0: i32) -> (i32, i32) {
    %c0_i32 = arith.constant 0 : i32
    %c0_i32_0 = arith.constant 0 : i32
    return %arg0, %c0_i32 : i32, i32
  }
  func.func @transform_1(%arg0: i32) -> (i32, i32) {
    %c0_i32 = arith.constant 0 : i32
    %c0_i32_0 = arith.constant 0 : i32
    %c0_i32_1 = arith.constant 0 : i32
    return %c0_i32, %c0_i32_0 : i32, i32
  }
  func.func @transform_2(%arg0: i32) -> (i32, i32) {
    %c0_i32 = arith.constant 0 : i32
    %c0_i32_0 = arith.constant 0 : i32
    %c0_i32_1 = arith.constant 0 : i32
    return %c0_i32, %c0_i32_0 : i32, i32
  }
  func.func @transform_3(%arg0: i32) -> (i32, i32) {
    %c0_i32 = arith.constant 0 : i32
    %c0_i32_0 = arith.constant 0 : i32
    %c0_i32_1 = arith.constant 0 : i32
    return %c0_i32, %c0_i32_0 : i32, i32
  }
  func.func @transform_4(%arg0: i32) -> (i32, i32) {
    %c0_i32 = arith.constant 0 : i32
    %c0_i32_0 = arith.constant 0 : i32
    return %arg0, %c0_i32 : i32, i32
  }
}

module attributes {stable_mosaic.version = 11 : i64} {
  func.func @_sfem_kernel(%arg0: i32, %arg1: memref<1x16x256xf32, #tpu.memory_space<vmem>>, %arg2: memref<1x16x1xf32, #tpu.memory_space<vmem>>, %arg3: memref<1x16x1xf32, #tpu.memory_space<vmem>>, %arg4: memref<1x16x256xf32, #tpu.memory_space<vmem>>) attributes {dimension_semantics = [#tpu.dimension_semantics<parallel>], iteration_bounds = array<i64: 2>, scalar_prefetch = 0 : i64, scratch_operands = 0 : i64, tpu.core_type = #tpu.core_type<tc>, window_params = [{transform_indices = @transform_0, window_bounds = array<i64: 1, 16, 256>}, {transform_indices = @transform_1, window_bounds = array<i64: 1, 16, 1>}, {transform_indices = @transform_2, window_bounds = array<i64: 1, 16, 1>}, {transform_indices = @transform_3, window_bounds = array<i64: 1, 16, 256>}]} {
    %c0 = arith.constant 0 : index
    %c0_0 = arith.constant 0 : index
    %c0_1 = arith.constant 0 : index
    %0 = vector.load %arg1[%c0, %c0_0, %c0_1] : memref<1x16x256xf32, #tpu.memory_space<vmem>>, vector<1x16x256xf32>
    %1 = vector.shape_cast %0 : vector<1x16x256xf32> to vector<16x256xf32>
    %c0_2 = arith.constant 0 : index
    %c0_3 = arith.constant 0 : index
    %c0_4 = arith.constant 0 : index
    %2 = vector.load %arg2[%c0_2, %c0_3, %c0_4] : memref<1x16x1xf32, #tpu.memory_space<vmem>>, vector<1x16x1xf32>
    %3 = vector.shape_cast %2 : vector<1x16x1xf32> to vector<16x1xf32>
    %c0_5 = arith.constant 0 : index
    %c0_6 = arith.constant 0 : index
    %c0_7 = arith.constant 0 : index
    %4 = vector.load %arg3[%c0_5, %c0_6, %c0_7] : memref<1x16x1xf32, #tpu.memory_space<vmem>>, vector<1x16x1xf32>
    %5 = vector.shape_cast %4 : vector<1x16x1xf32> to vector<16x1xf32>
    %6 = vector.broadcast %3 : vector<16x1xf32> to vector<16x256xf32>
    %7 = arith.mulf %1, %6 : vector<16x256xf32>
    %cst = arith.constant dense<0.000000e+00> : vector<256xf32>
    %8 = vector.multi_reduction <add>, %7, %cst [0] : vector<16x256xf32> to vector<256xf32>
    %9 = vector.shape_cast %8 : vector<256xf32> to vector<1x256xf32>
    %10 = vector.shape_cast %3 : vector<16x1xf32> to vector<1x16x1xf32>
    %cst_8 = arith.constant dense<0.000000e+00> : vector<1xf32>
    %11 = vector.multi_reduction <add>, %10, %cst_8 [1, 2] : vector<1x16x1xf32> to vector<1xf32>
    %12 = vector.shape_cast %11 : vector<1xf32> to vector<1x1x1xf32>
    %13 = vector.extract %12[0, 0, 0] : f32 from vector<1x1x1xf32>
    %cst_9 = arith.constant 9.99999993E-9 : f32
    %14 = arith.addf %13, %cst_9 : f32
    %15 = vector.broadcast %14 : f32 to vector<1x256xf32>
    %16 = arith.divf %9, %15 : vector<1x256xf32>
    %17 = vector.broadcast %5 : vector<16x1xf32> to vector<16x256xf32>
    %18 = arith.mulf %1, %17 : vector<16x256xf32>
    %cst_10 = arith.constant dense<0.000000e+00> : vector<256xf32>
    %19 = vector.multi_reduction <add>, %18, %cst_10 [0] : vector<16x256xf32> to vector<256xf32>
    %20 = vector.shape_cast %19 : vector<256xf32> to vector<1x256xf32>
    %21 = vector.shape_cast %5 : vector<16x1xf32> to vector<1x16x1xf32>
    %cst_11 = arith.constant dense<0.000000e+00> : vector<1xf32>
    %22 = vector.multi_reduction <add>, %21, %cst_11 [1, 2] : vector<1x16x1xf32> to vector<1xf32>
    %23 = vector.shape_cast %22 : vector<1xf32> to vector<1x1x1xf32>
    %24 = vector.extract %23[0, 0, 0] : f32 from vector<1x1x1xf32>
    %cst_12 = arith.constant 9.99999993E-9 : f32
    %25 = arith.addf %24, %cst_12 : f32
    %26 = vector.broadcast %25 : f32 to vector<1x256xf32>
    %27 = arith.divf %20, %26 : vector<1x256xf32>
    %28 = vector.broadcast %16 : vector<1x256xf32> to vector<16x256xf32>
    %29 = arith.mulf %1, %28 : vector<16x256xf32>
    %cst_13 = arith.constant dense<0.000000e+00> : vector<16xf32>
    %30 = vector.multi_reduction <add>, %29, %cst_13 [1] : vector<16x256xf32> to vector<16xf32>
    %31 = vector.shape_cast %30 : vector<16xf32> to vector<16x1xf32>
    %32 = vector.broadcast %27 : vector<1x256xf32> to vector<16x256xf32>
    %33 = arith.mulf %1, %32 : vector<16x256xf32>
    %cst_14 = arith.constant dense<0.000000e+00> : vector<16xf32>
    %34 = vector.multi_reduction <add>, %33, %cst_14 [1] : vector<16x256xf32> to vector<16xf32>
    %35 = vector.shape_cast %34 : vector<16xf32> to vector<16x1xf32>
    %36 = arith.maximumf %31, %35 : vector<16x1xf32>
    %37 = arith.subf %31, %36 : vector<16x1xf32>
    %38 = math.exp %37 : vector<16x1xf32>
    %39 = arith.subf %35, %36 : vector<16x1xf32>
    %40 = math.exp %39 : vector<16x1xf32>
    %41 = arith.addf %38, %40 : vector<16x1xf32>
    %cst_15 = arith.constant 1.000000e+00 : f32
    %42 = vector.broadcast %cst_15 : f32 to vector<16x1xf32>
    %43 = arith.divf %42, %41 : vector<16x1xf32>
    %44 = arith.mulf %38, %43 : vector<16x1xf32>
    %cst_16 = arith.constant 6.250000e-02 : f32
    %45 = vector.broadcast %cst_16 : f32 to vector<16x1xf32>
    %46 = arith.mulf %44, %45 : vector<16x1xf32>
    %47 = arith.mulf %40, %43 : vector<16x1xf32>
    %cst_17 = arith.constant 6.250000e-02 : f32
    %48 = vector.broadcast %cst_17 : f32 to vector<16x1xf32>
    %49 = arith.mulf %47, %48 : vector<16x1xf32>
    %50 = vector.broadcast %46 : vector<16x1xf32> to vector<16x256xf32>
    %51 = vector.broadcast %16 : vector<1x256xf32> to vector<16x256xf32>
    %52 = arith.mulf %50, %51 : vector<16x256xf32>
    %53 = vector.broadcast %49 : vector<16x1xf32> to vector<16x256xf32>
    %54 = vector.broadcast %27 : vector<1x256xf32> to vector<16x256xf32>
    %55 = arith.mulf %53, %54 : vector<16x256xf32>
    %56 = arith.addf %52, %55 : vector<16x256xf32>
    %57 = arith.addf %3, %5 : vector<16x1xf32>
    %58 = vector.broadcast %57 : vector<16x1xf32> to vector<16x256xf32>
    %59 = arith.mulf %56, %58 : vector<16x256xf32>
    %60 = arith.addf %1, %59 : vector<16x256xf32>
    %61 = vector.shape_cast %60 : vector<16x256xf32> to vector<1x16x256xf32>
    %c0_18 = arith.constant 0 : index
    %c0_19 = arith.constant 0 : index
    %c0_20 = arith.constant 0 : index
    %62 = vector.load %arg4[%c0_18, %c0_19, %c0_20] : memref<1x16x256xf32, #tpu.memory_space<vmem>>, vector<1x16x256xf32>
    tpu.vector_store %arg4[%c0_18, %c0_19, %c0_20], %61 {strides = array<i32>} : memref<1x16x256xf32, #tpu.memory_space<vmem>>, vector<1x16x256xf32>,
    return
  }
  func.func @transform_0(%arg0: i32) -> (i32, i32, i32) {
    %c0_i32 = arith.constant 0 : i32
    %c0_i32_0 = arith.constant 0 : i32
    %c0_i32_1 = arith.constant 0 : i32
    return %arg0, %c0_i32, %c0_i32_0 : i32, i32, i32
  }
  func.func @transform_1(%arg0: i32) -> (i32, i32, i32) {
    %c0_i32 = arith.constant 0 : i32
    %c0_i32_0 = arith.constant 0 : i32
    %c0_i32_1 = arith.constant 0 : i32
    return %arg0, %c0_i32, %c0_i32_0 : i32, i32, i32
  }
  func.func @transform_2(%arg0: i32) -> (i32, i32, i32) {
    %c0_i32 = arith.constant 0 : i32
    %c0_i32_0 = arith.constant 0 : i32
    %c0_i32_1 = arith.constant 0 : i32
    return %arg0, %c0_i32, %c0_i32_0 : i32, i32, i32
  }
  func.func @transform_3(%arg0: i32) -> (i32, i32, i32) {
    %c0_i32 = arith.constant 0 : i32
    %c0_i32_0 = arith.constant 0 : i32
    %c0_i32_1 = arith.constant 0 : i32
    return %arg0, %c0_i32, %c0_i32_0 : i32, i32, i32
  }
}

</mosaic_0001>

<llo_original>
// kernel: evo_encoder_forward.14
$region0: #{evo_encoder_forward.14}
  #allocation0 [shape = 'u32[]', space=smem, size = 0x4, offset = 0x4, fixed_abs, tag = 'smem constant byte address 0x4 - core index']
  #allocation1 [shape = 'u32[144,128]{1,0:T(1,128)}', space=vmem, size = 0x12000, scoped, tag = 'internal scratch']
  %s0 = inlined_call_operand.vmem [shape: f32[128,147], index: 0, kind: input, shape index: {}]
  %s1 = inlined_call_operand.vmem [shape: f32[147,64], index: 1, kind: input, shape index: {}]
  %s2 = inlined_call_operand.vmem [shape: f32[1,64], index: 2, kind: input, shape index: {}]
  %s3 = inlined_call_operand.vmem [shape: f32[1,64], index: 3, kind: input, shape index: {}]
  %s4 = inlined_call_operand.vmem [shape: f32[128,64], index: 4, kind: output, shape index: {}]
  %s5 = sld [smem:[#allocation0]]
  $region26: #{evo_encoder_forward.14} parent=0
    _
  %s7 = ssub.s32 1, %s5
  %s8 = scalar_select 0, %s7, %s5
  // Predicated region
  $region2: #{evo_encoder_forward.14} parent=0 // pred_check
    _
  $region3: #{evo_encoder_forward.14} parent=0 // pred_check_branch
    %10 = sbr.rel (0) target = $region5
  $region4: #{evo_encoder_forward.14} parent=0 // pred_region
    _
  $region5: #{evo_encoder_forward.14} parent=0 // pred_fallthru
    _
  // Predicated region
  $region6: #{evo_encoder_forward.14} parent=0 // pred_check
    _
  $region7: #{evo_encoder_forward.14} parent=0 // pred_check_branch
    %12 = sbr.rel (0) target = $region9
  $region8: #{evo_encoder_forward.14} parent=0 // pred_region
    _
  $region9: #{evo_encoder_forward.14} parent=0 // pred_fallthru
    _
  // Predicated region
  $region10: #{evo_encoder_forward.14} parent=0 // pred_check
    _
  $region11: #{evo_encoder_forward.14} parent=0 // pred_check_branch
    %14 = sbr.rel (0) target = $region13
  $region12: #{evo_encoder_forward.14} parent=0 // pred_region
    _
  $region13: #{evo_encoder_forward.14} parent=0 // pred_fallthru
    _
  // Predicated region
  $region14: #{evo_encoder_forward.14} parent=0 // pred_check
    _
  $region15: #{evo_encoder_forward.14} parent=0 // pred_check_branch
    %16 = sbr.rel (0) target = $region17
  $region16: #{evo_encoder_forward.14} parent=0 // pred_region
    _
  $region17: #{evo_encoder_forward.14} parent=0 // pred_fallthru
    _
  %v17 = vld [vmem:[%s0] sm:$0xff]
  %v18 = vld [vmem:[%s0 + $0x8] sm:$0xff]
  %v19 = vld [vmem:[%s0 + $0x10] sm:$0xff]
  %v20 = vld [vmem:[%s0 + $0x18] sm:$0xff]
  %v21 = vld [vmem:[%s0 + $0x20] sm:$0xff]
  %v22 = vld [vmem:[%s0 + $0x28] sm:$0xff]
  %v23 = vld [vmem:[%s0 + $0x30] sm:$0xff]
  %v24 = vld [vmem:[%s0 + $0x38] sm:$0xff]
  %v25 = vld [vmem:[%s0 + $0x40] sm:$0xff]
  %v26 = vld [vmem:[%s0 + $0x48] sm:$0xff]
  %v27 = vld [vmem:[%s0 + $0x50] sm:$0xff]
  %v28 = vld [vmem:[%s0 + $0x58] sm:$0xff]
  %v29 = vld [vmem:[%s0 + $0x60] sm:$0xff]
  %v30 = vld [vmem:[%s0 + $0x68] sm:$0xff]
  %v31 = vld [vmem:[%s0 + $0x70] sm:$0xff]
  %v32 = vld [vmem:[%s0 + $0x78] sm:$0xff]
  %v33 = vld [vmem:[%s0 + $0x80] sm:$0xff]
  %v34 = vld [vmem:[%s0 + $0x88] sm:$0xff]
  %v35 = vld [vmem:[%s0 + $0x90] sm:$0xff]
  %v36 = vld [vmem:[%s0 + $0x98] sm:$0xff]
  %v37 = vld [vmem:[%s0 + $0xa0] sm:$0xff]
  %v38 = vld [vmem:[%s0 + $0xa8] sm:$0xff]
  %v39 = vld [vmem:[%s0 + $0xb0] sm:$0xff]
  %v40 = vld [vmem:[%s0 + $0xb8] sm:$0xff]
  %v41 = vld [vmem:[%s0 + $0xc0] sm:$0xff]
  %v42 = vld [vmem:[%s0 + $0xc8] sm:$0xff]
  %v43 = vld [vmem:[%s0 + $0xd0] sm:$0xff]
  %v44 = vld [vmem:[%s0 + $0xd8] sm:$0xff]
  %v45 = vld [vmem:[%s0 + $0xe0] sm:$0xff]
  %v46 = vld [vmem:[%s0 + $0xe8] sm:$0xff]
  %v47 = vld [vmem:[%s0 + $0xf0] sm:$0xff]
  %v48 = vld [vmem:[%s0 + $0xf8] sm:$0xff]
  %v49 = vld [vmem:[%s1] sm:$0xff]
  %v50 = vld [vmem:[%s1 + $0x8] sm:$0xff]
  %v51 = vld [vmem:[%s1 + $0x10] sm:$0xff]
  %v52 = vld [vmem:[%s1 + $0x18] sm:$0xff]
  %v53 = vld [vmem:[%s1 + $0x20] sm:$0xff]
  %v54 = vld [vmem:[%s1 + $0x28] sm:$0xff]
  %v55 = vld [vmem:[%s1 + $0x30] sm:$0xff]
  %v56 = vld [vmem:[%s1 + $0x38] sm:$0xff]
  %v57 = vld [vmem:[%s1 + $0x40] sm:$0xff]
  %v58 = vld [vmem:[%s1 + $0x48] sm:$0xff]
  %v59 = vld [vmem:[%s1 + $0x50] sm:$0xff]
  %v60 = vld [vmem:[%s1 + $0x58] sm:$0xff]
  %v61 = vld [vmem:[%s1 + $0x60] sm:$0xff]
  %v62 = vld [vmem:[%s1 + $0x68] sm:$0xff]
  %v63 = vld [vmem:[%s1 + $0x70] sm:$0xff]
  %v64 = vld [vmem:[%s1 + $0x78] sm:$0xff]
  %v65 = vld [vmem:[%s1 + $0x80] sm:$0xff]
  %v66 = vld [vmem:[%s1 + $0x88] sm:$0xff]
  %v67 = vld [vmem:[%s1 + $0x90] sm:$0x7]
  %vm68 = vcmask 154624
  %v70 = vsel %vm68, %v18, 0
  %v73 = vsel %vm68, %v20, 0
  %v76 = vsel %vm68, %v22, 0
  %v79 = vsel %vm68, %v24, 0
  %v82 = vsel %vm68, %v26, 0
  %v85 = vsel %vm68, %v28, 0
  %v88 = vsel %vm68, %v30, 0
  %v91 = vsel %vm68, %v32, 0
  %v94 = vsel %vm68, %v34, 0
  %v97 = vsel %vm68, %v36, 0
  %v100 = vsel %vm68, %v38, 0
  %v103 = vsel %vm68, %v40, 0
  %v106 = vsel %vm68, %v42, 0
  %v109 = vsel %vm68, %v44, 0
  %v112 = vsel %vm68, %v46, 0
  %v115 = vsel %vm68, %v48, 0
  %vm117 = vcmask 1042432
  %v119 = vsel %vm117, %v67, 0
  %121 = vmatprep.subr.mxu0 0.0
  %122 = vmatpush1.msra.mxu0 %v49
  %123 = vmatprep.subr.mxu0 0.0
  %124 = vmatpush1.msra.mxu0 %v50
  %125 = vmatprep.subr.mxu0 0.0
  %126 = vmatpush1.msra.mxu0 %v51
  %127 = vmatprep.subr.mxu0 0.0
  %128 = vmatpush1.msra.mxu0 %v52
  %129 = vmatprep.subr.mxu0 0.0
  %130 = vmatpush1.msra.mxu0 %v53
  %131 = vmatprep.subr.mxu0 0.0
  %132 = vmatpush1.msra.mxu0 %v54
  %133 = vmatprep.subr.mxu0 0.0
  %134 = vmatpush1.msra.mxu0 %v55
  %135 = vmatprep.subr.mxu0 0.0
  %136 = vmatpush1.msra.mxu0 %v56
  %137 = vmatprep.subr.mxu0 0.0
  %138 = vmatpush1.msra.mxu0 %v57
  %139 = vmatprep.subr.mxu0 0.0
  %140 = vmatpush1.msra.mxu0 %v58
  %141 = vmatprep.subr.mxu0 0.0
  %142 = vmatpush1.msra.mxu0 %v59
  %143 = vmatprep.subr.mxu0 0.0
  %144 = vmatpush1.msra.mxu0 %v60
  %145 = vmatprep.subr.mxu0 0.0
  %146 = vmatpush1.msra.mxu0 %v61
  %147 = vmatprep.subr.mxu0 0.0
  %148 = vmatpush1.msra.mxu0 %v62
  %149 = vmatprep.subr.mxu0 0.0
  %150 = vmatpush1.msra.mxu0 %v63
  %151 = vmatprep.subr.mxu0 0.0
  %152 = vmatpush1.msra.mxu0 %v64
  %153 = vmatprep.subr.mxu0 0.0
  %154 = vmatpush1.msra.mxu0 %v65
  %155 = vmatprep.subr.mxu0 0.0
  %156 = vmatpush1.msra.mxu0 %v66
  %157 = vmatprep.subr.mxu0 0.0
  %158 = vmatpush1.msra.mxu0 %v119
  %159 = vmatprep.subr.mxu0 0.0
  %160 = vmatpush1.msra.mxu0 0.0
  %161 = vmatprep.subr.mxu0 0.0
  %162 = vmatpush1.msra.mxu0 0.0
  %163 = vmatprep.subr.mxu0 0.0
  %164 = vmatpush1.msra.mxu0 0.0
  %165 = vmatprep.subr.mxu0 0.0
  %166 = vmatpush1.msra.mxu0 0.0
  %167 = vmatprep.subr.mxu0 0.0
  %168 = vmatpush1.msra.mxu0 0.0
  %169 = vmatprep.subr.mxu0 0.0
  %170 = vmatpush1.msra.mxu0 0.0
  %171 = vmatprep.subr.mxu0 0.0
  %172 = vmatpush1.msra.mxu0 0.0
  %173 = vmatprep.subr.mxu0 0.0
  %174 = vmatpush1.msra.mxu0 0.0
  %175 = vmatprep.subr.mxu0 0.0
  %176 = vmatpush1.msra.mxu0 0.0
  %177 = vmatprep.subr.mxu0 0.0
  %178 = vmatpush1.msra.mxu0 0.0
  %179 = vmatprep.subr.mxu0 0.0
  %180 = vmatpush1.msra.mxu0 0.0
  %181 = vmatprep.subr.mxu0 0.0
  %182 = vmatpush1.msra.mxu0 0.0
  %183 = vmatprep.subr.mxu0 0.0
  %184 = vmatpush1.msra.mxu0 0.0
  %185 = vmatprep.mubr.f32.mxu0 %v70
  %186 = vmatmul.mubr.f32.gmra.mrb[0].mxu0 %v17
  %v187 = vpop.f32.mrb[0].mxu0
  %v188 = vadd.f32 0.0, %v187
  %v189 = vpop.f32.mrb[0].mxu0
  %190 = vmatprep.mubr.f32.mxu0 %v73
  %191 = vmatmul.mubr.f32.gmra.mrb[0].mxu0 %v19
  %v192 = vpop.f32.mrb[0].mxu0
  %v193 = vadd.f32 0.0, %v192
  %v194 = vpop.f32.mrb[0].mxu0
  %195 = vmatprep.mubr.f32.mxu0 %v76
  %196 = vmatmul.mubr.f32.gmra.mrb[0].mxu0 %v21
  %v197 = vpop.f32.mrb[0].mxu0
  %v198 = vadd.f32 0.0, %v197
  %v199 = vpop.f32.mrb[0].mxu0
  %200 = vmatprep.mubr.f32.mxu0 %v79
  %201 = vmatmul.mubr.f32.gmra.mrb[0].mxu0 %v23
  %v202 = vpop.f32.mrb[0].mxu0
  %v203 = vadd.f32 0.0, %v202
  %v204 = vpop.f32.mrb[0].mxu0
  %205 = vmatprep.mubr.f32.mxu0 %v82
  %206 = vmatmul.mubr.f32.gmra.mrb[0].mxu0 %v25
  %v207 = vpop.f32.mrb[0].mxu0
  %v208 = vadd.f32 0.0, %v207
  %v209 = vpop.f32.mrb[0].mxu0
  %210 = vmatprep.mubr.f32.mxu0 %v85
  %211 = vmatmul.mubr.f32.gmra.mrb[0].mxu0 %v27
  %v212 = vpop.f32.mrb[0].mxu0
  %v213 = vadd.f32 0.0, %v212
  %v214 = vpop.f32.mrb[0].mxu0
  %215 = vmatprep.mubr.f32.mxu0 %v88
  %216 = vmatmul.mubr.f32.gmra.mrb[0].mxu0 %v29
  %v217 = vpop.f32.mrb[0].mxu0
  %v218 = vadd.f32 0.0, %v217
  %v219 = vpop.f32.mrb[0].mxu0
  %220 = vmatprep.mubr.f32.mxu0 %v91
  %221 = vmatmul.mubr.f32.gmra.mrb[0].mxu0 %v31
  %v222 = vpop.f32.mrb[0].mxu0
  %v223 = vadd.f32 0.0, %v222
  %v224 = vpop.f32.mrb[0].mxu0
  %225 = vmatprep.mubr.f32.mxu0 %v94
  %226 = vmatmul.mubr.f32.gmra.mrb[0].mxu0 %v33
  %v227 = vpop.f32.mrb[0].mxu0
  %v228 = vadd.f32 0.0, %v227
  %v229 = vpop.f32.mrb[0].mxu0
  %230 = vmatprep.mubr.f32.mxu0 %v97
  %231 = vmatmul.mubr.f32.gmra.mrb[0].mxu0 %v35
  %v232 = vpop.f32.mrb[0].mxu0
  %v233 = vadd.f32 0.0, %v232
  %v234 = vpop.f32.mrb[0].mxu0
  %235 = vmatprep.mubr.f32.mxu0 %v100
  %236 = vmatmul.mubr.f32.gmra.mrb[0].mxu0 %v37
  %v237 = vpop.f32.mrb[0].mxu0
  %v238 = vadd.f32 0.0, %v237
  %v239 = vpop.f32.mrb[0].mxu0
  %240 = vmatprep.mubr.f32.mxu0 %v103
  %241 = vmatmul.mubr.f32.gmra.mrb[0].mxu0 %v39
  %v242 = vpop.f32.mrb[0].mxu0
  %v243 = vadd.f32 0.0, %v242
  %v244 = vpop.f32.mrb[0].mxu0
  %245 = vmatprep.mubr.f32.mxu0 %v106
  %246 = vmatmul.mubr.f32.gmra.mrb[0].mxu0 %v41
  %v247 = vpop.f32.mrb[0].mxu0
  %v248 = vadd.f32 0.0, %v247
  %v249 = vpop.f32.mrb[0].mxu0
  %250 = vmatprep.mubr.f32.mxu0 %v109
  %251 = vmatmul.mubr.f32.gmra.mrb[0].mxu0 %v43
  %v252 = vpop.f32.mrb[0].mxu0
  %v253 = vadd.f32 0.0, %v252
  %v254 = vpop.f32.mrb[0].mxu0
  %255 = vmatprep.mubr.f32.mxu0 %v112
  %256 = vmatmul.mubr.f32.gmra.mrb[0].mxu0 %v45
  %v257 = vpop.f32.mrb[0].mxu0
  %v258 = vadd.f32 0.0, %v257
  %v259 = vpop.f32.mrb[0].mxu0
  %260 = vmatprep.mubr.f32.mxu0 %v115
  %261 = vmatmul.mubr.f32.gmra.mrb[0].mxu0 %v47
  %v262 = vpop.f32.mrb[0].mxu0
  %v263 = vadd.f32 0.0, %v262
  %v264 = vpop.f32.mrb[0].mxu0
  %265 = vdwg.mxu0
  %v266 = vld [vmem:[%s2] sm:$0x1]
  %v268 = vlaneseq
  %v269 = vshrl.u32 %v268, 7
  %v270 = vsub.s32 0, %v269
  %v271 = vrot.slane %v266, %v270
  %v273 = vmul.f32 %v188, %v271
  %v274 = vmul.f32 %v193, %v271
  %v275 = vmul.f32 %v198, %v271
  %v276 = vmul.f32 %v203, %v271
  %v277 = vmul.f32 %v208, %v271
  %v278 = vmul.f32 %v213, %v271
  %v279 = vmul.f32 %v218, %v271
  %v280 = vmul.f32 %v223, %v271
  %v281 = vmul.f32 %v228, %v271
  %v282 = vmul.f32 %v233, %v271
  %v283 = vmul.f32 %v238, %v271
  %v284 = vmul.f32 %v243, %v271
  %v285 = vmul.f32 %v248, %v271
  %v286 = vmul.f32 %v253, %v271
  %v287 = vmul.f32 %v258, %v271
  %v288 = vmul.f32 %v263, %v271
  %v289 = vld [vmem:[%s3] sm:$0x1]
  %v291 = vlaneseq
  %v292 = vshrl.u32 %v291, 7
  %v293 = vsub.s32 0, %v292
  %v294 = vrot.slane %v289, %v293
  %v296 = vadd.f32 %v273, %v294
  %v297 = vadd.f32 %v274, %v294
  %v298 = vadd.f32 %v275, %v294
  %v299 = vadd.f32 %v276, %v294
  %v300 = vadd.f32 %v277, %v294
  %v301 = vadd.f32 %v278, %v294
  %v302 = vadd.f32 %v279, %v294
  %v303 = vadd.f32 %v280, %v294
  %v304 = vadd.f32 %v281, %v294
  %v305 = vadd.f32 %v282, %v294
  %v306 = vadd.f32 %v283, %v294
  %v307 = vadd.f32 %v284, %v294
  %v308 = vadd.f32 %v285, %v294
  %v309 = vadd.f32 %v286, %v294
  %v310 = vadd.f32 %v287, %v294
  %v311 = vadd.f32 %v288, %v294
  %v312 = vmax.f32 %v296, 0.0
  %v313 = vmax.f32 %v297, 0.0
  %v314 = vmax.f32 %v298, 0.0
  %v315 = vmax.f32 %v299, 0.0
  %v316 = vmax.f32 %v300, 0.0
  %v317 = vmax.f32 %v301, 0.0
  %v318 = vmax.f32 %v302, 0.0
  %v319 = vmax.f32 %v303, 0.0
  %v320 = vmax.f32 %v304, 0.0
  %v321 = vmax.f32 %v305, 0.0
  %v322 = vmax.f32 %v306, 0.0
  %v323 = vmax.f32 %v307, 0.0
  %v324 = vmax.f32 %v308, 0.0
  %v325 = vmax.f32 %v309, 0.0
  %v326 = vmax.f32 %v310, 0.0
  %v327 = vmax.f32 %v311, 0.0
  %vm328 = vcmask 523264
  %329 = vst.msk [vmem:[%s4] sm:$0xff] %vm328, %v312
  %330 = vst.msk [vmem:[%s4 + $0x8] sm:$0xff] %vm328, %v313
  %331 = vst.msk [vmem:[%s4 + $0x10] sm:$0xff] %vm328, %v314
  %332 = vst.msk [vmem:[%s4 + $0x18] sm:$0xff] %vm328, %v315
  %333 = vst.msk [vmem:[%s4 + $0x20] sm:$0xff] %vm328, %v316
  %334 = vst.msk [vmem:[%s4 + $0x28] sm:$0xff] %vm328, %v317
  %335 = vst.msk [vmem:[%s4 + $0x30] sm:$0xff] %vm328, %v318
  %336 = vst.msk [vmem:[%s4 + $0x38] sm:$0xff] %vm328, %v319
  %337 = vst.msk [vmem:[%s4 + $0x40] sm:$0xff] %vm328, %v320
  %338 = vst.msk [vmem:[%s4 + $0x48] sm:$0xff] %vm328, %v321
  %339 = vst.msk [vmem:[%s4 + $0x50] sm:$0xff] %vm328, %v322
  %340 = vst.msk [vmem:[%s4 + $0x58] sm:$0xff] %vm328, %v323
  %341 = vst.msk [vmem:[%s4 + $0x60] sm:$0xff] %vm328, %v324
  %342 = vst.msk [vmem:[%s4 + $0x68] sm:$0xff] %vm328, %v325
  %343 = vst.msk [vmem:[%s4 + $0x70] sm:$0xff] %vm328, %v326
  %344 = vst.msk [vmem:[%s4 + $0x78] sm:$0xff] %vm328, %v327
  // Predicated region
  $region18: #{evo_encoder_forward.14} parent=0 // pred_check
    _
  $region19: #{evo_encoder_forward.14} parent=0 // pred_check_branch
    %346 = sbr.rel (0) target = $region21
  $region20: #{evo_encoder_forward.14} parent=0 // pred_region
    _
  $region21: #{evo_encoder_forward.14} parent=0 // pred_fallthru
    _
  // Predicated region
  $region22: #{evo_encoder_forward.14} parent=0 // pred_check
    _
  $region23: #{evo_encoder_forward.14} parent=0 // pred_check_branch
    %348 = sbr.rel (0) target = $region25
  $region24: #{evo_encoder_forward.14} parent=0 // pred_region
    _
  $region25: #{evo_encoder_forward.14} parent=0 // pred_fallthru
    _

// kernel: evo_encoder_forward.16
$region0: #{evo_encoder_forward.16}
  #allocation0 [shape = 'u32[]', space=smem, size = 0x4, offset = 0x4, fixed_abs, tag = 'smem constant byte address 0x4 - core index']
  #allocation1 [shape = 'u32[144,128]{1,0:T(1,128)}', space=vmem, size = 0x12000, scoped, tag = 'internal scratch']
  %s0 = inlined_call_operand.vmem [shape: f32[2,16,64], index: 0, kind: input, shape index: {}]
  %s1 = inlined_call_operand.vmem [shape: f32[2,16,1], index: 1, kind: input, shape index: {}]
  %s2 = inlined_call_operand.vmem [shape: f32[2,16,1], index: 2, kind: input, shape index: {}]
  %s3 = inlined_call_operand.vmem [shape: f32[2,16,64], index: 3, kind: output, shape index: {}]
  %s4 = sld [smem:[#allocation0]]
  $region45: #{evo_encoder_forward.16} parent=0
    _
  %s6 = ssub.s32 1, %s4
  %s7 = scalar_select 0, %s6, %s4
  loop: start=0, step=1, limit=4
  $region2: #{evo_encoder_forward.16} parent=0 // loop_pre_header
    _
  $region3: #{evo_encoder_forward.16} parent=0 // loop_header
    %s9 = sphi 0, %s13
    %p10 = scmp.ge.s32.totalorder %s9, 4
    %s19 = sphi 0, %s21
    %s22 = sphi 0, %s19
    %s23 = sphi 0, %s22
    %s39 = sphi 0, %s23
    %s45 = sphi 0, %s47
    %s48 = sphi 0, %s45
    %s49 = sphi 0, %s48
    %s65 = sphi 0, %s49
    %s71 = sphi 0, %s73
    %s74 = sphi 0, %s71
    %s75 = sphi 0, %s74
    %s91 = sphi 0, %s75
    %s97 = sphi 0, %s99
    %s100 = sphi 0, %s97
    %s101 = sphi 0, %s100
    %s117 = sphi 0, %s101
  $region4: #{evo_encoder_forward.16} parent=0 // loop_header_branch
    %12 = sbr.rel (%p10) target = $region8
  $region5: #{evo_encoder_forward.16} parent=0 // loop_body
    %s14 = ssub.s32 %s9, 1
    %s15 = ssub.s32 %s9, 2
    %s16 = sadd.s32 %s9, 1
    %s17 = ssub.s32 %s9, %s16
    %p18 = scmp.eq.s32.totalorder %s17, 0
    %s20 = sadd.s32 %s19, 1
    %s21 = scalar_select %p18, %s19, %s20
    %p24 = pneg %p18
    %p25 = scmp.eq.s32.totalorder %s9, 1
    %p26 = por %p24, %p25
    %p27 = scmp.ne.s32.totalorder %s19, %s22
    %p28 = scmp.eq.s32.totalorder %s9, 0
    %p29 = por %p27, %p28
    %p30 = scmp.ne.s32.totalorder %s19, %s22
    %p31 = scmp.eq.s32.totalorder %s14, 1
    %p32 = por %p30, %p31
    %p33 = scmp.ne.s32.totalorder %s22, %s23
    %p34 = scmp.eq.s32.totalorder %s14, 0
    %p35 = por %p33, %p34
    %p36 = scmp.ne.s32.totalorder %s22, %s23
    %p37 = scmp.eq.s32.totalorder %s15, 1
    %p38 = por %p36, %p37
    %p40 = scmp.ne.s32.totalorder %s23, %s39
    %p41 = scmp.eq.s32.totalorder %s15, 0
    %p42 = por %p40, %p41
    %s43 = ssub.s32 %s9, %s16
    %p44 = scmp.eq.s32.totalorder %s43, 0
    %s46 = sadd.s32 %s45, 1
    %s47 = scalar_select %p44, %s45, %s46
    %p50 = pneg %p44
    %p51 = scmp.eq.s32.totalorder %s9, 1
    %p52 = por %p50, %p51
    %p53 = scmp.ne.s32.totalorder %s45, %s48
    %p54 = scmp.eq.s32.totalorder %s9, 0
    %p55 = por %p53, %p54
    %p56 = scmp.ne.s32.totalorder %s45, %s48
    %p57 = scmp.eq.s32.totalorder %s14, 1
    %p58 = por %p56, %p57
    %p59 = scmp.ne.s32.totalorder %s48, %s49
    %p60 = scmp.eq.s32.totalorder %s14, 0
    %p61 = por %p59, %p60
    %p62 = scmp.ne.s32.totalorder %s48, %s49
    %p63 = scmp.eq.s32.totalorder %s15, 1
    %p64 = por %p62, %p63
    %p66 = scmp.ne.s32.totalorder %s49, %s65
    %p67 = scmp.eq.s32.totalorder %s15, 0
    %p68 = por %p66, %p67
    %s69 = ssub.s32 %s9, %s16
    %p70 = scmp.eq.s32.totalorder %s69, 0
    %s72 = sadd.s32 %s71, 1
    %s73 = scalar_select %p70, %s71, %s72
    %p76 = pneg %p70
    %p77 = scmp.eq.s32.totalorder %s9, 1
    %p78 = por %p76, %p77
    %p79 = scmp.ne.s32.totalorder %s71, %s74
    %p80 = scmp.eq.s32.totalorder %s9, 0
    %p81 = por %p79, %p80
    %p82 = scmp.ne.s32.totalorder %s71, %s74
    %p83 = scmp.eq.s32.totalorder %s14, 1
    %p84 = por %p82, %p83
    %p85 = scmp.ne.s32.totalorder %s74, %s75
    %p86 = scmp.eq.s32.totalorder %s14, 0
    %p87 = por %p85, %p86
    %p88 = scmp.ne.s32.totalorder %s74, %s75
    %p89 = scmp.eq.s32.totalorder %s15, 1
    %p90 = por %p88, %p89
    %p92 = scmp.ne.s32.totalorder %s75, %s91
    %p93 = scmp.eq.s32.totalorder %s15, 0
    %p94 = por %p92, %p93
    %s95 = ssub.s32 %s9, %s16
    %p96 = scmp.eq.s32.totalorder %s95, 0
    %s98 = sadd.s32 %s97, 1
    %s99 = scalar_select %p96, %s97, %s98
    %p102 = pneg %p96
    %p103 = scmp.eq.s32.totalorder %s9, 1
    %p104 = por %p102, %p103
    %p105 = scmp.ne.s32.totalorder %s97, %s100
    %p106 = scmp.eq.s32.totalorder %s9, 0
    %p107 = por %p105, %p106
    %p108 = scmp.ne.s32.totalorder %s97, %s100
    %p109 = scmp.eq.s32.totalorder %s14, 1
    %p110 = por %p108, %p109
    %p111 = scmp.ne.s32.totalorder %s100, %s101
    %p112 = scmp.eq.s32.totalorder %s14, 0
    %p113 = por %p111, %p112
    %p114 = scmp.ne.s32.totalorder %s100, %s101
    %p115 = scmp.eq.s32.totalorder %s15, 1
    %p116 = por %p114, %p115
    %p118 = scmp.ne.s32.totalorder %s101, %s117
    %p119 = scmp.eq.s32.totalorder %s15, 0
    %p120 = por %p118, %p119
    %p121 = scmp.le.s32.totalorder 1, %s9
    %p122 = scmp.lt.s32.totalorder %s9, 3
    %p123 = pnand %p121, %p122
    %p124 = pneg %p123
    // Predicated region
    $region9: #{evo_encoder_forward.16} parent=5 // pred_check
      _
    $region10: #{evo_encoder_forward.16} parent=5 // pred_check_branch
      %126 = sbr.rel (%p123) target = $region12
    $region11: #{evo_encoder_forward.16} parent=5 // pred_region
      %s127 = ssub.s32 %s9, 1
    $region12: #{evo_encoder_forward.16} parent=5 // pred_fallthru
      _
    %p128 = scmp.lt.s32.totalorder %s9, 2
    // Predicated region
    $region13: #{evo_encoder_forward.16} parent=5 // pred_check
      %p129 = pneg %p128
    $region14: #{evo_encoder_forward.16} parent=5 // pred_check_branch
      %131 = sbr.rel (%p129) target = $region16
    $region15: #{evo_encoder_forward.16} parent=5 // pred_region
      // Predicated region
      $region17: #{evo_encoder_forward.16} parent=15 // pred_check
        %p132 = pneg %p29
      $region18: #{evo_encoder_forward.16} parent=15 // pred_check_branch
        %134 = sbr.rel (%p132) target = $region20
      $region19: #{evo_encoder_forward.16} parent=15 // pred_region
        %p135 = scmp.lt.s32.totalorder %s9, 1
        %s136 = scalar_select %p135, %s9, 1
        %s137 = smul.addr %s136, 2
        %s138 = smul.addr %s137, 8
        %s139 = scalar_lea.vmem %s0, %s138
      $region20: #{evo_encoder_forward.16} parent=15 // pred_fallthru
        _
      // Predicated region
      $region21: #{evo_encoder_forward.16} parent=15 // pred_check
        %p140 = pneg %p55
      $region22: #{evo_encoder_forward.16} parent=15 // pred_check_branch
        %142 = sbr.rel (%p140) target = $region24
      $region23: #{evo_encoder_forward.16} parent=15 // pred_region
        %p143 = scmp.lt.s32.totalorder %s9, 1
        %s144 = scalar_select %p143, %s9, 1
        %s145 = smul.addr %s144, 2
        %s146 = smul.addr %s145, 8
        %s147 = scalar_lea.vmem %s1, %s146
      $region24: #{evo_encoder_forward.16} parent=15 // pred_fallthru
        _
      // Predicated region
      $region25: #{evo_encoder_forward.16} parent=15 // pred_check
        %p148 = pneg %p81
      $region26: #{evo_encoder_forward.16} parent=15 // pred_check_branch
        %150 = sbr.rel (%p148) target = $region28
      $region27: #{evo_encoder_forward.16} parent=15 // pred_region
        %p151 = scmp.lt.s32.totalorder %s9, 1
        %s152 = scalar_select %p151, %s9, 1
        %s153 = smul.addr %s152, 2
        %s154 = smul.addr %s153, 8
        %s155 = scalar_lea.vmem %s2, %s154
      $region28: #{evo_encoder_forward.16} parent=15 // pred_fallthru
        _
    $region16: #{evo_encoder_forward.16} parent=5 // pred_fallthru
      _
    %p156 = scmp.le.s32.totalorder 1, %s9
    %p157 = scmp.lt.s32.totalorder %s9, 3
    %p158 = pnand %p156, %p157
    %p159 = pneg %p158
    // Predicated region
    $region29: #{evo_encoder_forward.16} parent=5 // pred_check
      _
    $region30: #{evo_encoder_forward.16} parent=5 // pred_check_branch
      %161 = sbr.rel (%p158) target = $region32
    $region31: #{evo_encoder_forward.16} parent=5 // pred_region
      %s162 = ssub.s32 %s9, 1
      %p163 = scmp.lt.s32.totalorder %s14, 1
      %s164 = scalar_select %p163, %s14, 1
      %s165 = smul.addr %s164, 2
      %s166 = smul.addr %s165, 8
      %s167 = scalar_lea.vmem %s0, %s166
      %p168 = pneg %p35
      %p169 = pneg %p32
      %p170 = scmp.lt.s32.totalorder %s14, 1
      %s171 = scalar_select %p170, %s14, 1
      %s172 = smul.addr %s171, 2
      %s173 = smul.addr %s172, 8
      %s174 = scalar_lea.vmem %s1, %s173
      %p175 = pneg %p61
      %p176 = pneg %p58
      %p177 = scmp.lt.s32.totalorder %s14, 1
      %s178 = scalar_select %p177, %s14, 1
      %s179 = smul.addr %s178, 2
      %s180 = smul.addr %s179, 8
      %s181 = scalar_lea.vmem %s2, %s180
      %p182 = pneg %p87
      %p183 = pneg %p84
      %p184 = pneg %p113
      %p185 = pneg %p110
      %p186 = scmp.lt.s32.totalorder %s14, 1
      %s187 = scalar_select %p186, %s14, 1
      %s188 = smul.addr %s187, 2
      %s189 = smul.addr %s188, 8
      %s190 = scalar_lea.vmem %s3, %s189
      %p191 = scmp.lt.s32.totalorder %s14, 1
      %s192 = scalar_select %p191, %s14, 1
      %s193 = smul.addr %s192, 2
      %s194 = smul.addr %s193, 8
      %s195 = scalar_lea.vmem %s0, %s194
      %p196 = scmp.lt.s32.totalorder %s14, 1
      %s197 = scalar_select %p196, %s14, 1
      %s198 = smul.addr %s197, 2
      %s199 = smul.addr %s198, 8
      %s200 = scalar_lea.vmem %s1, %s199
      %p201 = scmp.lt.s32.totalorder %s14, 1
      %s202 = scalar_select %p201, %s14, 1
      %s203 = smul.addr %s202, 2
      %s204 = smul.addr %s203, 8
      %s205 = scalar_lea.vmem %s2, %s204
      %p206 = scmp.lt.s32.totalorder %s14, 1
      %s207 = scalar_select %p206, %s14, 1
      %s208 = smul.addr %s207, 2
      %s209 = smul.addr %s208, 8
      %s210 = scalar_lea.vmem %s3, %s209
      %v211 = vld [vmem:[%s195] sm:$0xff]
      %v212 = vld [vmem:[%s195 + $0x8] sm:$0xff]
      %v213 = vld [vmem:[%s200] sm:$0xff]
      %v214 = vld [vmem:[%s200 + $0x8] sm:$0xff]
      %v215 = vld [vmem:[%s205] sm:$0xff]
      %v216 = vld [vmem:[%s205 + $0x8] sm:$0xff]
      %218 = vset.pattern.permute.xlu0 0
      %219 = vperm.xlu0 %218, %v213
      %v220 = vpop.permute.xlu0 %219
      %223 = vset.pattern.permute.xlu0 0
      %224 = vperm.xlu0 %223, %v214
      %v225 = vpop.permute.xlu0 %224
      %v227 = vmul.f32 %v211, %v220
      %v228 = vmul.f32 %v212, %v225
      %vm229 = vcmask 523264
      %v230 = vsel %vm229, %v227, 0.0
      %v231 = vsel %vm229, %v228, 0.0
      %v232 = vadd.f32 %v230, %v231
      %v233 = vrot.slane %v232, 4
      %v234 = vadd.f32 %v232, %v233
      %v235 = vrot.slane %v234, 2
      %v236 = vadd.f32 %v234, %v235
      %v237 = vrot.slane %v236, 1
      %v238 = vadd.f32 %v236, %v237
      %vm239 = vcmask 7168
      %v240 = vsel %vm239, %v213, 0.0
      %v241 = vsel %vm239, %v214, 0.0
      %v242 = vadd.f32 %v240, %v241
      %243 = vadd.xlane.f32.xlu0 %v242
      %v244 = vpop.xlane.xlu0 %243
      %v245 = vrot.slane %v244, 4
      %v246 = vadd.f32 %v244, %v245
      %v247 = vrot.slane %v246, 2
      %v248 = vadd.f32 %v246, %v247
      %v249 = vrot.slane %v248, 1
      %v250 = vadd.f32 %v248, %v249
      %s251 = vtos %v250
      %s252 = sadd.f32 %s251, 1e-08
      %v253 = vstv %s252
      %v254 = vrcp.pop %v253
      %v255 = vmul.f32 %v238, %v254
      %257 = vset.pattern.permute.xlu0 0
      %258 = vperm.xlu0 %257, %v215
      %v259 = vpop.permute.xlu0 %258
      %262 = vset.pattern.permute.xlu0 0
      %263 = vperm.xlu0 %262, %v216
      %v264 = vpop.permute.xlu0 %263
      %v266 = vmul.f32 %v211, %v259
      %v267 = vmul.f32 %v212, %v264
      %v268 = vsel %vm229, %v266, 0.0
      %v269 = vsel %vm229, %v267, 0.0
      %v270 = vadd.f32 %v268, %v269
      %v271 = vrot.slane %v270, 4
      %v272 = vadd.f32 %v270, %v271
      %v273 = vrot.slane %v272, 2
      %v274 = vadd.f32 %v272, %v273
      %v275 = vrot.slane %v274, 1
      %v276 = vadd.f32 %v274, %v275
      %v277 = vsel %vm239, %v215, 0.0
      %v278 = vsel %vm239, %v216, 0.0
      %v279 = vadd.f32 %v277, %v278
      %280 = vadd.xlane.f32.xlu0 %v279
      %v281 = vpop.xlane.xlu0 %280
      %v282 = vrot.slane %v281, 4
      %v283 = vadd.f32 %v281, %v282
      %v284 = vrot.slane %v283, 2
      %v285 = vadd.f32 %v283, %v284
      %v286 = vrot.slane %v285, 1
      %v287 = vadd.f32 %v285, %v286
      %s288 = vtos %v287
      %s289 = sadd.f32 %s288, 1e-08
      %v290 = vstv %s289
      %v291 = vrcp.pop %v290
      %v292 = vmul.f32 %v276, %v291
      %v293 = vmul.f32 %v211, %v255
      %v294 = vmul.f32 %v212, %v255
      %v295 = vsel %vm229, %v293, 0.0
      %296 = vadd.xlane.f32.xlu0 %v295
      %v297 = vpop.xlane.xlu0 %296
      %v298 = vsel %vm229, %v294, 0.0
      %299 = vadd.xlane.f32.xlu0 %v298
      %v300 = vpop.xlane.xlu0 %299
      %v301 = vmul.f32 %v211, %v292
      %v302 = vmul.f32 %v212, %v292
      %v303 = vsel %vm229, %v301, 0.0
      %304 = vadd.xlane.f32.xlu0 %v303
      %v305 = vpop.xlane.xlu0 %304
      %v306 = vsel %vm229, %v302, 0.0
      %307 = vadd.xlane.f32.xlu0 %v306
      %v308 = vpop.xlane.xlu0 %307
      %v309 = vmax.f32 %v297, %v305
      %v310 = vmax.f32 %v300, %v308
      %v311 = vsub.f32 %v297, %v309
      %v312 = vsub.f32 %v300, %v310
      %v313 = vmul.f32 %v311, 1.442695
      %v314 = vpow.pop %v313
      %v315 = vmul.f32 %v312, 1.442695
      %v316 = vpow.pop %v315
      %v317 = vsub.f32 %v305, %v309
      %v318 = vsub.f32 %v308, %v310
      %v319 = vmul.f32 %v317, 1.442695
      %v320 = vpow.pop %v319
      %v321 = vmul.f32 %v318, 1.442695
      %v322 = vpow.pop %v321
      %v323 = vadd.f32 %v314, %v320
      %v324 = vadd.f32 %v316, %v322
      %v325 = vrcp.pop %v323
      %v326 = vmul.f32 1.0, %v325
      %v327 = vrcp.pop %v324
      %v328 = vmul.f32 1.0, %v327
      %v329 = vmul.f32 %v314, %v326
      %v330 = vmul.f32 %v316, %v328
      %v331 = vmul.f32 %v329, 0.125
      %v332 = vmul.f32 %v330, 0.125
      %v333 = vmul.f32 %v320, %v326
      %v334 = vmul.f32 %v322, %v328
      %v335 = vmul.f32 %v333, 0.125
      %v336 = vmul.f32 %v334, 0.125
      %v337 = vmul.f32 %v331, %v255
      %v338 = vmul.f32 %v332, %v255
      %v339 = vmul.f32 %v335, %v292
      %v340 = vmul.f32 %v336, %v292
      %v341 = vadd.f32 %v337, %v339
      %v342 = vadd.f32 %v338, %v340
      %v343 = vadd.f32 %v213, %v215
      %v344 = vadd.f32 %v214, %v216
      %346 = vset.pattern.permute.xlu0 0
      %347 = vperm.xlu0 %346, %v343
      %v348 = vpop.permute.xlu0 %347
      %351 = vset.pattern.permute.xlu0 0
      %352 = vperm.xlu0 %351, %v344
      %v353 = vpop.permute.xlu0 %352
      %v355 = vmul.f32 %v341, %v348
      %v356 = vmul.f32 %v342, %v353
      %v357 = vadd.f32 %v211, %v355
      %v358 = vadd.f32 %v212, %v356
      %359 = vst.msk [vmem:[%s210] sm:$0xff] %vm229, %v357
      %360 = vst.msk [vmem:[%s210 + $0x8] sm:$0xff] %vm229, %v358
      %p361 = scmp.lt.s32.totalorder %s14, 1
      %s362 = scalar_select %p361, %s14, 1
      %s363 = smul.addr %s362, 2
      %s364 = smul.addr %s363, 8
      %s365 = scalar_lea.vmem %s3, %s364
      // Predicated region
      $region33: #{evo_encoder_forward.16} parent=31 // pred_check
        %p366 = pneg %p110
      $region34: #{evo_encoder_forward.16} parent=31 // pred_check_branch
        %368 = sbr.rel (%p366) target = $region36
      $region35: #{evo_encoder_forward.16} parent=31 // pred_region
        _
      $region36: #{evo_encoder_forward.16} parent=31 // pred_fallthru
        _
    $region32: #{evo_encoder_forward.16} parent=5 // pred_fallthru
      _
    %p369 = scmp.le.s32.totalorder 2, %s9
    // Predicated region
    $region37: #{evo_encoder_forward.16} parent=5 // pred_check
      %p370 = pneg %p369
    $region38: #{evo_encoder_forward.16} parent=5 // pred_check_branch
      %372 = sbr.rel (%p370) target = $region40
    $region39: #{evo_encoder_forward.16} parent=5 // pred_region
      %s373 = ssub.s32 %s9, 2
      // Predicated region
      $region41: #{evo_encoder_forward.16} parent=39 // pred_check
        %p374 = pneg %p116
      $region42: #{evo_encoder_forward.16} parent=39 // pred_check_branch
        %376 = sbr.rel (%p374) target = $region44
      $region43: #{evo_encoder_forward.16} parent=39 // pred_region
        %p377 = scmp.lt.s32.totalorder %s15, 1
        %s378 = scalar_select %p377, %s15, 1
        %s379 = smul.addr %s378, 2
        %s380 = smul.addr %s379, 8
        %s381 = scalar_lea.vmem %s3, %s380
      $region44: #{evo_encoder_forward.16} parent=39 // pred_fallthru
        _
    $region40: #{evo_encoder_forward.16} parent=5 // pred_fallthru
      _
  $region6: #{evo_encoder_forward.16} parent=0 // loop_footer
    %s13 = sadd.s32 1, %s9
  $region7: #{evo_encoder_forward.16} parent=0 // loop_footer_branch
    %8 = sbr.rel target = $region3
  $region8: #{evo_encoder_forward.16} parent=0 // loop_exit
    _

// kernel: evo_encoder_forward.17
$region0: #{evo_encoder_forward.17}
  #allocation0 [shape = 'u32[]', space=smem, size = 0x4, offset = 0x4, fixed_abs, tag = 'smem constant byte address 0x4 - core index']
  #allocation1 [shape = 'u32[144,128]{1,0:T(1,128)}', space=vmem, size = 0x12000, scoped, tag = 'internal scratch']
  %s0 = inlined_call_operand.vmem [shape: f32[32,64], index: 0, kind: input, shape index: {}]
  %s1 = inlined_call_operand.vmem [shape: f32[64,64], index: 1, kind: input, shape index: {}]
  %s2 = inlined_call_operand.vmem [shape: f32[1,64], index: 2, kind: input, shape index: {}]
  %s3 = inlined_call_operand.vmem [shape: f32[1,64], index: 3, kind: input, shape index: {}]
  %s4 = inlined_call_operand.vmem [shape: f32[32,64], index: 4, kind: output, shape index: {}]
  %s5 = sld [smem:[#allocation0]]
  $region26: #{evo_encoder_forward.17} parent=0
    _
  %s7 = ssub.s32 1, %s5
  %s8 = scalar_select 0, %s7, %s5
  // Predicated region
  $region2: #{evo_encoder_forward.17} parent=0 // pred_check
    _
  $region3: #{evo_encoder_forward.17} parent=0 // pred_check_branch
    %10 = sbr.rel (0) target = $region5
  $region4: #{evo_encoder_forward.17} parent=0 // pred_region
    _
  $region5: #{evo_encoder_forward.17} parent=0 // pred_fallthru
    _
  // Predicated region
  $region6: #{evo_encoder_forward.17} parent=0 // pred_check
    _
  $region7: #{evo_encoder_forward.17} parent=0 // pred_check_branch
    %12 = sbr.rel (0) target = $region9
  $region8: #{evo_encoder_forward.17} parent=0 // pred_region
    _
  $region9: #{evo_encoder_forward.17} parent=0 // pred_fallthru
    _
  // Predicated region
  $region10: #{evo_encoder_forward.17} parent=0 // pred_check
    _
  $region11: #{evo_encoder_forward.17} parent=0 // pred_check_branch
    %14 = sbr.rel (0) target = $region13
  $region12: #{evo_encoder_forward.17} parent=0 // pred_region
    _
  $region13: #{evo_encoder_forward.17} parent=0 // pred_fallthru
    _
  // Predicated region
  $region14: #{evo_encoder_forward.17} parent=0 // pred_check
    _
  $region15: #{evo_encoder_forward.17} parent=0 // pred_check_branch
    %16 = sbr.rel (0) target = $region17
  $region16: #{evo_encoder_forward.17} parent=0 // pred_region
    _
  $region17: #{evo_encoder_forward.17} parent=0 // pred_fallthru
    _
  %v17 = vld [vmem:[%s0] sm:$0xff]
  %v18 = vld [vmem:[%s0 + $0x8] sm:$0xff]
  %v19 = vld [vmem:[%s0 + $0x10] sm:$0xff]
  %v20 = vld [vmem:[%s0 + $0x18] sm:$0xff]
  %v21 = vld [vmem:[%s1] sm:$0xff]
  %v22 = vld [vmem:[%s1 + $0x8] sm:$0xff]
  %v23 = vld [vmem:[%s1 + $0x10] sm:$0xff]
  %v24 = vld [vmem:[%s1 + $0x18] sm:$0xff]
  %v25 = vld [vmem:[%s1 + $0x20] sm:$0xff]
  %v26 = vld [vmem:[%s1 + $0x28] sm:$0xff]
  %v27 = vld [vmem:[%s1 + $0x30] sm:$0xff]
  %v28 = vld [vmem:[%s1 + $0x38] sm:$0xff]
  %vm29 = vcmask 523264
  %v31 = vsel %vm29, %v17, 0
  %v34 = vsel %vm29, %v18, 0
  %v37 = vsel %vm29, %v19, 0
  %v40 = vsel %vm29, %v20, 0
  %42 = vmatprep.subr.mxu0 0.0
  %43 = vmatpush1.msra.mxu0 %v21
  %44 = vmatprep.subr.mxu0 0.0
  %45 = vmatpush1.msra.mxu0 %v22
  %46 = vmatprep.subr.mxu0 0.0
  %47 = vmatpush1.msra.mxu0 %v23
  %48 = vmatprep.subr.mxu0 0.0
  %49 = vmatpush1.msra.mxu0 %v24
  %50 = vmatprep.subr.mxu0 0.0
  %51 = vmatpush1.msra.mxu0 %v25
  %52 = vmatprep.subr.mxu0 0.0
  %53 = vmatpush1.msra.mxu0 %v26
  %54 = vmatprep.subr.mxu0 0.0
  %55 = vmatpush1.msra.mxu0 %v27
  %56 = vmatprep.subr.mxu0 0.0
  %57 = vmatpush1.msra.mxu0 %v28
  %58 = vmatprep.subr.mxu0 0.0
  %59 = vmatpush1.msra.mxu0 0.0
  %60 = vmatprep.subr.mxu0 0.0
  %61 = vmatpush1.msra.mxu0 0.0
  %62 = vmatprep.subr.mxu0 0.0
  %63 = vmatpush1.msra.mxu0 0.0
  %64 = vmatprep.subr.mxu0 0.0
  %65 = vmatpush1.msra.mxu0 0.0
  %66 = vmatprep.subr.mxu0 0.0
  %67 = vmatpush1.msra.mxu0 0.0
  %68 = vmatprep.subr.mxu0 0.0
  %69 = vmatpush1.msra.mxu0 0.0
  %70 = vmatprep.subr.mxu0 0.0
  %71 = vmatpush1.msra.mxu0 0.0
  %72 = vmatprep.subr.mxu0 0.0
  %73 = vmatpush1.msra.mxu0 0.0
  %74 = vmatprep.subr.mxu0 0.0
  %75 = vmatpush1.msra.mxu0 0.0
  %76 = vmatprep.subr.mxu0 0.0
  %77 = vmatpush1.msra.mxu0 0.0
  %78 = vmatprep.subr.mxu0 0.0
  %79 = vmatpush1.msra.mxu0 0.0
  %80 = vmatprep.subr.mxu0 0.0
  %81 = vmatpush1.msra.mxu0 0.0
  %82 = vmatprep.subr.mxu0 0.0
  %83 = vmatpush1.msra.mxu0 0.0
  %84 = vmatprep.subr.mxu0 0.0
  %85 = vmatpush1.msra.mxu0 0.0
  %86 = vmatprep.subr.mxu0 0.0
  %87 = vmatpush1.msra.mxu0 0.0
  %88 = vmatprep.subr.mxu0 0.0
  %89 = vmatpush1.msra.mxu0 0.0
  %90 = vmatprep.subr.mxu0 0.0
  %91 = vmatpush1.msra.mxu0 0.0
  %92 = vmatprep.subr.mxu0 0.0
  %93 = vmatpush1.msra.mxu0 0.0
  %94 = vmatprep.subr.mxu0 0.0
  %95 = vmatpush1.msra.mxu0 0.0
  %96 = vmatprep.subr.mxu0 0.0
  %97 = vmatpush1.msra.mxu0 0.0
  %98 = vmatprep.subr.mxu0 0.0
  %99 = vmatpush1.msra.mxu0 0.0
  %100 = vmatprep.subr.mxu0 0.0
  %101 = vmatpush1.msra.mxu0 0.0
  %102 = vmatprep.subr.mxu0 0.0
  %103 = vmatpush1.msra.mxu0 0.0
  %104 = vmatprep.subr.mxu0 0.0
  %105 = vmatpush1.msra.mxu0 0.0
  %106 = vmatprep.mubr.f32.mxu0 0.0
  %107 = vmatmul.mubr.f32.gmra.mrb[0].mxu0 %v31
  %v108 = vpop.f32.mrb[0].mxu0
  %v109 = vadd.f32 0.0, %v108
  %v110 = vpop.f32.mrb[0].mxu0
  %111 = vmatprep.mubr.f32.mxu0 0.0
  %112 = vmatmul.mubr.f32.gmra.mrb[0].mxu0 %v34
  %v113 = vpop.f32.mrb[0].mxu0
  %v114 = vadd.f32 0.0, %v113
  %v115 = vpop.f32.mrb[0].mxu0
  %116 = vmatprep.mubr.f32.mxu0 0.0
  %117 = vmatmul.mubr.f32.gmra.mrb[0].mxu0 %v37
  %v118 = vpop.f32.mrb[0].mxu0
  %v119 = vadd.f32 0.0, %v118
  %v120 = vpop.f32.mrb[0].mxu0
  %121 = vmatprep.mubr.f32.mxu0 0.0
  %122 = vmatmul.mubr.f32.gmra.mrb[0].mxu0 %v40
  %v123 = vpop.f32.mrb[0].mxu0
  %v124 = vadd.f32 0.0, %v123
  %v125 = vpop.f32.mrb[0].mxu0
  %126 = vdwg.mxu0
  %v127 = vld [vmem:[%s2] sm:$0x1]
  %v129 = vlaneseq
  %v130 = vshrl.u32 %v129, 7
  %v131 = vsub.s32 0, %v130
  %v132 = vrot.slane %v127, %v131
  %v134 = vmul.f32 %v109, %v132
  %v135 = vmul.f32 %v114, %v132
  %v136 = vmul.f32 %v119, %v132
  %v137 = vmul.f32 %v124, %v132
  %v138 = vld [vmem:[%s3] sm:$0x1]
  %v140 = vlaneseq
  %v141 = vshrl.u32 %v140, 7
  %v142 = vsub.s32 0, %v141
  %v143 = vrot.slane %v138, %v142
  %v145 = vadd.f32 %v134, %v143
  %v146 = vadd.f32 %v135, %v143
  %v147 = vadd.f32 %v136, %v143
  %v148 = vadd.f32 %v137, %v143
  %v149 = vmax.f32 %v145, 0.0
  %v150 = vmax.f32 %v146, 0.0
  %v151 = vmax.f32 %v147, 0.0
  %v152 = vmax.f32 %v148, 0.0
  %153 = vst.msk [vmem:[%s4] sm:$0xff] %vm29, %v149
  %154 = vst.msk [vmem:[%s4 + $0x8] sm:$0xff] %vm29, %v150
  %155 = vst.msk [vmem:[%s4 + $0x10] sm:$0xff] %vm29, %v151
  %156 = vst.msk [vmem:[%s4 + $0x18] sm:$0xff] %vm29, %v152
  // Predicated region
  $region18: #{evo_encoder_forward.17} parent=0 // pred_check
    _
  $region19: #{evo_encoder_forward.17} parent=0 // pred_check_branch
    %158 = sbr.rel (0) target = $region21
  $region20: #{evo_encoder_forward.17} parent=0 // pred_region
    _
  $region21: #{evo_encoder_forward.17} parent=0 // pred_fallthru
    _
  // Predicated region
  $region22: #{evo_encoder_forward.17} parent=0 // pred_check
    _
  $region23: #{evo_encoder_forward.17} parent=0 // pred_check_branch
    %160 = sbr.rel (0) target = $region25
  $region24: #{evo_encoder_forward.17} parent=0 // pred_region
    _
  $region25: #{evo_encoder_forward.17} parent=0 // pred_fallthru
    _

// kernel: evo_encoder_forward.15
$region0: #{evo_encoder_forward.15}
  #allocation0 [shape = 'u32[]', space=smem, size = 0x4, offset = 0x4, fixed_abs, tag = 'smem constant byte address 0x4 - core index']
  #allocation1 [shape = 'u32[144,128]{1,0:T(1,128)}', space=vmem, size = 0x12000, scoped, tag = 'internal scratch']
  %s0 = inlined_call_operand.vmem [shape: f32[49,32,64], index: 0, kind: input, shape index: {}]
  %s1 = inlined_call_operand.vmem [shape: f32[32,64], index: 1, kind: output, shape index: {}]
  %s2 = sld [smem:[#allocation0]]
  $region14: #{evo_encoder_forward.15} parent=0
    _
  %s4 = ssub.s32 1, %s2
  %s5 = scalar_select 0, %s4, %s2
  // Predicated region
  $region2: #{evo_encoder_forward.15} parent=0 // pred_check
    _
  $region3: #{evo_encoder_forward.15} parent=0 // pred_check_branch
    %7 = sbr.rel (0) target = $region5
  $region4: #{evo_encoder_forward.15} parent=0 // pred_region
    _
  $region5: #{evo_encoder_forward.15} parent=0 // pred_fallthru
    _
  %v8 = vld [vmem:[%s0] sm:$0xff]
  %v9 = vld [vmem:[%s0 + $0x8] sm:$0xff]
  %v10 = vld [vmem:[%s0 + $0x10] sm:$0xff]
  %v11 = vld [vmem:[%s0 + $0x18] sm:$0xff]
  %v12 = vld [vmem:[%s0 + $0x20] sm:$0xff]
  %v13 = vld [vmem:[%s0 + $0x28] sm:$0xff]
  %v14 = vld [vmem:[%s0 + $0x30] sm:$0xff]
  %v15 = vld [vmem:[%s0 + $0x38] sm:$0xff]
  %v16 = vld [vmem:[%s0 + $0x40] sm:$0xff]
  %v17 = vld [vmem:[%s0 + $0x48] sm:$0xff]
  %v18 = vld [vmem:[%s0 + $0x50] sm:$0xff]
  %v19 = vld [vmem:[%s0 + $0x58] sm:$0xff]
  %v20 = vld [vmem:[%s0 + $0x60] sm:$0xff]
  %v21 = vld [vmem:[%s0 + $0x68] sm:$0xff]
  %v22 = vld [vmem:[%s0 + $0x70] sm:$0xff]
  %v23 = vld [vmem:[%s0 + $0x78] sm:$0xff]
  %v24 = vld [vmem:[%s0 + $0x80] sm:$0xff]
  %v25 = vld [vmem:[%s0 + $0x88] sm:$0xff]
  %v26 = vld [vmem:[%s0 + $0x90] sm:$0xff]
  %v27 = vld [vmem:[%s0 + $0x98] sm:$0xff]
  %v28 = vld [vmem:[%s0 + $0xa0] sm:$0xff]
  %v29 = vld [vmem:[%s0 + $0xa8] sm:$0xff]
  %v30 = vld [vmem:[%s0 + $0xb0] sm:$0xff]
  %v31 = vld [vmem:[%s0 + $0xb8] sm:$0xff]
  %v32 = vld [vmem:[%s0 + $0xc0] sm:$0xff]
  %v33 = vld [vmem:[%s0 + $0xc8] sm:$0xff]
  %v34 = vld [vmem:[%s0 + $0xd0] sm:$0xff]
  %v35 = vld [vmem:[%s0 + $0xd8] sm:$0xff]
  %v36 = vld [vmem:[%s0 + $0xe0] sm:$0xff]
  %v37 = vld [vmem:[%s0 + $0xe8] sm:$0xff]
  %v38 = vld [vmem:[%s0 + $0xf0] sm:$0xff]
  %v39 = vld [vmem:[%s0 + $0xf8] sm:$0xff]
  %v40 = vld [vmem:[%s0 + $0x100] sm:$0xff]
  %v41 = vld [vmem:[%s0 + $0x108] sm:$0xff]
  %v42 = vld [vmem:[%s0 + $0x110] sm:$0xff]
  %v43 = vld [vmem:[%s0 + $0x118] sm:$0xff]
  %v44 = vld [vmem:[%s0 + $0x120] sm:$0xff]
  %v45 = vld [vmem:[%s0 + $0x128] sm:$0xff]
  %v46 = vld [vmem:[%s0 + $0x130] sm:$0xff]
  %v47 = vld [vmem:[%s0 + $0x138] sm:$0xff]
  %v48 = vld [vmem:[%s0 + $0x140] sm:$0xff]
  %v49 = vld [vmem:[%s0 + $0x148] sm:$0xff]
  %v50 = vld [vmem:[%s0 + $0x150] sm:$0xff]
  %v51 = vld [vmem:[%s0 + $0x158] sm:$0xff]
  %v52 = vld [vmem:[%s0 + $0x160] sm:$0xff]
  %v53 = vld [vmem:[%s0 + $0x168] sm:$0xff]
  %v54 = vld [vmem:[%s0 + $0x170] sm:$0xff]
  %v55 = vld [vmem:[%s0 + $0x178] sm:$0xff]
  %v56 = vld [vmem:[%s0 + $0x180] sm:$0xff]
  %v57 = vld [vmem:[%s0 + $0x188] sm:$0xff]
  %v58 = vld [vmem:[%s0 + $0x190] sm:$0xff]
  %v59 = vld [vmem:[%s0 + $0x198] sm:$0xff]
  %v60 = vld [vmem:[%s0 + $0x1a0] sm:$0xff]
  %v61 = vld [vmem:[%s0 + $0x1a8] sm:$0xff]
  %v62 = vld [vmem:[%s0 + $0x1b0] sm:$0xff]
  %v63 = vld [vmem:[%s0 + $0x1b8] sm:$0xff]
  %v64 = vld [vmem:[%s0 + $0x1c0] sm:$0xff]
  %v65 = vld [vmem:[%s0 + $0x1c8] sm:$0xff]
  %v66 = vld [vmem:[%s0 + $0x1d0] sm:$0xff]
  %v67 = vld [vmem:[%s0 + $0x1d8] sm:$0xff]
  %v68 = vld [vmem:[%s0 + $0x1e0] sm:$0xff]
  %v69 = vld [vmem:[%s0 + $0x1e8] sm:$0xff]
  %v70 = vld [vmem:[%s0 + $0x1f0] sm:$0xff]
  %v71 = vld [vmem:[%s0 + $0x1f8] sm:$0xff]
  %v72 = vld [vmem:[%s0 + $0x200] sm:$0xff]
  %v73 = vld [vmem:[%s0 + $0x208] sm:$0xff]
  %v74 = vld [vmem:[%s0 + $0x210] sm:$0xff]
  %v75 = vld [vmem:[%s0 + $0x218] sm:$0xff]
  %v76 = vld [vmem:[%s0 + $0x220] sm:$0xff]
  %v77 = vld [vmem:[%s0 + $0x228] sm:$0xff]
  %v78 = vld [vmem:[%s0 + $0x230] sm:$0xff]
  %v79 = vld [vmem:[%s0 + $0x238] sm:$0xff]
  %v80 = vld [vmem:[%s0 + $0x240] sm:$0xff]
  %v81 = vld [vmem:[%s0 + $0x248] sm:$0xff]
  %v82 = vld [vmem:[%s0 + $0x250] sm:$0xff]
  %v83 = vld [vmem:[%s0 + $0x258] sm:$0xff]
  %v84 = vld [vmem:[%s0 + $0x260] sm:$0xff]
  %v85 = vld [vmem:[%s0 + $0x268] sm:$0xff]
  %v86 = vld [vmem:[%s0 + $0x270] sm:$0xff]
  %v87 = vld [vmem:[%s0 + $0x278] sm:$0xff]
  %v88 = vld [vmem:[%s0 + $0x280] sm:$0xff]
  %v89 = vld [vmem:[%s0 + $0x288] sm:$0xff]
  %v90 = vld [vmem:[%s0 + $0x290] sm:$0xff]
  %v91 = vld [vmem:[%s0 + $0x298] sm:$0xff]
  %v92 = vld [vmem:[%s0 + $0x2a0] sm:$0xff]
  %v93 = vld [vmem:[%s0 + $0x2a8] sm:$0xff]
  %v94 = vld [vmem:[%s0 + $0x2b0] sm:$0xff]
  %v95 = vld [vmem:[%s0 + $0x2b8] sm:$0xff]
  %v96 = vld [vmem:[%s0 + $0x2c0] sm:$0xff]
  %v97 = vld [vmem:[%s0 + $0x2c8] sm:$0xff]
  %v98 = vld [vmem:[%s0 + $0x2d0] sm:$0xff]
  %v99 = vld [vmem:[%s0 + $0x2d8] sm:$0xff]
  %v100 = vld [vmem:[%s0 + $0x2e0] sm:$0xff]
  %v101 = vld [vmem:[%s0 + $0x2e8] sm:$0xff]
  %v102 = vld [vmem:[%s0 + $0x2f0] sm:$0xff]
  %v103 = vld [vmem:[%s0 + $0x2f8] sm:$0xff]
  %v104 = vld [vmem:[%s0 + $0x300] sm:$0xff]
  %v105 = vld [vmem:[%s0 + $0x308] sm:$0xff]
  %v106 = vld [vmem:[%s0 + $0x310] sm:$0xff]
  %v107 = vld [vmem:[%s0 + $0x318] sm:$0xff]
  %v108 = vld [vmem:[%s0 + $0x320] sm:$0xff]
  %v109 = vld [vmem:[%s0 + $0x328] sm:$0xff]
  %v110 = vld [vmem:[%s0 + $0x330] sm:$0xff]
  %v111 = vld [vmem:[%s0 + $0x338] sm:$0xff]
  %v112 = vld [vmem:[%s0 + $0x340] sm:$0xff]
  %v113 = vld [vmem:[%s0 + $0x348] sm:$0xff]
  %v114 = vld [vmem:[%s0 + $0x350] sm:$0xff]
  %v115 = vld [vmem:[%s0 + $0x358] sm:$0xff]
  %v116 = vld [vmem:[%s0 + $0x360] sm:$0xff]
  %v117 = vld [vmem:[%s0 + $0x368] sm:$0xff]
  %v118 = vld [vmem:[%s0 + $0x370] sm:$0xff]
  %v119 = vld [vmem:[%s0 + $0x378] sm:$0xff]
  %v120 = vld [vmem:[%s0 + $0x380] sm:$0xff]
  %v121 = vld [vmem:[%s0 + $0x388] sm:$0xff]
  %v122 = vld [vmem:[%s0 + $0x390] sm:$0xff]
  %v123 = vld [vmem:[%s0 + $0x398] sm:$0xff]
  %v124 = vld [vmem:[%s0 + $0x3a0] sm:$0xff]
  %v125 = vld [vmem:[%s0 + $0x3a8] sm:$0xff]
  %v126 = vld [vmem:[%s0 + $0x3b0] sm:$0xff]
  %v127 = vld [vmem:[%s0 + $0x3b8] sm:$0xff]
  %v128 = vld [vmem:[%s0 + $0x3c0] sm:$0xff]
  %v129 = vld [vmem:[%s0 + $0x3c8] sm:$0xff]
  %v130 = vld [vmem:[%s0 + $0x3d0] sm:$0xff]
  %v131 = vld [vmem:[%s0 + $0x3d8] sm:$0xff]
  %v132 = vld [vmem:[%s0 + $0x3e0] sm:$0xff]
  %v133 = vld [vmem:[%s0 + $0x3e8] sm:$0xff]
  %v134 = vld [vmem:[%s0 + $0x3f0] sm:$0xff]
  %v135 = vld [vmem:[%s0 + $0x3f8] sm:$0xff]
  %v136 = vld [vmem:[%s0 + $0x400] sm:$0xff]
  %v137 = vld [vmem:[%s0 + $0x408] sm:$0xff]
  %v138 = vld [vmem:[%s0 + $0x410] sm:$0xff]
  %v139 = vld [vmem:[%s0 + $0x418] sm:$0xff]
  %v140 = vld [vmem:[%s0 + $0x420] sm:$0xff]
  %v141 = vld [vmem:[%s0 + $0x428] sm:$0xff]
  %v142 = vld [vmem:[%s0 + $0x430] sm:$0xff]
  %v143 = vld [vmem:[%s0 + $0x438] sm:$0xff]
  %v144 = vld [vmem:[%s0 + $0x440] sm:$0xff]
  %v145 = vld [vmem:[%s0 + $0x448] sm:$0xff]
  %v146 = vld [vmem:[%s0 + $0x450] sm:$0xff]
  %v147 = vld [vmem:[%s0 + $0x458] sm:$0xff]
  %v148 = vld [vmem:[%s0 + $0x460] sm:$0xff]
  %v149 = vld [vmem:[%s0 + $0x468] sm:$0xff]
  %v150 = vld [vmem:[%s0 + $0x470] sm:$0xff]
  %v151 = vld [vmem:[%s0 + $0x478] sm:$0xff]
  %v152 = vld [vmem:[%s0 + $0x480] sm:$0xff]
  %v153 = vld [vmem:[%s0 + $0x488] sm:$0xff]
  %v154 = vld [vmem:[%s0 + $0x490] sm:$0xff]
  %v155 = vld [vmem:[%s0 + $0x498] sm:$0xff]
  %v156 = vld [vmem:[%s0 + $0x4a0] sm:$0xff]
  %v157 = vld [vmem:[%s0 + $0x4a8] sm:$0xff]
  %v158 = vld [vmem:[%s0 + $0x4b0] sm:$0xff]
  %v159 = vld [vmem:[%s0 + $0x4b8] sm:$0xff]
  %v160 = vld [vmem:[%s0 + $0x4c0] sm:$0xff]
  %v161 = vld [vmem:[%s0 + $0x4c8] sm:$0xff]
  %v162 = vld [vmem:[%s0 + $0x4d0] sm:$0xff]
  %v163 = vld [vmem:[%s0 + $0x4d8] sm:$0xff]
  %v164 = vld [vmem:[%s0 + $0x4e0] sm:$0xff]
  %v165 = vld [vmem:[%s0 + $0x4e8] sm:$0xff]
  %v166 = vld [vmem:[%s0 + $0x4f0] sm:$0xff]
  %v167 = vld [vmem:[%s0 + $0x4f8] sm:$0xff]
  %v168 = vld [vmem:[%s0 + $0x500] sm:$0xff]
  %v169 = vld [vmem:[%s0 + $0x508] sm:$0xff]
  %v170 = vld [vmem:[%s0 + $0x510] sm:$0xff]
  %v171 = vld [vmem:[%s0 + $0x518] sm:$0xff]
  %v172 = vld [vmem:[%s0 + $0x520] sm:$0xff]
  %v173 = vld [vmem:[%s0 + $0x528] sm:$0xff]
  %v174 = vld [vmem:[%s0 + $0x530] sm:$0xff]
  %v175 = vld [vmem:[%s0 + $0x538] sm:$0xff]
  %v176 = vld [vmem:[%s0 + $0x540] sm:$0xff]
  %v177 = vld [vmem:[%s0 + $0x548] sm:$0xff]
  %v178 = vld [vmem:[%s0 + $0x550] sm:$0xff]
  %v179 = vld [vmem:[%s0 + $0x558] sm:$0xff]
  %v180 = vld [vmem:[%s0 + $0x560] sm:$0xff]
  %v181 = vld [vmem:[%s0 + $0x568] sm:$0xff]
  %v182 = vld [vmem:[%s0 + $0x570] sm:$0xff]
  %v183 = vld [vmem:[%s0 + $0x578] sm:$0xff]
  %v184 = vld [vmem:[%s0 + $0x580] sm:$0xff]
  %v185 = vld [vmem:[%s0 + $0x588] sm:$0xff]
  %v186 = vld [vmem:[%s0 + $0x590] sm:$0xff]
  %v187 = vld [vmem:[%s0 + $0x598] sm:$0xff]
  %v188 = vld [vmem:[%s0 + $0x5a0] sm:$0xff]
  %v189 = vld [vmem:[%s0 + $0x5a8] sm:$0xff]
  %v190 = vld [vmem:[%s0 + $0x5b0] sm:$0xff]
  %v191 = vld [vmem:[%s0 + $0x5b8] sm:$0xff]
  %v192 = vld [vmem:[%s0 + $0x5c0] sm:$0xff]
  %v193 = vld [vmem:[%s0 + $0x5c8] sm:$0xff]
  %v194 = vld [vmem:[%s0 + $0x5d0] sm:$0xff]
  %v195 = vld [vmem:[%s0 + $0x5d8] sm:$0xff]
  %v196 = vld [vmem:[%s0 + $0x5e0] sm:$0xff]
  %v197 = vld [vmem:[%s0 + $0x5e8] sm:$0xff]
  %v198 = vld [vmem:[%s0 + $0x5f0] sm:$0xff]
  %v199 = vld [vmem:[%s0 + $0x5f8] sm:$0xff]
  %v200 = vld [vmem:[%s0 + $0x600] sm:$0xff]
  %v201 = vld [vmem:[%s0 + $0x608] sm:$0xff]
  %v202 = vld [vmem:[%s0 + $0x610] sm:$0xff]
  %v203 = vld [vmem:[%s0 + $0x618] sm:$0xff]
  %vm204 = vcmask 523264
  %v205 = vsel %vm204, %v8, -inf
  %v206 = vsel %vm204, %v12, -inf
  %v207 = vmax.f32 %v205, %v206
  %v208 = vsel %vm204, %v16, -inf
  %v209 = vmax.f32 %v207, %v208
  %v210 = vsel %vm204, %v20, -inf
  %v211 = vmax.f32 %v209, %v210
  %v212 = vsel %vm204, %v24, -inf
  %v213 = vmax.f32 %v211, %v212
  %v214 = vsel %vm204, %v28, -inf
  %v215 = vmax.f32 %v213, %v214
  %v216 = vsel %vm204, %v32, -inf
  %v217 = vmax.f32 %v215, %v216
  %v218 = vsel %vm204, %v36, -inf
  %v219 = vmax.f32 %v217, %v218
  %v220 = vsel %vm204, %v40, -inf
  %v221 = vmax.f32 %v219, %v220
  %v222 = vsel %vm204, %v44, -inf
  %v223 = vmax.f32 %v221, %v222
  %v224 = vsel %vm204, %v48, -inf
  %v225 = vmax.f32 %v223, %v224
  %v226 = vsel %vm204, %v52, -inf
  %v227 = vmax.f32 %v225, %v226
  %v228 = vsel %vm204, %v56, -inf
  %v229 = vmax.f32 %v227, %v228
  %v230 = vsel %vm204, %v60, -inf
  %v231 = vmax.f32 %v229, %v230
  %v232 = vsel %vm204, %v64, -inf
  %v233 = vmax.f32 %v231, %v232
  %v234 = vsel %vm204, %v68, -inf
  %v235 = vmax.f32 %v233, %v234
  %v236 = vsel %vm204, %v72, -inf
  %v237 = vmax.f32 %v235, %v236
  %v238 = vsel %vm204, %v76, -inf
  %v239 = vmax.f32 %v237, %v238
  %v240 = vsel %vm204, %v80, -inf
  %v241 = vmax.f32 %v239, %v240
  %v242 = vsel %vm204, %v84, -inf
  %v243 = vmax.f32 %v241, %v242
  %v244 = vsel %vm204, %v88, -inf
  %v245 = vmax.f32 %v243, %v244
  %v246 = vsel %vm204, %v92, -inf
  %v247 = vmax.f32 %v245, %v246
  %v248 = vsel %vm204, %v96, -inf
  %v249 = vmax.f32 %v247, %v248
  %v250 = vsel %vm204, %v100, -inf
  %v251 = vmax.f32 %v249, %v250
  %v252 = vsel %vm204, %v104, -inf
  %v253 = vmax.f32 %v251, %v252
  %v254 = vsel %vm204, %v108, -inf
  %v255 = vmax.f32 %v253, %v254
  %v256 = vsel %vm204, %v112, -inf
  %v257 = vmax.f32 %v255, %v256
  %v258 = vsel %vm204, %v116, -inf
  %v259 = vmax.f32 %v257, %v258
  %v260 = vsel %vm204, %v120, -inf
  %v261 = vmax.f32 %v259, %v260
  %v262 = vsel %vm204, %v124, -inf
  %v263 = vmax.f32 %v261, %v262
  %v264 = vsel %vm204, %v128, -inf
  %v265 = vmax.f32 %v263, %v264
  %v266 = vsel %vm204, %v132, -inf
  %v267 = vmax.f32 %v265, %v266
  %v268 = vsel %vm204, %v136, -inf
  %v269 = vmax.f32 %v267, %v268
  %v270 = vsel %vm204, %v140, -inf
  %v271 = vmax.f32 %v269, %v270
  %v272 = vsel %vm204, %v144, -inf
  %v273 = vmax.f32 %v271, %v272
  %v274 = vsel %vm204, %v148, -inf
  %v275 = vmax.f32 %v273, %v274
  %v276 = vsel %vm204, %v152, -inf
  %v277 = vmax.f32 %v275, %v276
  %v278 = vsel %vm204, %v156, -inf
  %v279 = vmax.f32 %v277, %v278
  %v280 = vsel %vm204, %v160, -inf
  %v281 = vmax.f32 %v279, %v280
  %v282 = vsel %vm204, %v164, -inf
  %v283 = vmax.f32 %v281, %v282
  %v284 = vsel %vm204, %v168, -inf
  %v285 = vmax.f32 %v283, %v284
  %v286 = vsel %vm204, %v172, -inf
  %v287 = vmax.f32 %v285, %v286
  %v288 = vsel %vm204, %v176, -inf
  %v289 = vmax.f32 %v287, %v288
  %v290 = vsel %vm204, %v180, -inf
  %v291 = vmax.f32 %v289, %v290
  %v292 = vsel %vm204, %v184, -inf
  %v293 = vmax.f32 %v291, %v292
  %v294 = vsel %vm204, %v188, -inf
  %v295 = vmax.f32 %v293, %v294
  %v296 = vsel %vm204, %v192, -inf
  %v297 = vmax.f32 %v295, %v296
  %v298 = vsel %vm204, %v196, -inf
  %v299 = vmax.f32 %v297, %v298
  %v300 = vsel %vm204, %v200, -inf
  %v301 = vmax.f32 %v299, %v300
  %v302 = vsel %vm204, %v9, -inf
  %v303 = vsel %vm204, %v13, -inf
  %v304 = vmax.f32 %v302, %v303
  %v305 = vsel %vm204, %v17, -inf
  %v306 = vmax.f32 %v304, %v305
  %v307 = vsel %vm204, %v21, -inf
  %v308 = vmax.f32 %v306, %v307
  %v309 = vsel %vm204, %v25, -inf
  %v310 = vmax.f32 %v308, %v309
  %v311 = vsel %vm204, %v29, -inf
  %v312 = vmax.f32 %v310, %v311
  %v313 = vsel %vm204, %v33, -inf
  %v314 = vmax.f32 %v312, %v313
  %v315 = vsel %vm204, %v37, -inf
  %v316 = vmax.f32 %v314, %v315
  %v317 = vsel %vm204, %v41, -inf
  %v318 = vmax.f32 %v316, %v317
  %v319 = vsel %vm204, %v45, -inf
  %v320 = vmax.f32 %v318, %v319
  %v321 = vsel %vm204, %v49, -inf
  %v322 = vmax.f32 %v320, %v321
  %v323 = vsel %vm204, %v53, -inf
  %v324 = vmax.f32 %v322, %v323
  %v325 = vsel %vm204, %v57, -inf
  %v326 = vmax.f32 %v324, %v325
  %v327 = vsel %vm204, %v61, -inf
  %v328 = vmax.f32 %v326, %v327
  %v329 = vsel %vm204, %v65, -inf
  %v330 = vmax.f32 %v328, %v329
  %v331 = vsel %vm204, %v69, -inf
  %v332 = vmax.f32 %v330, %v331
  %v333 = vsel %vm204, %v73, -inf
  %v334 = vmax.f32 %v332, %v333
  %v335 = vsel %vm204, %v77, -inf
  %v336 = vmax.f32 %v334, %v335
  %v337 = vsel %vm204, %v81, -inf
  %v338 = vmax.f32 %v336, %v337
  %v339 = vsel %vm204, %v85, -inf
  %v340 = vmax.f32 %v338, %v339
  %v341 = vsel %vm204, %v89, -inf
  %v342 = vmax.f32 %v340, %v341
  %v343 = vsel %vm204, %v93, -inf
  %v344 = vmax.f32 %v342, %v343
  %v345 = vsel %vm204, %v97, -inf
  %v346 = vmax.f32 %v344, %v345
  %v347 = vsel %vm204, %v101, -inf
  %v348 = vmax.f32 %v346, %v347
  %v349 = vsel %vm204, %v105, -inf
  %v350 = vmax.f32 %v348, %v349
  %v351 = vsel %vm204, %v109, -inf
  %v352 = vmax.f32 %v350, %v351
  %v353 = vsel %vm204, %v113, -inf
  %v354 = vmax.f32 %v352, %v353
  %v355 = vsel %vm204, %v117, -inf
  %v356 = vmax.f32 %v354, %v355
  %v357 = vsel %vm204, %v121, -inf
  %v358 = vmax.f32 %v356, %v357
  %v359 = vsel %vm204, %v125, -inf
  %v360 = vmax.f32 %v358, %v359
  %v361 = vsel %vm204, %v129, -inf
  %v362 = vmax.f32 %v360, %v361
  %v363 = vsel %vm204, %v133, -inf
  %v364 = vmax.f32 %v362, %v363
  %v365 = vsel %vm204, %v137, -inf
  %v366 = vmax.f32 %v364, %v365
  %v367 = vsel %vm204, %v141, -inf
  %v368 = vmax.f32 %v366, %v367
  %v369 = vsel %vm204, %v145, -inf
  %v370 = vmax.f32 %v368, %v369
  %v371 = vsel %vm204, %v149, -inf
  %v372 = vmax.f32 %v370, %v371
  %v373 = vsel %vm204, %v153, -inf
  %v374 = vmax.f32 %v372, %v373
  %v375 = vsel %vm204, %v157, -inf
  %v376 = vmax.f32 %v374, %v375
  %v377 = vsel %vm204, %v161, -inf
  %v378 = vmax.f32 %v376, %v377
  %v379 = vsel %vm204, %v165, -inf
  %v380 = vmax.f32 %v378, %v379
  %v381 = vsel %vm204, %v169, -inf
  %v382 = vmax.f32 %v380, %v381
  %v383 = vsel %vm204, %v173, -inf
  %v384 = vmax.f32 %v382, %v383
  %v385 = vsel %vm204, %v177, -inf
  %v386 = vmax.f32 %v384, %v385
  %v387 = vsel %vm204, %v181, -inf
  %v388 = vmax.f32 %v386, %v387
  %v389 = vsel %vm204, %v185, -inf
  %v390 = vmax.f32 %v388, %v389
  %v391 = vsel %vm204, %v189, -inf
  %v392 = vmax.f32 %v390, %v391
  %v393 = vsel %vm204, %v193, -inf
  %v394 = vmax.f32 %v392, %v393
  %v395 = vsel %vm204, %v197, -inf
  %v396 = vmax.f32 %v394, %v395
  %v397 = vsel %vm204, %v201, -inf
  %v398 = vmax.f32 %v396, %v397
  %v399 = vsel %vm204, %v10, -inf
  %v400 = vsel %vm204, %v14, -inf
  %v401 = vmax.f32 %v399, %v400
  %v402 = vsel %vm204, %v18, -inf
  %v403 = vmax.f32 %v401, %v402
  %v404 = vsel %vm204, %v22, -inf
  %v405 = vmax.f32 %v403, %v404
  %v406 = vsel %vm204, %v26, -inf
  %v407 = vmax.f32 %v405, %v406
  %v408 = vsel %vm204, %v30, -inf
  %v409 = vmax.f32 %v407, %v408
  %v410 = vsel %vm204, %v34, -inf
  %v411 = vmax.f32 %v409, %v410
  %v412 = vsel %vm204, %v38, -inf
  %v413 = vmax.f32 %v411, %v412
  %v414 = vsel %vm204, %v42, -inf
  %v415 = vmax.f32 %v413, %v414
  %v416 = vsel %vm204, %v46, -inf
  %v417 = vmax.f32 %v415, %v416
  %v418 = vsel %vm204, %v50, -inf
  %v419 = vmax.f32 %v417, %v418
  %v420 = vsel %vm204, %v54, -inf
  %v421 = vmax.f32 %v419, %v420
  %v422 = vsel %vm204, %v58, -inf
  %v423 = vmax.f32 %v421, %v422
  %v424 = vsel %vm204, %v62, -inf
  %v425 = vmax.f32 %v423, %v424
  %v426 = vsel %vm204, %v66, -inf
  %v427 = vmax.f32 %v425, %v426
  %v428 = vsel %vm204, %v70, -inf
  %v429 = vmax.f32 %v427, %v428
  %v430 = vsel %vm204, %v74, -inf
  %v431 = vmax.f32 %v429, %v430
  %v432 = vsel %vm204, %v78, -inf
  %v433 = vmax.f32 %v431, %v432
  %v434 = vsel %vm204, %v82, -inf
  %v435 = vmax.f32 %v433, %v434
  %v436 = vsel %vm204, %v86, -inf
  %v437 = vmax.f32 %v435, %v436
  %v438 = vsel %vm204, %v90, -inf
  %v439 = vmax.f32 %v437, %v438
  %v440 = vsel %vm204, %v94, -inf
  %v441 = vmax.f32 %v439, %v440
  %v442 = vsel %vm204, %v98, -inf
  %v443 = vmax.f32 %v441, %v442
  %v444 = vsel %vm204, %v102, -inf
  %v445 = vmax.f32 %v443, %v444
  %v446 = vsel %vm204, %v106, -inf
  %v447 = vmax.f32 %v445, %v446
  %v448 = vsel %vm204, %v110, -inf
  %v449 = vmax.f32 %v447, %v448
  %v450 = vsel %vm204, %v114, -inf
  %v451 = vmax.f32 %v449, %v450
  %v452 = vsel %vm204, %v118, -inf
  %v453 = vmax.f32 %v451, %v452
  %v454 = vsel %vm204, %v122, -inf
  %v455 = vmax.f32 %v453, %v454
  %v456 = vsel %vm204, %v126, -inf
  %v457 = vmax.f32 %v455, %v456
  %v458 = vsel %vm204, %v130, -inf
  %v459 = vmax.f32 %v457, %v458
  %v460 = vsel %vm204, %v134, -inf
  %v461 = vmax.f32 %v459, %v460
  %v462 = vsel %vm204, %v138, -inf
  %v463 = vmax.f32 %v461, %v462
  %v464 = vsel %vm204, %v142, -inf
  %v465 = vmax.f32 %v463, %v464
  %v466 = vsel %vm204, %v146, -inf
  %v467 = vmax.f32 %v465, %v466
  %v468 = vsel %vm204, %v150, -inf
  %v469 = vmax.f32 %v467, %v468
  %v470 = vsel %vm204, %v154, -inf
  %v471 = vmax.f32 %v469, %v470
  %v472 = vsel %vm204, %v158, -inf
  %v473 = vmax.f32 %v471, %v472
  %v474 = vsel %vm204, %v162, -inf
  %v475 = vmax.f32 %v473, %v474
  %v476 = vsel %vm204, %v166, -inf
  %v477 = vmax.f32 %v475, %v476
  %v478 = vsel %vm204, %v170, -inf
  %v479 = vmax.f32 %v477, %v478
  %v480 = vsel %vm204, %v174, -inf
  %v481 = vmax.f32 %v479, %v480
  %v482 = vsel %vm204, %v178, -inf
  %v483 = vmax.f32 %v481, %v482
  %v484 = vsel %vm204, %v182, -inf
  %v485 = vmax.f32 %v483, %v484
  %v486 = vsel %vm204, %v186, -inf
  %v487 = vmax.f32 %v485, %v486
  %v488 = vsel %vm204, %v190, -inf
  %v489 = vmax.f32 %v487, %v488
  %v490 = vsel %vm204, %v194, -inf
  %v491 = vmax.f32 %v489, %v490
  %v492 = vsel %vm204, %v198, -inf
  %v493 = vmax.f32 %v491, %v492
  %v494 = vsel %vm204, %v202, -inf
  %v495 = vmax.f32 %v493, %v494
  %v496 = vsel %vm204, %v11, -inf
  %v497 = vsel %vm204, %v15, -inf
  %v498 = vmax.f32 %v496, %v497
  %v499 = vsel %vm204, %v19, -inf
  %v500 = vmax.f32 %v498, %v499
  %v501 = vsel %vm204, %v23, -inf
  %v502 = vmax.f32 %v500, %v501
  %v503 = vsel %vm204, %v27, -inf
  %v504 = vmax.f32 %v502, %v503
  %v505 = vsel %vm204, %v31, -inf
  %v506 = vmax.f32 %v504, %v505
  %v507 = vsel %vm204, %v35, -inf
  %v508 = vmax.f32 %v506, %v507
  %v509 = vsel %vm204, %v39, -inf
  %v510 = vmax.f32 %v508, %v509
  %v511 = vsel %vm204, %v43, -inf
  %v512 = vmax.f32 %v510, %v511
  %v513 = vsel %vm204, %v47, -inf
  %v514 = vmax.f32 %v512, %v513
  %v515 = vsel %vm204, %v51, -inf
  %v516 = vmax.f32 %v514, %v515
  %v517 = vsel %vm204, %v55, -inf
  %v518 = vmax.f32 %v516, %v517
  %v519 = vsel %vm204, %v59, -inf
  %v520 = vmax.f32 %v518, %v519
  %v521 = vsel %vm204, %v63, -inf
  %v522 = vmax.f32 %v520, %v521
  %v523 = vsel %vm204, %v67, -inf
  %v524 = vmax.f32 %v522, %v523
  %v525 = vsel %vm204, %v71, -inf
  %v526 = vmax.f32 %v524, %v525
  %v527 = vsel %vm204, %v75, -inf
  %v528 = vmax.f32 %v526, %v527
  %v529 = vsel %vm204, %v79, -inf
  %v530 = vmax.f32 %v528, %v529
  %v531 = vsel %vm204, %v83, -inf
  %v532 = vmax.f32 %v530, %v531
  %v533 = vsel %vm204, %v87, -inf
  %v534 = vmax.f32 %v532, %v533
  %v535 = vsel %vm204, %v91, -inf
  %v536 = vmax.f32 %v534, %v535
  %v537 = vsel %vm204, %v95, -inf
  %v538 = vmax.f32 %v536, %v537
  %v539 = vsel %vm204, %v99, -inf
  %v540 = vmax.f32 %v538, %v539
  %v541 = vsel %vm204, %v103, -inf
  %v542 = vmax.f32 %v540, %v541
  %v543 = vsel %vm204, %v107, -inf
  %v544 = vmax.f32 %v542, %v543
  %v545 = vsel %vm204, %v111, -inf
  %v546 = vmax.f32 %v544, %v545
  %v547 = vsel %vm204, %v115, -inf
  %v548 = vmax.f32 %v546, %v547
  %v549 = vsel %vm204, %v119, -inf
  %v550 = vmax.f32 %v548, %v549
  %v551 = vsel %vm204, %v123, -inf
  %v552 = vmax.f32 %v550, %v551
  %v553 = vsel %vm204, %v127, -inf
  %v554 = vmax.f32 %v552, %v553
  %v555 = vsel %vm204, %v131, -inf
  %v556 = vmax.f32 %v554, %v555
  %v557 = vsel %vm204, %v135, -inf
  %v558 = vmax.f32 %v556, %v557
  %v559 = vsel %vm204, %v139, -inf
  %v560 = vmax.f32 %v558, %v559
  %v561 = vsel %vm204, %v143, -inf
  %v562 = vmax.f32 %v560, %v561
  %v563 = vsel %vm204, %v147, -inf
  %v564 = vmax.f32 %v562, %v563
  %v565 = vsel %vm204, %v151, -inf
  %v566 = vmax.f32 %v564, %v565
  %v567 = vsel %vm204, %v155, -inf
  %v568 = vmax.f32 %v566, %v567
  %v569 = vsel %vm204, %v159, -inf
  %v570 = vmax.f32 %v568, %v569
  %v571 = vsel %vm204, %v163, -inf
  %v572 = vmax.f32 %v570, %v571
  %v573 = vsel %vm204, %v167, -inf
  %v574 = vmax.f32 %v572, %v573
  %v575 = vsel %vm204, %v171, -inf
  %v576 = vmax.f32 %v574, %v575
  %v577 = vsel %vm204, %v175, -inf
  %v578 = vmax.f32 %v576, %v577
  %v579 = vsel %vm204, %v179, -inf
  %v580 = vmax.f32 %v578, %v579
  %v581 = vsel %vm204, %v183, -inf
  %v582 = vmax.f32 %v580, %v581
  %v583 = vsel %vm204, %v187, -inf
  %v584 = vmax.f32 %v582, %v583
  %v585 = vsel %vm204, %v191, -inf
  %v586 = vmax.f32 %v584, %v585
  %v587 = vsel %vm204, %v195, -inf
  %v588 = vmax.f32 %v586, %v587
  %v589 = vsel %vm204, %v199, -inf
  %v590 = vmax.f32 %v588, %v589
  %v591 = vsel %vm204, %v203, -inf
  %v592 = vmax.f32 %v590, %v591
  %593 = vst.msk [vmem:[%s1] sm:$0xff] %vm204, %v301
  %594 = vst.msk [vmem:[%s1 + $0x8] sm:$0xff] %vm204, %v398
  %595 = vst.msk [vmem:[%s1 + $0x10] sm:$0xff] %vm204, %v495
  %596 = vst.msk [vmem:[%s1 + $0x18] sm:$0xff] %vm204, %v592
  // Predicated region
  $region6: #{evo_encoder_forward.15} parent=0 // pred_check
    _
  $region7: #{evo_encoder_forward.15} parent=0 // pred_check_branch
    %598 = sbr.rel (0) target = $region9
  $region8: #{evo_encoder_forward.15} parent=0 // pred_region
    _
  $region9: #{evo_encoder_forward.15} parent=0 // pred_fallthru
    _
  // Predicated region
  $region10: #{evo_encoder_forward.15} parent=0 // pred_check
    _
  $region11: #{evo_encoder_forward.15} parent=0 // pred_check_branch
    %600 = sbr.rel (0) target = $region13
  $region12: #{evo_encoder_forward.15} parent=0 // pred_region
    _
  $region13: #{evo_encoder_forward.15} parent=0 // pred_fallthru
    _

// kernel: evo_encoder_forward.19
$region0: #{evo_encoder_forward.19}
  #allocation0 [shape = 'u32[]', space=smem, size = 0x4, offset = 0x4, fixed_abs, tag = 'smem constant byte address 0x4 - core index']
  #allocation1 [shape = 'u32[144,128]{1,0:T(1,128)}', space=vmem, size = 0x12000, scoped, tag = 'internal scratch']
  %s0 = inlined_call_operand.vmem [shape: f32[32,64], index: 0, kind: input, shape index: {}]
  %s1 = inlined_call_operand.vmem [shape: f32[64,256], index: 1, kind: input, shape index: {}]
  %s2 = inlined_call_operand.vmem [shape: f32[1,256], index: 2, kind: input, shape index: {}]
  %s3 = inlined_call_operand.vmem [shape: f32[1,256], index: 3, kind: input, shape index: {}]
  %s4 = inlined_call_operand.vmem [shape: f32[32,256], index: 4, kind: output, shape index: {}]
  %s5 = sld [smem:[#allocation0]]
  $region26: #{evo_encoder_forward.19} parent=0
    _
  %s7 = ssub.s32 1, %s5
  %s8 = scalar_select 0, %s7, %s5
  // Predicated region
  $region2: #{evo_encoder_forward.19} parent=0 // pred_check
    _
  $region3: #{evo_encoder_forward.19} parent=0 // pred_check_branch
    %10 = sbr.rel (0) target = $region5
  $region4: #{evo_encoder_forward.19} parent=0 // pred_region
    _
  $region5: #{evo_encoder_forward.19} parent=0 // pred_fallthru
    _
  // Predicated region
  $region6: #{evo_encoder_forward.19} parent=0 // pred_check
    _
  $region7: #{evo_encoder_forward.19} parent=0 // pred_check_branch
    %12 = sbr.rel (0) target = $region9
  $region8: #{evo_encoder_forward.19} parent=0 // pred_region
    _
  $region9: #{evo_encoder_forward.19} parent=0 // pred_fallthru
    _
  // Predicated region
  $region10: #{evo_encoder_forward.19} parent=0 // pred_check
    _
  $region11: #{evo_encoder_forward.19} parent=0 // pred_check_branch
    %14 = sbr.rel (0) target = $region13
  $region12: #{evo_encoder_forward.19} parent=0 // pred_region
    _
  $region13: #{evo_encoder_forward.19} parent=0 // pred_fallthru
    _
  // Predicated region
  $region14: #{evo_encoder_forward.19} parent=0 // pred_check
    _
  $region15: #{evo_encoder_forward.19} parent=0 // pred_check_branch
    %16 = sbr.rel (0) target = $region17
  $region16: #{evo_encoder_forward.19} parent=0 // pred_region
    _
  $region17: #{evo_encoder_forward.19} parent=0 // pred_fallthru
    _
  %v17 = vld [vmem:[%s0] sm:$0xff]
  %v18 = vld [vmem:[%s0 + $0x8] sm:$0xff]
  %v19 = vld [vmem:[%s0 + $0x10] sm:$0xff]
  %v20 = vld [vmem:[%s0 + $0x18] sm:$0xff]
  %v21 = vld [vmem:[%s1] sm:$0xff]
  %v22 = vld [vmem:[%s1 + $0x8] sm:$0xff]
  %v23 = vld [vmem:[%s1 + $0x10] sm:$0xff]
  %v24 = vld [vmem:[%s1 + $0x18] sm:$0xff]
  %v25 = vld [vmem:[%s1 + $0x20] sm:$0xff]
  %v26 = vld [vmem:[%s1 + $0x28] sm:$0xff]
  %v27 = vld [vmem:[%s1 + $0x30] sm:$0xff]
  %v28 = vld [vmem:[%s1 + $0x38] sm:$0xff]
  %v29 = vld [vmem:[%s1 + $0x40] sm:$0xff]
  %v30 = vld [vmem:[%s1 + $0x48] sm:$0xff]
  %v31 = vld [vmem:[%s1 + $0x50] sm:$0xff]
  %v32 = vld [vmem:[%s1 + $0x58] sm:$0xff]
  %v33 = vld [vmem:[%s1 + $0x60] sm:$0xff]
  %v34 = vld [vmem:[%s1 + $0x68] sm:$0xff]
  %v35 = vld [vmem:[%s1 + $0x70] sm:$0xff]
  %v36 = vld [vmem:[%s1 + $0x78] sm:$0xff]
  %vm37 = vcmask 523264
  %v39 = vsel %vm37, %v17, 0
  %v42 = vsel %vm37, %v18, 0
  %v45 = vsel %vm37, %v19, 0
  %v48 = vsel %vm37, %v20, 0
  %50 = vmatprep.subr.mxu0 %v22
  %51 = vmatpush1.msra.mxu0 %v21
  %52 = vmatprep.subr.mxu0 %v24
  %53 = vmatpush1.msra.mxu0 %v23
  %54 = vmatprep.subr.mxu0 %v26
  %55 = vmatpush1.msra.mxu0 %v25
  %56 = vmatprep.subr.mxu0 %v28
  %57 = vmatpush1.msra.mxu0 %v27
  %58 = vmatprep.subr.mxu0 %v30
  %59 = vmatpush1.msra.mxu0 %v29
  %60 = vmatprep.subr.mxu0 %v32
  %61 = vmatpush1.msra.mxu0 %v31
  %62 = vmatprep.subr.mxu0 %v34
  %63 = vmatpush1.msra.mxu0 %v33
  %64 = vmatprep.subr.mxu0 %v36
  %65 = vmatpush1.msra.mxu0 %v35
  %66 = vmatprep.subr.mxu0 0.0
  %67 = vmatpush1.msra.mxu0 0.0
  %68 = vmatprep.subr.mxu0 0.0
  %69 = vmatpush1.msra.mxu0 0.0
  %70 = vmatprep.subr.mxu0 0.0
  %71 = vmatpush1.msra.mxu0 0.0
  %72 = vmatprep.subr.mxu0 0.0
  %73 = vmatpush1.msra.mxu0 0.0
  %74 = vmatprep.subr.mxu0 0.0
  %75 = vmatpush1.msra.mxu0 0.0
  %76 = vmatprep.subr.mxu0 0.0
  %77 = vmatpush1.msra.mxu0 0.0
  %78 = vmatprep.subr.mxu0 0.0
  %79 = vmatpush1.msra.mxu0 0.0
  %80 = vmatprep.subr.mxu0 0.0
  %81 = vmatpush1.msra.mxu0 0.0
  %82 = vmatprep.subr.mxu0 0.0
  %83 = vmatpush1.msra.mxu0 0.0
  %84 = vmatprep.subr.mxu0 0.0
  %85 = vmatpush1.msra.mxu0 0.0
  %86 = vmatprep.subr.mxu0 0.0
  %87 = vmatpush1.msra.mxu0 0.0
  %88 = vmatprep.subr.mxu0 0.0
  %89 = vmatpush1.msra.mxu0 0.0
  %90 = vmatprep.subr.mxu0 0.0
  %91 = vmatpush1.msra.mxu0 0.0
  %92 = vmatprep.subr.mxu0 0.0
  %93 = vmatpush1.msra.mxu0 0.0
  %94 = vmatprep.subr.mxu0 0.0
  %95 = vmatpush1.msra.mxu0 0.0
  %96 = vmatprep.subr.mxu0 0.0
  %97 = vmatpush1.msra.mxu0 0.0
  %98 = vmatprep.subr.mxu0 0.0
  %99 = vmatpush1.msra.mxu0 0.0
  %100 = vmatprep.subr.mxu0 0.0
  %101 = vmatpush1.msra.mxu0 0.0
  %102 = vmatprep.subr.mxu0 0.0
  %103 = vmatpush1.msra.mxu0 0.0
  %104 = vmatprep.subr.mxu0 0.0
  %105 = vmatpush1.msra.mxu0 0.0
  %106 = vmatprep.subr.mxu0 0.0
  %107 = vmatpush1.msra.mxu0 0.0
  %108 = vmatprep.subr.mxu0 0.0
  %109 = vmatpush1.msra.mxu0 0.0
  %110 = vmatprep.subr.mxu0 0.0
  %111 = vmatpush1.msra.mxu0 0.0
  %112 = vmatprep.subr.mxu0 0.0
  %113 = vmatpush1.msra.mxu0 0.0
  %114 = vmatprep.mubr.f32.mxu0 0.0
  %115 = vmatmul.mubr.f32.gmra.mrb[0].mxu0 %v39
  %v116 = vpop.f32.mrb[0].mxu0
  %v117 = vadd.f32 0.0, %v116
  %v118 = vpop.f32.mrb[0].mxu0
  %v119 = vadd.f32 0.0, %v118
  %120 = vmatprep.mubr.f32.mxu0 0.0
  %121 = vmatmul.mubr.f32.gmra.mrb[0].mxu0 %v42
  %v122 = vpop.f32.mrb[0].mxu0
  %v123 = vadd.f32 0.0, %v122
  %v124 = vpop.f32.mrb[0].mxu0
  %v125 = vadd.f32 0.0, %v124
  %126 = vmatprep.mubr.f32.mxu0 0.0
  %127 = vmatmul.mubr.f32.gmra.mrb[0].mxu0 %v45
  %v128 = vpop.f32.mrb[0].mxu0
  %v129 = vadd.f32 0.0, %v128
  %v130 = vpop.f32.mrb[0].mxu0
  %v131 = vadd.f32 0.0, %v130
  %132 = vmatprep.mubr.f32.mxu0 0.0
  %133 = vmatmul.mubr.f32.gmra.mrb[0].mxu0 %v48
  %v134 = vpop.f32.mrb[0].mxu0
  %v135 = vadd.f32 0.0, %v134
  %v136 = vpop.f32.mrb[0].mxu0
  %v137 = vadd.f32 0.0, %v136
  %138 = vdwg.mxu0
  %v139 = vld [vmem:[%s2] sm:$0x3]
  %v141 = vlaneseq
  %v142 = vshrl.u32 %v141, 7
  %v143 = vsub.s32 0, %v142
  %v144 = vrot.slane %v139, %v143
  %v145 = vlaneseq
  %v146 = vshrl.u32 %v145, 7
  %v147 = vsub.s32 1, %v146
  %v148 = vrot.slane %v139, %v147
  %v151 = vmul.f32 %v117, %v144
  %v152 = vmul.f32 %v119, %v148
  %v153 = vmul.f32 %v123, %v144
  %v154 = vmul.f32 %v125, %v148
  %v155 = vmul.f32 %v129, %v144
  %v156 = vmul.f32 %v131, %v148
  %v157 = vmul.f32 %v135, %v144
  %v158 = vmul.f32 %v137, %v148
  %v159 = vld [vmem:[%s3] sm:$0x3]
  %v161 = vlaneseq
  %v162 = vshrl.u32 %v161, 7
  %v163 = vsub.s32 0, %v162
  %v164 = vrot.slane %v159, %v163
  %v165 = vlaneseq
  %v166 = vshrl.u32 %v165, 7
  %v167 = vsub.s32 1, %v166
  %v168 = vrot.slane %v159, %v167
  %v171 = vadd.f32 %v151, %v164
  %v172 = vadd.f32 %v152, %v168
  %v173 = vadd.f32 %v153, %v164
  %v174 = vadd.f32 %v154, %v168
  %v175 = vadd.f32 %v155, %v164
  %v176 = vadd.f32 %v156, %v168
  %v177 = vadd.f32 %v157, %v164
  %v178 = vadd.f32 %v158, %v168
  %179 = vst [vmem:[%s4] sm:$0xff] %v171
  %180 = vst [vmem:[%s4 + $0x8] sm:$0xff] %v172
  %181 = vst [vmem:[%s4 + $0x10] sm:$0xff] %v173
  %182 = vst [vmem:[%s4 + $0x18] sm:$0xff] %v174
  %183 = vst [vmem:[%s4 + $0x20] sm:$0xff] %v175
  %184 = vst [vmem:[%s4 + $0x28] sm:$0xff] %v176
  %185 = vst [vmem:[%s4 + $0x30] sm:$0xff] %v177
  %186 = vst [vmem:[%s4 + $0x38] sm:$0xff] %v178
  // Predicated region
  $region18: #{evo_encoder_forward.19} parent=0 // pred_check
    _
  $region19: #{evo_encoder_forward.19} parent=0 // pred_check_branch
    %188 = sbr.rel (0) target = $region21
  $region20: #{evo_encoder_forward.19} parent=0 // pred_region
    _
  $region21: #{evo_encoder_forward.19} parent=0 // pred_fallthru
    _
  // Predicated region
  $region22: #{evo_encoder_forward.19} parent=0 // pred_check
    _
  $region23: #{evo_encoder_forward.19} parent=0 // pred_check_branch
    %190 = sbr.rel (0) target = $region25
  $region24: #{evo_encoder_forward.19} parent=0 // pred_region
    _
  $region25: #{evo_encoder_forward.19} parent=0 // pred_fallthru
    _

// kernel: evo_encoder_forward.20
$region0: #{evo_encoder_forward.20}
  #allocation0 [shape = 'u32[]', space=smem, size = 0x4, offset = 0x4, fixed_abs, tag = 'smem constant byte address 0x4 - core index']
  #allocation1 [shape = 'u32[144,128]{1,0:T(1,128)}', space=vmem, size = 0x12000, scoped, tag = 'internal scratch']
  %s0 = inlined_call_operand.vmem [shape: f32[32,64], index: 0, kind: input, shape index: {}]
  %s1 = inlined_call_operand.vmem [shape: f32[64,256], index: 1, kind: input, shape index: {}]
  %s2 = inlined_call_operand.vmem [shape: f32[1,256], index: 2, kind: input, shape index: {}]
  %s3 = inlined_call_operand.vmem [shape: f32[1,256], index: 3, kind: input, shape index: {}]
  %s4 = inlined_call_operand.vmem [shape: f32[32,256], index: 4, kind: input, shape index: {}]
  %s5 = inlined_call_operand.vmem [shape: f32[32,256], index: 5, kind: output, shape index: {}]
  %s6 = sld [smem:[#allocation0]]
  $region30: #{evo_encoder_forward.20} parent=0
    _
  %s8 = ssub.s32 1, %s6
  %s9 = scalar_select 0, %s8, %s6
  // Predicated region
  $region2: #{evo_encoder_forward.20} parent=0 // pred_check
    _
  $region3: #{evo_encoder_forward.20} parent=0 // pred_check_branch
    %11 = sbr.rel (0) target = $region5
  $region4: #{evo_encoder_forward.20} parent=0 // pred_region
    _
  $region5: #{evo_encoder_forward.20} parent=0 // pred_fallthru
    _
  // Predicated region
  $region6: #{evo_encoder_forward.20} parent=0 // pred_check
    _
  $region7: #{evo_encoder_forward.20} parent=0 // pred_check_branch
    %13 = sbr.rel (0) target = $region9
  $region8: #{evo_encoder_forward.20} parent=0 // pred_region
    _
  $region9: #{evo_encoder_forward.20} parent=0 // pred_fallthru
    _
  // Predicated region
  $region10: #{evo_encoder_forward.20} parent=0 // pred_check
    _
  $region11: #{evo_encoder_forward.20} parent=0 // pred_check_branch
    %15 = sbr.rel (0) target = $region13
  $region12: #{evo_encoder_forward.20} parent=0 // pred_region
    _
  $region13: #{evo_encoder_forward.20} parent=0 // pred_fallthru
    _
  // Predicated region
  $region14: #{evo_encoder_forward.20} parent=0 // pred_check
    _
  $region15: #{evo_encoder_forward.20} parent=0 // pred_check_branch
    %17 = sbr.rel (0) target = $region17
  $region16: #{evo_encoder_forward.20} parent=0 // pred_region
    _
  $region17: #{evo_encoder_forward.20} parent=0 // pred_fallthru
    _
  // Predicated region
  $region18: #{evo_encoder_forward.20} parent=0 // pred_check
    _
  $region19: #{evo_encoder_forward.20} parent=0 // pred_check_branch
    %19 = sbr.rel (0) target = $region21
  $region20: #{evo_encoder_forward.20} parent=0 // pred_region
    _
  $region21: #{evo_encoder_forward.20} parent=0 // pred_fallthru
    _
  %v20 = vld [vmem:[%s0] sm:$0xff]
  %v21 = vld [vmem:[%s0 + $0x8] sm:$0xff]
  %v22 = vld [vmem:[%s0 + $0x10] sm:$0xff]
  %v23 = vld [vmem:[%s0 + $0x18] sm:$0xff]
  %v24 = vld [vmem:[%s1] sm:$0xff]
  %v25 = vld [vmem:[%s1 + $0x8] sm:$0xff]
  %v26 = vld [vmem:[%s1 + $0x10] sm:$0xff]
  %v27 = vld [vmem:[%s1 + $0x18] sm:$0xff]
  %v28 = vld [vmem:[%s1 + $0x20] sm:$0xff]
  %v29 = vld [vmem:[%s1 + $0x28] sm:$0xff]
  %v30 = vld [vmem:[%s1 + $0x30] sm:$0xff]
  %v31 = vld [vmem:[%s1 + $0x38] sm:$0xff]
  %v32 = vld [vmem:[%s1 + $0x40] sm:$0xff]
  %v33 = vld [vmem:[%s1 + $0x48] sm:$0xff]
  %v34 = vld [vmem:[%s1 + $0x50] sm:$0xff]
  %v35 = vld [vmem:[%s1 + $0x58] sm:$0xff]
  %v36 = vld [vmem:[%s1 + $0x60] sm:$0xff]
  %v37 = vld [vmem:[%s1 + $0x68] sm:$0xff]
  %v38 = vld [vmem:[%s1 + $0x70] sm:$0xff]
  %v39 = vld [vmem:[%s1 + $0x78] sm:$0xff]
  %vm40 = vcmask 523264
  %v42 = vsel %vm40, %v20, 0
  %v45 = vsel %vm40, %v21, 0
  %v48 = vsel %vm40, %v22, 0
  %v51 = vsel %vm40, %v23, 0
  %53 = vmatprep.subr.mxu0 %v25
  %54 = vmatpush1.msra.mxu0 %v24
  %55 = vmatprep.subr.mxu0 %v27
  %56 = vmatpush1.msra.mxu0 %v26
  %57 = vmatprep.subr.mxu0 %v29
  %58 = vmatpush1.msra.mxu0 %v28
  %59 = vmatprep.subr.mxu0 %v31
  %60 = vmatpush1.msra.mxu0 %v30
  %61 = vmatprep.subr.mxu0 %v33
  %62 = vmatpush1.msra.mxu0 %v32
  %63 = vmatprep.subr.mxu0 %v35
  %64 = vmatpush1.msra.mxu0 %v34
  %65 = vmatprep.subr.mxu0 %v37
  %66 = vmatpush1.msra.mxu0 %v36
  %67 = vmatprep.subr.mxu0 %v39
  %68 = vmatpush1.msra.mxu0 %v38
  %69 = vmatprep.subr.mxu0 0.0
  %70 = vmatpush1.msra.mxu0 0.0
  %71 = vmatprep.subr.mxu0 0.0
  %72 = vmatpush1.msra.mxu0 0.0
  %73 = vmatprep.subr.mxu0 0.0
  %74 = vmatpush1.msra.mxu0 0.0
  %75 = vmatprep.subr.mxu0 0.0
  %76 = vmatpush1.msra.mxu0 0.0
  %77 = vmatprep.subr.mxu0 0.0
  %78 = vmatpush1.msra.mxu0 0.0
  %79 = vmatprep.subr.mxu0 0.0
  %80 = vmatpush1.msra.mxu0 0.0
  %81 = vmatprep.subr.mxu0 0.0
  %82 = vmatpush1.msra.mxu0 0.0
  %83 = vmatprep.subr.mxu0 0.0
  %84 = vmatpush1.msra.mxu0 0.0
  %85 = vmatprep.subr.mxu0 0.0
  %86 = vmatpush1.msra.mxu0 0.0
  %87 = vmatprep.subr.mxu0 0.0
  %88 = vmatpush1.msra.mxu0 0.0
  %89 = vmatprep.subr.mxu0 0.0
  %90 = vmatpush1.msra.mxu0 0.0
  %91 = vmatprep.subr.mxu0 0.0
  %92 = vmatpush1.msra.mxu0 0.0
  %93 = vmatprep.subr.mxu0 0.0
  %94 = vmatpush1.msra.mxu0 0.0
  %95 = vmatprep.subr.mxu0 0.0
  %96 = vmatpush1.msra.mxu0 0.0
  %97 = vmatprep.subr.mxu0 0.0
  %98 = vmatpush1.msra.mxu0 0.0
  %99 = vmatprep.subr.mxu0 0.0
  %100 = vmatpush1.msra.mxu0 0.0
  %101 = vmatprep.subr.mxu0 0.0
  %102 = vmatpush1.msra.mxu0 0.0
  %103 = vmatprep.subr.mxu0 0.0
  %104 = vmatpush1.msra.mxu0 0.0
  %105 = vmatprep.subr.mxu0 0.0
  %106 = vmatpush1.msra.mxu0 0.0
  %107 = vmatprep.subr.mxu0 0.0
  %108 = vmatpush1.msra.mxu0 0.0
  %109 = vmatprep.subr.mxu0 0.0
  %110 = vmatpush1.msra.mxu0 0.0
  %111 = vmatprep.subr.mxu0 0.0
  %112 = vmatpush1.msra.mxu0 0.0
  %113 = vmatprep.subr.mxu0 0.0
  %114 = vmatpush1.msra.mxu0 0.0
  %115 = vmatprep.subr.mxu0 0.0
  %116 = vmatpush1.msra.mxu0 0.0
  %117 = vmatprep.mubr.f32.mxu0 0.0
  %118 = vmatmul.mubr.f32.gmra.mrb[0].mxu0 %v42
  %v119 = vpop.f32.mrb[0].mxu0
  %v120 = vadd.f32 0.0, %v119
  %v121 = vpop.f32.mrb[0].mxu0
  %v122 = vadd.f32 0.0, %v121
  %123 = vmatprep.mubr.f32.mxu0 0.0
  %124 = vmatmul.mubr.f32.gmra.mrb[0].mxu0 %v45
  %v125 = vpop.f32.mrb[0].mxu0
  %v126 = vadd.f32 0.0, %v125
  %v127 = vpop.f32.mrb[0].mxu0
  %v128 = vadd.f32 0.0, %v127
  %129 = vmatprep.mubr.f32.mxu0 0.0
  %130 = vmatmul.mubr.f32.gmra.mrb[0].mxu0 %v48
  %v131 = vpop.f32.mrb[0].mxu0
  %v132 = vadd.f32 0.0, %v131
  %v133 = vpop.f32.mrb[0].mxu0
  %v134 = vadd.f32 0.0, %v133
  %135 = vmatprep.mubr.f32.mxu0 0.0
  %136 = vmatmul.mubr.f32.gmra.mrb[0].mxu0 %v51
  %v137 = vpop.f32.mrb[0].mxu0
  %v138 = vadd.f32 0.0, %v137
  %v139 = vpop.f32.mrb[0].mxu0
  %v140 = vadd.f32 0.0, %v139
  %141 = vdwg.mxu0
  %v142 = vld [vmem:[%s2] sm:$0x3]
  %v144 = vlaneseq
  %v145 = vshrl.u32 %v144, 7
  %v146 = vsub.s32 0, %v145
  %v147 = vrot.slane %v142, %v146
  %v148 = vlaneseq
  %v149 = vshrl.u32 %v148, 7
  %v150 = vsub.s32 1, %v149
  %v151 = vrot.slane %v142, %v150
  %v154 = vmul.f32 %v120, %v147
  %v155 = vmul.f32 %v122, %v151
  %v156 = vmul.f32 %v126, %v147
  %v157 = vmul.f32 %v128, %v151
  %v158 = vmul.f32 %v132, %v147
  %v159 = vmul.f32 %v134, %v151
  %v160 = vmul.f32 %v138, %v147
  %v161 = vmul.f32 %v140, %v151
  %v162 = vld [vmem:[%s3] sm:$0x3]
  %v164 = vlaneseq
  %v165 = vshrl.u32 %v164, 7
  %v166 = vsub.s32 0, %v165
  %v167 = vrot.slane %v162, %v166
  %v168 = vlaneseq
  %v169 = vshrl.u32 %v168, 7
  %v170 = vsub.s32 1, %v169
  %v171 = vrot.slane %v162, %v170
  %v174 = vadd.f32 %v154, %v167
  %v175 = vadd.f32 %v155, %v171
  %v176 = vadd.f32 %v156, %v167
  %v177 = vadd.f32 %v157, %v171
  %v178 = vadd.f32 %v158, %v167
  %v179 = vadd.f32 %v159, %v171
  %v180 = vadd.f32 %v160, %v167
  %v181 = vadd.f32 %v161, %v171
  %v182 = vld [vmem:[%s4] sm:$0xff]
  %v183 = vld [vmem:[%s4 + $0x8] sm:$0xff]
  %v184 = vld [vmem:[%s4 + $0x10] sm:$0xff]
  %v185 = vld [vmem:[%s4 + $0x18] sm:$0xff]
  %v186 = vld [vmem:[%s4 + $0x20] sm:$0xff]
  %v187 = vld [vmem:[%s4 + $0x28] sm:$0xff]
  %v188 = vld [vmem:[%s4 + $0x30] sm:$0xff]
  %v189 = vld [vmem:[%s4 + $0x38] sm:$0xff]
  %v190 = vadd.f32 %v174, %v182
  %v191 = vadd.f32 %v175, %v183
  %v192 = vadd.f32 %v176, %v184
  %v193 = vadd.f32 %v177, %v185
  %v194 = vadd.f32 %v178, %v186
  %v195 = vadd.f32 %v179, %v187
  %v196 = vadd.f32 %v180, %v188
  %v197 = vadd.f32 %v181, %v189
  %v198 = vmax.f32 %v190, 0.0
  %v199 = vmax.f32 %v191, 0.0
  %v200 = vmax.f32 %v192, 0.0
  %v201 = vmax.f32 %v193, 0.0
  %v202 = vmax.f32 %v194, 0.0
  %v203 = vmax.f32 %v195, 0.0
  %v204 = vmax.f32 %v196, 0.0
  %v205 = vmax.f32 %v197, 0.0
  %206 = vst [vmem:[%s5] sm:$0xff] %v198
  %207 = vst [vmem:[%s5 + $0x8] sm:$0xff] %v199
  %208 = vst [vmem:[%s5 + $0x10] sm:$0xff] %v200
  %209 = vst [vmem:[%s5 + $0x18] sm:$0xff] %v201
  %210 = vst [vmem:[%s5 + $0x20] sm:$0xff] %v202
  %211 = vst [vmem:[%s5 + $0x28] sm:$0xff] %v203
  %212 = vst [vmem:[%s5 + $0x30] sm:$0xff] %v204
  %213 = vst [vmem:[%s5 + $0x38] sm:$0xff] %v205
  // Predicated region
  $region22: #{evo_encoder_forward.20} parent=0 // pred_check
    _
  $region23: #{evo_encoder_forward.20} parent=0 // pred_check_branch
    %215 = sbr.rel (0) target = $region25
  $region24: #{evo_encoder_forward.20} parent=0 // pred_region
    _
  $region25: #{evo_encoder_forward.20} parent=0 // pred_fallthru
    _
  // Predicated region
  $region26: #{evo_encoder_forward.20} parent=0 // pred_check
    _
  $region27: #{evo_encoder_forward.20} parent=0 // pred_check_branch
    %217 = sbr.rel (0) target = $region29
  $region28: #{evo_encoder_forward.20} parent=0 // pred_region
    _
  $region29: #{evo_encoder_forward.20} parent=0 // pred_fallthru
    _

// kernel: evo_encoder_forward.21
$region0: #{evo_encoder_forward.21}
  #allocation0 [shape = 'u32[]', space=smem, size = 0x4, offset = 0x4, fixed_abs, tag = 'smem constant byte address 0x4 - core index']
  #allocation1 [shape = 'u32[144,128]{1,0:T(1,128)}', space=vmem, size = 0x12000, scoped, tag = 'internal scratch']
  %s0 = inlined_call_operand.vmem [shape: f32[32,256], index: 0, kind: input, shape index: {}]
  %s1 = inlined_call_operand.vmem [shape: f32[256,64], index: 1, kind: input, shape index: {}]
  %s2 = inlined_call_operand.vmem [shape: f32[1,64], index: 2, kind: input, shape index: {}]
  %s3 = inlined_call_operand.vmem [shape: f32[1,64], index: 3, kind: input, shape index: {}]
  %s4 = inlined_call_operand.vmem [shape: f32[32,64], index: 4, kind: output, shape index: {}]
  %s5 = sld [smem:[#allocation0]]
  $region26: #{evo_encoder_forward.21} parent=0
    _
  %s7 = ssub.s32 1, %s5
  %s8 = scalar_select 0, %s7, %s5
  // Predicated region
  $region2: #{evo_encoder_forward.21} parent=0 // pred_check
    _
  $region3: #{evo_encoder_forward.21} parent=0 // pred_check_branch
    %10 = sbr.rel (0) target = $region5
  $region4: #{evo_encoder_forward.21} parent=0 // pred_region
    _
  $region5: #{evo_encoder_forward.21} parent=0 // pred_fallthru
    _
  // Predicated region
  $region6: #{evo_encoder_forward.21} parent=0 // pred_check
    _
  $region7: #{evo_encoder_forward.21} parent=0 // pred_check_branch
    %12 = sbr.rel (0) target = $region9
  $region8: #{evo_encoder_forward.21} parent=0 // pred_region
    _
  $region9: #{evo_encoder_forward.21} parent=0 // pred_fallthru
    _
  // Predicated region
  $region10: #{evo_encoder_forward.21} parent=0 // pred_check
    _
  $region11: #{evo_encoder_forward.21} parent=0 // pred_check_branch
    %14 = sbr.rel (0) target = $region13
  $region12: #{evo_encoder_forward.21} parent=0 // pred_region
    _
  $region13: #{evo_encoder_forward.21} parent=0 // pred_fallthru
    _
  // Predicated region
  $region14: #{evo_encoder_forward.21} parent=0 // pred_check
    _
  $region15: #{evo_encoder_forward.21} parent=0 // pred_check_branch
    %16 = sbr.rel (0) target = $region17
  $region16: #{evo_encoder_forward.21} parent=0 // pred_region
    _
  $region17: #{evo_encoder_forward.21} parent=0 // pred_fallthru
    _
  %v17 = vld [vmem:[%s0] sm:$0xff]
  %v18 = vld [vmem:[%s0 + $0x8] sm:$0xff]
  %v19 = vld [vmem:[%s0 + $0x10] sm:$0xff]
  %v20 = vld [vmem:[%s0 + $0x18] sm:$0xff]
  %v21 = vld [vmem:[%s0 + $0x20] sm:$0xff]
  %v22 = vld [vmem:[%s0 + $0x28] sm:$0xff]
  %v23 = vld [vmem:[%s0 + $0x30] sm:$0xff]
  %v24 = vld [vmem:[%s0 + $0x38] sm:$0xff]
  %v25 = vld [vmem:[%s1] sm:$0xff]
  %v26 = vld [vmem:[%s1 + $0x8] sm:$0xff]
  %v27 = vld [vmem:[%s1 + $0x10] sm:$0xff]
  %v28 = vld [vmem:[%s1 + $0x18] sm:$0xff]
  %v29 = vld [vmem:[%s1 + $0x20] sm:$0xff]
  %v30 = vld [vmem:[%s1 + $0x28] sm:$0xff]
  %v31 = vld [vmem:[%s1 + $0x30] sm:$0xff]
  %v32 = vld [vmem:[%s1 + $0x38] sm:$0xff]
  %v33 = vld [vmem:[%s1 + $0x40] sm:$0xff]
  %v34 = vld [vmem:[%s1 + $0x48] sm:$0xff]
  %v35 = vld [vmem:[%s1 + $0x50] sm:$0xff]
  %v36 = vld [vmem:[%s1 + $0x58] sm:$0xff]
  %v37 = vld [vmem:[%s1 + $0x60] sm:$0xff]
  %v38 = vld [vmem:[%s1 + $0x68] sm:$0xff]
  %v39 = vld [vmem:[%s1 + $0x70] sm:$0xff]
  %v40 = vld [vmem:[%s1 + $0x78] sm:$0xff]
  %v41 = vld [vmem:[%s1 + $0x80] sm:$0xff]
  %v42 = vld [vmem:[%s1 + $0x88] sm:$0xff]
  %v43 = vld [vmem:[%s1 + $0x90] sm:$0xff]
  %v44 = vld [vmem:[%s1 + $0x98] sm:$0xff]
  %v45 = vld [vmem:[%s1 + $0xa0] sm:$0xff]
  %v46 = vld [vmem:[%s1 + $0xa8] sm:$0xff]
  %v47 = vld [vmem:[%s1 + $0xb0] sm:$0xff]
  %v48 = vld [vmem:[%s1 + $0xb8] sm:$0xff]
  %v49 = vld [vmem:[%s1 + $0xc0] sm:$0xff]
  %v50 = vld [vmem:[%s1 + $0xc8] sm:$0xff]
  %v51 = vld [vmem:[%s1 + $0xd0] sm:$0xff]
  %v52 = vld [vmem:[%s1 + $0xd8] sm:$0xff]
  %v53 = vld [vmem:[%s1 + $0xe0] sm:$0xff]
  %v54 = vld [vmem:[%s1 + $0xe8] sm:$0xff]
  %v55 = vld [vmem:[%s1 + $0xf0] sm:$0xff]
  %v56 = vld [vmem:[%s1 + $0xf8] sm:$0xff]
  %57 = vmatprep.subr.mxu0 0.0
  %58 = vmatpush1.msra.mxu0 %v25
  %59 = vmatprep.subr.mxu0 0.0
  %60 = vmatpush1.msra.mxu0 %v26
  %61 = vmatprep.subr.mxu0 0.0
  %62 = vmatpush1.msra.mxu0 %v27
  %63 = vmatprep.subr.mxu0 0.0
  %64 = vmatpush1.msra.mxu0 %v28
  %65 = vmatprep.subr.mxu0 0.0
  %66 = vmatpush1.msra.mxu0 %v29
  %67 = vmatprep.subr.mxu0 0.0
  %68 = vmatpush1.msra.mxu0 %v30
  %69 = vmatprep.subr.mxu0 0.0
  %70 = vmatpush1.msra.mxu0 %v31
  %71 = vmatprep.subr.mxu0 0.0
  %72 = vmatpush1.msra.mxu0 %v32
  %73 = vmatprep.subr.mxu0 0.0
  %74 = vmatpush1.msra.mxu0 %v33
  %75 = vmatprep.subr.mxu0 0.0
  %76 = vmatpush1.msra.mxu0 %v34
  %77 = vmatprep.subr.mxu0 0.0
  %78 = vmatpush1.msra.mxu0 %v35
  %79 = vmatprep.subr.mxu0 0.0
  %80 = vmatpush1.msra.mxu0 %v36
  %81 = vmatprep.subr.mxu0 0.0
  %82 = vmatpush1.msra.mxu0 %v37
  %83 = vmatprep.subr.mxu0 0.0
  %84 = vmatpush1.msra.mxu0 %v38
  %85 = vmatprep.subr.mxu0 0.0
  %86 = vmatpush1.msra.mxu0 %v39
  %87 = vmatprep.subr.mxu0 0.0
  %88 = vmatpush1.msra.mxu0 %v40
  %89 = vmatprep.subr.mxu0 0.0
  %90 = vmatpush1.msra.mxu0 %v41
  %91 = vmatprep.subr.mxu0 0.0
  %92 = vmatpush1.msra.mxu0 %v42
  %93 = vmatprep.subr.mxu0 0.0
  %94 = vmatpush1.msra.mxu0 %v43
  %95 = vmatprep.subr.mxu0 0.0
  %96 = vmatpush1.msra.mxu0 %v44
  %97 = vmatprep.subr.mxu0 0.0
  %98 = vmatpush1.msra.mxu0 %v45
  %99 = vmatprep.subr.mxu0 0.0
  %100 = vmatpush1.msra.mxu0 %v46
  %101 = vmatprep.subr.mxu0 0.0
  %102 = vmatpush1.msra.mxu0 %v47
  %103 = vmatprep.subr.mxu0 0.0
  %104 = vmatpush1.msra.mxu0 %v48
  %105 = vmatprep.subr.mxu0 0.0
  %106 = vmatpush1.msra.mxu0 %v49
  %107 = vmatprep.subr.mxu0 0.0
  %108 = vmatpush1.msra.mxu0 %v50
  %109 = vmatprep.subr.mxu0 0.0
  %110 = vmatpush1.msra.mxu0 %v51
  %111 = vmatprep.subr.mxu0 0.0
  %112 = vmatpush1.msra.mxu0 %v52
  %113 = vmatprep.subr.mxu0 0.0
  %114 = vmatpush1.msra.mxu0 %v53
  %115 = vmatprep.subr.mxu0 0.0
  %116 = vmatpush1.msra.mxu0 %v54
  %117 = vmatprep.subr.mxu0 0.0
  %118 = vmatpush1.msra.mxu0 %v55
  %119 = vmatprep.subr.mxu0 0.0
  %120 = vmatpush1.msra.mxu0 %v56
  %121 = vmatprep.mubr.f32.mxu0 %v18
  %122 = vmatmul.mubr.f32.gmra.mrb[0].mxu0 %v17
  %v123 = vpop.f32.mrb[0].mxu0
  %v124 = vadd.f32 0.0, %v123
  %v125 = vpop.f32.mrb[0].mxu0
  %126 = vmatprep.mubr.f32.mxu0 %v20
  %127 = vmatmul.mubr.f32.gmra.mrb[0].mxu0 %v19
  %v128 = vpop.f32.mrb[0].mxu0
  %v129 = vadd.f32 0.0, %v128
  %v130 = vpop.f32.mrb[0].mxu0
  %131 = vmatprep.mubr.f32.mxu0 %v22
  %132 = vmatmul.mubr.f32.gmra.mrb[0].mxu0 %v21
  %v133 = vpop.f32.mrb[0].mxu0
  %v134 = vadd.f32 0.0, %v133
  %v135 = vpop.f32.mrb[0].mxu0
  %136 = vmatprep.mubr.f32.mxu0 %v24
  %137 = vmatmul.mubr.f32.gmra.mrb[0].mxu0 %v23
  %v138 = vpop.f32.mrb[0].mxu0
  %v139 = vadd.f32 0.0, %v138
  %v140 = vpop.f32.mrb[0].mxu0
  %141 = vdwg.mxu0
  %v142 = vld [vmem:[%s2] sm:$0x1]
  %v144 = vlaneseq
  %v145 = vshrl.u32 %v144, 7
  %v146 = vsub.s32 0, %v145
  %v147 = vrot.slane %v142, %v146
  %v149 = vmul.f32 %v124, %v147
  %v150 = vmul.f32 %v129, %v147
  %v151 = vmul.f32 %v134, %v147
  %v152 = vmul.f32 %v139, %v147
  %v153 = vld [vmem:[%s3] sm:$0x1]
  %v155 = vlaneseq
  %v156 = vshrl.u32 %v155, 7
  %v157 = vsub.s32 0, %v156
  %v158 = vrot.slane %v153, %v157
  %v160 = vadd.f32 %v149, %v158
  %v161 = vadd.f32 %v150, %v158
  %v162 = vadd.f32 %v151, %v158
  %v163 = vadd.f32 %v152, %v158
  %v164 = vmax.f32 %v160, 0.0
  %v165 = vmax.f32 %v161, 0.0
  %v166 = vmax.f32 %v162, 0.0
  %v167 = vmax.f32 %v163, 0.0
  %vm168 = vcmask 523264
  %169 = vst.msk [vmem:[%s4] sm:$0xff] %vm168, %v164
  %170 = vst.msk [vmem:[%s4 + $0x8] sm:$0xff] %vm168, %v165
  %171 = vst.msk [vmem:[%s4 + $0x10] sm:$0xff] %vm168, %v166
  %172 = vst.msk [vmem:[%s4 + $0x18] sm:$0xff] %vm168, %v167
  // Predicated region
  $region18: #{evo_encoder_forward.21} parent=0 // pred_check
    _
  $region19: #{evo_encoder_forward.21} parent=0 // pred_check_branch
    %174 = sbr.rel (0) target = $region21
  $region20: #{evo_encoder_forward.21} parent=0 // pred_region
    _
  $region21: #{evo_encoder_forward.21} parent=0 // pred_fallthru
    _
  // Predicated region
  $region22: #{evo_encoder_forward.21} parent=0 // pred_check
    _
  $region23: #{evo_encoder_forward.21} parent=0 // pred_check_branch
    %176 = sbr.rel (0) target = $region25
  $region24: #{evo_encoder_forward.21} parent=0 // pred_region
    _
  $region25: #{evo_encoder_forward.21} parent=0 // pred_fallthru
    _

// kernel: evo_encoder_forward.27
$region0: #{evo_encoder_forward.27}
  #allocation0 [shape = 'u32[]', space=smem, size = 0x4, offset = 0x4, fixed_abs, tag = 'smem constant byte address 0x4 - core index']
  #allocation1 [shape = 'u32[144,128]{1,0:T(1,128)}', space=vmem, size = 0x12000, scoped, tag = 'internal scratch']
  %s0 = inlined_call_operand.vmem [shape: f32[2,16,256], index: 0, kind: input, shape index: {}]
  %s1 = inlined_call_operand.vmem [shape: f32[2,16,1], index: 1, kind: input, shape index: {}]
  %s2 = inlined_call_operand.vmem [shape: f32[2,16,1], index: 2, kind: input, shape index: {}]
  %s3 = inlined_call_operand.vmem [shape: f32[2,16,256], index: 3, kind: output, shape index: {}]
  %s4 = sld [smem:[#allocation0]]
  $region45: #{evo_encoder_forward.27} parent=0
    _
  %s6 = ssub.s32 1, %s4
  %s7 = scalar_select 0, %s6, %s4
  loop: start=0, step=1, limit=4
  $region2: #{evo_encoder_forward.27} parent=0 // loop_pre_header
    _
  $region3: #{evo_encoder_forward.27} parent=0 // loop_header
    %s9 = sphi 0, %s13
    %p10 = scmp.ge.s32.totalorder %s9, 4
    %s19 = sphi 0, %s21
    %s22 = sphi 0, %s19
    %s23 = sphi 0, %s22
    %s39 = sphi 0, %s23
    %s45 = sphi 0, %s47
    %s48 = sphi 0, %s45
    %s49 = sphi 0, %s48
    %s65 = sphi 0, %s49
    %s71 = sphi 0, %s73
    %s74 = sphi 0, %s71
    %s75 = sphi 0, %s74
    %s91 = sphi 0, %s75
    %s97 = sphi 0, %s99
    %s100 = sphi 0, %s97
    %s101 = sphi 0, %s100
    %s117 = sphi 0, %s101
  $region4: #{evo_encoder_forward.27} parent=0 // loop_header_branch
    %12 = sbr.rel (%p10) target = $region8
  $region5: #{evo_encoder_forward.27} parent=0 // loop_body
    %s14 = ssub.s32 %s9, 1
    %s15 = ssub.s32 %s9, 2
    %s16 = sadd.s32 %s9, 1
    %s17 = ssub.s32 %s9, %s16
    %p18 = scmp.eq.s32.totalorder %s17, 0
    %s20 = sadd.s32 %s19, 1
    %s21 = scalar_select %p18, %s19, %s20
    %p24 = pneg %p18
    %p25 = scmp.eq.s32.totalorder %s9, 1
    %p26 = por %p24, %p25
    %p27 = scmp.ne.s32.totalorder %s19, %s22
    %p28 = scmp.eq.s32.totalorder %s9, 0
    %p29 = por %p27, %p28
    %p30 = scmp.ne.s32.totalorder %s19, %s22
    %p31 = scmp.eq.s32.totalorder %s14, 1
    %p32 = por %p30, %p31
    %p33 = scmp.ne.s32.totalorder %s22, %s23
    %p34 = scmp.eq.s32.totalorder %s14, 0
    %p35 = por %p33, %p34
    %p36 = scmp.ne.s32.totalorder %s22, %s23
    %p37 = scmp.eq.s32.totalorder %s15, 1
    %p38 = por %p36, %p37
    %p40 = scmp.ne.s32.totalorder %s23, %s39
    %p41 = scmp.eq.s32.totalorder %s15, 0
    %p42 = por %p40, %p41
    %s43 = ssub.s32 %s9, %s16
    %p44 = scmp.eq.s32.totalorder %s43, 0
    %s46 = sadd.s32 %s45, 1
    %s47 = scalar_select %p44, %s45, %s46
    %p50 = pneg %p44
    %p51 = scmp.eq.s32.totalorder %s9, 1
    %p52 = por %p50, %p51
    %p53 = scmp.ne.s32.totalorder %s45, %s48
    %p54 = scmp.eq.s32.totalorder %s9, 0
    %p55 = por %p53, %p54
    %p56 = scmp.ne.s32.totalorder %s45, %s48
    %p57 = scmp.eq.s32.totalorder %s14, 1
    %p58 = por %p56, %p57
    %p59 = scmp.ne.s32.totalorder %s48, %s49
    %p60 = scmp.eq.s32.totalorder %s14, 0
    %p61 = por %p59, %p60
    %p62 = scmp.ne.s32.totalorder %s48, %s49
    %p63 = scmp.eq.s32.totalorder %s15, 1
    %p64 = por %p62, %p63
    %p66 = scmp.ne.s32.totalorder %s49, %s65
    %p67 = scmp.eq.s32.totalorder %s15, 0
    %p68 = por %p66, %p67
    %s69 = ssub.s32 %s9, %s16
    %p70 = scmp.eq.s32.totalorder %s69, 0
    %s72 = sadd.s32 %s71, 1
    %s73 = scalar_select %p70, %s71, %s72
    %p76 = pneg %p70
    %p77 = scmp.eq.s32.totalorder %s9, 1
    %p78 = por %p76, %p77
    %p79 = scmp.ne.s32.totalorder %s71, %s74
    %p80 = scmp.eq.s32.totalorder %s9, 0
    %p81 = por %p79, %p80
    %p82 = scmp.ne.s32.totalorder %s71, %s74
    %p83 = scmp.eq.s32.totalorder %s14, 1
    %p84 = por %p82, %p83
    %p85 = scmp.ne.s32.totalorder %s74, %s75
    %p86 = scmp.eq.s32.totalorder %s14, 0
    %p87 = por %p85, %p86
    %p88 = scmp.ne.s32.totalorder %s74, %s75
    %p89 = scmp.eq.s32.totalorder %s15, 1
    %p90 = por %p88, %p89
    %p92 = scmp.ne.s32.totalorder %s75, %s91
    %p93 = scmp.eq.s32.totalorder %s15, 0
    %p94 = por %p92, %p93
    %s95 = ssub.s32 %s9, %s16
    %p96 = scmp.eq.s32.totalorder %s95, 0
    %s98 = sadd.s32 %s97, 1
    %s99 = scalar_select %p96, %s97, %s98
    %p102 = pneg %p96
    %p103 = scmp.eq.s32.totalorder %s9, 1
    %p104 = por %p102, %p103
    %p105 = scmp.ne.s32.totalorder %s97, %s100
    %p106 = scmp.eq.s32.totalorder %s9, 0
    %p107 = por %p105, %p106
    %p108 = scmp.ne.s32.totalorder %s97, %s100
    %p109 = scmp.eq.s32.totalorder %s14, 1
    %p110 = por %p108, %p109
    %p111 = scmp.ne.s32.totalorder %s100, %s101
    %p112 = scmp.eq.s32.totalorder %s14, 0
    %p113 = por %p111, %p112
    %p114 = scmp.ne.s32.totalorder %s100, %s101
    %p115 = scmp.eq.s32.totalorder %s15, 1
    %p116 = por %p114, %p115
    %p118 = scmp.ne.s32.totalorder %s101, %s117
    %p119 = scmp.eq.s32.totalorder %s15, 0
    %p120 = por %p118, %p119
    %p121 = scmp.le.s32.totalorder 1, %s9
    %p122 = scmp.lt.s32.totalorder %s9, 3
    %p123 = pnand %p121, %p122
    %p124 = pneg %p123
    // Predicated region
    $region9: #{evo_encoder_forward.27} parent=5 // pred_check
      _
    $region10: #{evo_encoder_forward.27} parent=5 // pred_check_branch
      %126 = sbr.rel (%p123) target = $region12
    $region11: #{evo_encoder_forward.27} parent=5 // pred_region
      %s127 = ssub.s32 %s9, 1
    $region12: #{evo_encoder_forward.27} parent=5 // pred_fallthru
      _
    %p128 = scmp.lt.s32.totalorder %s9, 2
    // Predicated region
    $region13: #{evo_encoder_forward.27} parent=5 // pred_check
      %p129 = pneg %p128
    $region14: #{evo_encoder_forward.27} parent=5 // pred_check_branch
      %131 = sbr.rel (%p129) target = $region16
    $region15: #{evo_encoder_forward.27} parent=5 // pred_region
      // Predicated region
      $region17: #{evo_encoder_forward.27} parent=15 // pred_check
        %p132 = pneg %p29
      $region18: #{evo_encoder_forward.27} parent=15 // pred_check_branch
        %134 = sbr.rel (%p132) target = $region20
      $region19: #{evo_encoder_forward.27} parent=15 // pred_region
        %p135 = scmp.lt.s32.totalorder %s9, 1
        %s136 = scalar_select %p135, %s9, 1
        %s137 = smul.addr %s136, 4
        %s138 = smul.addr %s137, 8
        %s139 = scalar_lea.vmem %s0, %s138
      $region20: #{evo_encoder_forward.27} parent=15 // pred_fallthru
        _
      // Predicated region
      $region21: #{evo_encoder_forward.27} parent=15 // pred_check
        %p140 = pneg %p55
      $region22: #{evo_encoder_forward.27} parent=15 // pred_check_branch
        %142 = sbr.rel (%p140) target = $region24
      $region23: #{evo_encoder_forward.27} parent=15 // pred_region
        %p143 = scmp.lt.s32.totalorder %s9, 1
        %s144 = scalar_select %p143, %s9, 1
        %s145 = smul.addr %s144, 2
        %s146 = smul.addr %s145, 8
        %s147 = scalar_lea.vmem %s1, %s146
      $region24: #{evo_encoder_forward.27} parent=15 // pred_fallthru
        _
      // Predicated region
      $region25: #{evo_encoder_forward.27} parent=15 // pred_check
        %p148 = pneg %p81
      $region26: #{evo_encoder_forward.27} parent=15 // pred_check_branch
        %150 = sbr.rel (%p148) target = $region28
      $region27: #{evo_encoder_forward.27} parent=15 // pred_region
        %p151 = scmp.lt.s32.totalorder %s9, 1
        %s152 = scalar_select %p151, %s9, 1
        %s153 = smul.addr %s152, 2
        %s154 = smul.addr %s153, 8
        %s155 = scalar_lea.vmem %s2, %s154
      $region28: #{evo_encoder_forward.27} parent=15 // pred_fallthru
        _
    $region16: #{evo_encoder_forward.27} parent=5 // pred_fallthru
      _
    %p156 = scmp.le.s32.totalorder 1, %s9
    %p157 = scmp.lt.s32.totalorder %s9, 3
    %p158 = pnand %p156, %p157
    %p159 = pneg %p158
    // Predicated region
    $region29: #{evo_encoder_forward.27} parent=5 // pred_check
      _
    $region30: #{evo_encoder_forward.27} parent=5 // pred_check_branch
      %161 = sbr.rel (%p158) target = $region32
    $region31: #{evo_encoder_forward.27} parent=5 // pred_region
      %s162 = ssub.s32 %s9, 1
      %p163 = scmp.lt.s32.totalorder %s14, 1
      %s164 = scalar_select %p163, %s14, 1
      %s165 = smul.addr %s164, 4
      %s166 = smul.addr %s165, 8
      %s167 = scalar_lea.vmem %s0, %s166
      %p168 = pneg %p35
      %p169 = pneg %p32
      %p170 = scmp.lt.s32.totalorder %s14, 1
      %s171 = scalar_select %p170, %s14, 1
      %s172 = smul.addr %s171, 2
      %s173 = smul.addr %s172, 8
      %s174 = scalar_lea.vmem %s1, %s173
      %p175 = pneg %p61
      %p176 = pneg %p58
      %p177 = scmp.lt.s32.totalorder %s14, 1
      %s178 = scalar_select %p177, %s14, 1
      %s179 = smul.addr %s178, 2
      %s180 = smul.addr %s179, 8
      %s181 = scalar_lea.vmem %s2, %s180
      %p182 = pneg %p87
      %p183 = pneg %p84
      %p184 = pneg %p113
      %p185 = pneg %p110
      %p186 = scmp.lt.s32.totalorder %s14, 1
      %s187 = scalar_select %p186, %s14, 1
      %s188 = smul.addr %s187, 4
      %s189 = smul.addr %s188, 8
      %s190 = scalar_lea.vmem %s3, %s189
      %p191 = scmp.lt.s32.totalorder %s14, 1
      %s192 = scalar_select %p191, %s14, 1
      %s193 = smul.addr %s192, 4
      %s194 = smul.addr %s193, 8
      %s195 = scalar_lea.vmem %s0, %s194
      %p196 = scmp.lt.s32.totalorder %s14, 1
      %s197 = scalar_select %p196, %s14, 1
      %s198 = smul.addr %s197, 2
      %s199 = smul.addr %s198, 8
      %s200 = scalar_lea.vmem %s1, %s199
      %p201 = scmp.lt.s32.totalorder %s14, 1
      %s202 = scalar_select %p201, %s14, 1
      %s203 = smul.addr %s202, 2
      %s204 = smul.addr %s203, 8
      %s205 = scalar_lea.vmem %s2, %s204
      %p206 = scmp.lt.s32.totalorder %s14, 1
      %s207 = scalar_select %p206, %s14, 1
      %s208 = smul.addr %s207, 4
      %s209 = smul.addr %s208, 8
      %s210 = scalar_lea.vmem %s3, %s209
      %v211 = vld [vmem:[%s195] sm:$0xff]
      %v212 = vld [vmem:[%s195 + $0x8] sm:$0xff]
      %v213 = vld [vmem:[%s195 + $0x10] sm:$0xff]
      %v214 = vld [vmem:[%s195 + $0x18] sm:$0xff]
      %v215 = vld [vmem:[%s200] sm:$0xff]
      %v216 = vld [vmem:[%s200 + $0x8] sm:$0xff]
      %v217 = vld [vmem:[%s205] sm:$0xff]
      %v218 = vld [vmem:[%s205 + $0x8] sm:$0xff]
      %220 = vset.pattern.permute.xlu0 0
      %221 = vperm.xlu0 %220, %v215
      %v222 = vpop.permute.xlu0 %221
      %225 = vset.pattern.permute.xlu0 0
      %226 = vperm.xlu0 %225, %v216
      %v227 = vpop.permute.xlu0 %226
      %v229 = vmul.f32 %v211, %v222
      %v230 = vmul.f32 %v212, %v222
      %v231 = vmul.f32 %v213, %v227
      %v232 = vmul.f32 %v214, %v227
      %v233 = vadd.f32 %v229, %v231
      %v234 = vrot.slane %v233, 4
      %v235 = vadd.f32 %v233, %v234
      %v236 = vrot.slane %v235, 2
      %v237 = vadd.f32 %v235, %v236
      %v238 = vrot.slane %v237, 1
      %v239 = vadd.f32 %v237, %v238
      %v240 = vadd.f32 %v230, %v232
      %v241 = vrot.slane %v240, 4
      %v242 = vadd.f32 %v240, %v241
      %v243 = vrot.slane %v242, 2
      %v244 = vadd.f32 %v242, %v243
      %v245 = vrot.slane %v244, 1
      %v246 = vadd.f32 %v244, %v245
      %vm247 = vcmask 7168
      %v248 = vsel %vm247, %v215, 0.0
      %v249 = vsel %vm247, %v216, 0.0
      %v250 = vadd.f32 %v248, %v249
      %251 = vadd.xlane.f32.xlu0 %v250
      %v252 = vpop.xlane.xlu0 %251
      %v253 = vrot.slane %v252, 4
      %v254 = vadd.f32 %v252, %v253
      %v255 = vrot.slane %v254, 2
      %v256 = vadd.f32 %v254, %v255
      %v257 = vrot.slane %v256, 1
      %v258 = vadd.f32 %v256, %v257
      %s259 = vtos %v258
      %s260 = sadd.f32 %s259, 1e-08
      %v261 = vstv %s260
      %v262 = vrcp.pop %v261
      %v263 = vmul.f32 %v239, %v262
      %v264 = vmul.f32 %v246, %v262
      %266 = vset.pattern.permute.xlu0 0
      %267 = vperm.xlu0 %266, %v217
      %v268 = vpop.permute.xlu0 %267
      %271 = vset.pattern.permute.xlu0 0
      %272 = vperm.xlu0 %271, %v218
      %v273 = vpop.permute.xlu0 %272
      %v275 = vmul.f32 %v211, %v268
      %v276 = vmul.f32 %v212, %v268
      %v277 = vmul.f32 %v213, %v273
      %v278 = vmul.f32 %v214, %v273
      %v279 = vadd.f32 %v275, %v277
      %v280 = vrot.slane %v279, 4
      %v281 = vadd.f32 %v279, %v280
      %v282 = vrot.slane %v281, 2
      %v283 = vadd.f32 %v281, %v282
      %v284 = vrot.slane %v283, 1
      %v285 = vadd.f32 %v283, %v284
      %v286 = vadd.f32 %v276, %v278
      %v287 = vrot.slane %v286, 4
      %v288 = vadd.f32 %v286, %v287
      %v289 = vrot.slane %v288, 2
      %v290 = vadd.f32 %v288, %v289
      %v291 = vrot.slane %v290, 1
      %v292 = vadd.f32 %v290, %v291
      %v293 = vsel %vm247, %v217, 0.0
      %v294 = vsel %vm247, %v218, 0.0
      %v295 = vadd.f32 %v293, %v294
      %296 = vadd.xlane.f32.xlu0 %v295
      %v297 = vpop.xlane.xlu0 %296
      %v298 = vrot.slane %v297, 4
      %v299 = vadd.f32 %v297, %v298
      %v300 = vrot.slane %v299, 2
      %v301 = vadd.f32 %v299, %v300
      %v302 = vrot.slane %v301, 1
      %v303 = vadd.f32 %v301, %v302
      %s304 = vtos %v303
      %s305 = sadd.f32 %s304, 1e-08
      %v306 = vstv %s305
      %v307 = vrcp.pop %v306
      %v308 = vmul.f32 %v285, %v307
      %v309 = vmul.f32 %v292, %v307
      %v310 = vmul.f32 %v211, %v263
      %v311 = vmul.f32 %v212, %v264
      %v312 = vmul.f32 %v213, %v263
      %v313 = vmul.f32 %v214, %v264
      %v314 = vadd.f32 %v310, %v311
      %315 = vadd.xlane.f32.xlu0 %v314
      %v316 = vpop.xlane.xlu0 %315
      %v317 = vadd.f32 %v312, %v313
      %318 = vadd.xlane.f32.xlu0 %v317
      %v319 = vpop.xlane.xlu0 %318
      %v320 = vmul.f32 %v211, %v308
      %v321 = vmul.f32 %v212, %v309
      %v322 = vmul.f32 %v213, %v308
      %v323 = vmul.f32 %v214, %v309
      %v324 = vadd.f32 %v320, %v321
      %325 = vadd.xlane.f32.xlu0 %v324
      %v326 = vpop.xlane.xlu0 %325
      %v327 = vadd.f32 %v322, %v323
      %328 = vadd.xlane.f32.xlu0 %v327
      %v329 = vpop.xlane.xlu0 %328
      %v330 = vmax.f32 %v316, %v326
      %v331 = vmax.f32 %v319, %v329
      %v332 = vsub.f32 %v316, %v330
      %v333 = vsub.f32 %v319, %v331
      %v334 = vmul.f32 %v332, 1.442695
      %v335 = vpow.pop %v334
      %v336 = vmul.f32 %v333, 1.442695
      %v337 = vpow.pop %v336
      %v338 = vsub.f32 %v326, %v330
      %v339 = vsub.f32 %v329, %v331
      %v340 = vmul.f32 %v338, 1.442695
      %v341 = vpow.pop %v340
      %v342 = vmul.f32 %v339, 1.442695
      %v343 = vpow.pop %v342
      %v344 = vadd.f32 %v335, %v341
      %v345 = vadd.f32 %v337, %v343
      %v346 = vrcp.pop %v344
      %v347 = vmul.f32 1.0, %v346
      %v348 = vrcp.pop %v345
      %v349 = vmul.f32 1.0, %v348
      %v350 = vmul.f32 %v335, %v347
      %v351 = vmul.f32 %v337, %v349
      %v352 = vmul.f32 %v350, 0.0625
      %v353 = vmul.f32 %v351, 0.0625
      %v354 = vmul.f32 %v341, %v347
      %v355 = vmul.f32 %v343, %v349
      %v356 = vmul.f32 %v354, 0.0625
      %v357 = vmul.f32 %v355, 0.0625
      %v358 = vmul.f32 %v352, %v263
      %v359 = vmul.f32 %v352, %v264
      %v360 = vmul.f32 %v353, %v263
      %v361 = vmul.f32 %v353, %v264
      %v362 = vmul.f32 %v356, %v308
      %v363 = vmul.f32 %v356, %v309
      %v364 = vmul.f32 %v357, %v308
      %v365 = vmul.f32 %v357, %v309
      %v366 = vadd.f32 %v358, %v362
      %v367 = vadd.f32 %v359, %v363
      %v368 = vadd.f32 %v360, %v364
      %v369 = vadd.f32 %v361, %v365
      %v370 = vadd.f32 %v215, %v217
      %v371 = vadd.f32 %v216, %v218
      %373 = vset.pattern.permute.xlu0 0
      %374 = vperm.xlu0 %373, %v370
      %v375 = vpop.permute.xlu0 %374
      %378 = vset.pattern.permute.xlu0 0
      %379 = vperm.xlu0 %378, %v371
      %v380 = vpop.permute.xlu0 %379
      %v382 = vmul.f32 %v366, %v375
      %v383 = vmul.f32 %v367, %v375
      %v384 = vmul.f32 %v368, %v380
      %v385 = vmul.f32 %v369, %v380
      %v386 = vadd.f32 %v211, %v382
      %v387 = vadd.f32 %v212, %v383
      %v388 = vadd.f32 %v213, %v384
      %v389 = vadd.f32 %v214, %v385
      %390 = vst [vmem:[%s210] sm:$0xff] %v386
      %391 = vst [vmem:[%s210 + $0x8] sm:$0xff] %v387
      %392 = vst [vmem:[%s210 + $0x10] sm:$0xff] %v388
      %393 = vst [vmem:[%s210 + $0x18] sm:$0xff] %v389
      %p394 = scmp.lt.s32.totalorder %s14, 1
      %s395 = scalar_select %p394, %s14, 1
      %s396 = smul.addr %s395, 4
      %s397 = smul.addr %s396, 8
      %s398 = scalar_lea.vmem %s3, %s397
      // Predicated region
      $region33: #{evo_encoder_forward.27} parent=31 // pred_check
        %p399 = pneg %p110
      $region34: #{evo_encoder_forward.27} parent=31 // pred_check_branch
        %401 = sbr.rel (%p399) target = $region36
      $region35: #{evo_encoder_forward.27} parent=31 // pred_region
        _
      $region36: #{evo_encoder_forward.27} parent=31 // pred_fallthru
        _
    $region32: #{evo_encoder_forward.27} parent=5 // pred_fallthru
      _
    %p402 = scmp.le.s32.totalorder 2, %s9
    // Predicated region
    $region37: #{evo_encoder_forward.27} parent=5 // pred_check
      %p403 = pneg %p402
    $region38: #{evo_encoder_forward.27} parent=5 // pred_check_branch
      %405 = sbr.rel (%p403) target = $region40
    $region39: #{evo_encoder_forward.27} parent=5 // pred_region
      %s406 = ssub.s32 %s9, 2
      // Predicated region
      $region41: #{evo_encoder_forward.27} parent=39 // pred_check
        %p407 = pneg %p116
      $region42: #{evo_encoder_forward.27} parent=39 // pred_check_branch
        %409 = sbr.rel (%p407) target = $region44
      $region43: #{evo_encoder_forward.27} parent=39 // pred_region
        %p410 = scmp.lt.s32.totalorder %s15, 1
        %s411 = scalar_select %p410, %s15, 1
        %s412 = smul.addr %s411, 4
        %s413 = smul.addr %s412, 8
        %s414 = scalar_lea.vmem %s3, %s413
      $region44: #{evo_encoder_forward.27} parent=39 // pred_fallthru
        _
    $region40: #{evo_encoder_forward.27} parent=5 // pred_fallthru
      _
  $region6: #{evo_encoder_forward.27} parent=0 // loop_footer
    %s13 = sadd.s32 1, %s9
  $region7: #{evo_encoder_forward.27} parent=0 // loop_footer_branch
    %8 = sbr.rel target = $region3
  $region8: #{evo_encoder_forward.27} parent=0 // loop_exit
    _

// kernel: evo_encoder_forward.18
$region0: #{evo_encoder_forward.18}
  #allocation0 [shape = 'u32[]', space=smem, size = 0x4, offset = 0x4, fixed_abs, tag = 'smem constant byte address 0x4 - core index']
  #allocation1 [shape = 'u32[144,128]{1,0:T(1,128)}', space=vmem, size = 0x12000, scoped, tag = 'internal scratch']
  %s0 = inlined_call_operand.vmem [shape: f32[32,3136], index: 0, kind: input, shape index: {}]
  %s1 = inlined_call_operand.vmem [shape: f32[3136,64], index: 1, kind: input, shape index: {}]
  %s2 = inlined_call_operand.vmem [shape: f32[1,64], index: 2, kind: input, shape index: {}]
  %s3 = inlined_call_operand.vmem [shape: f32[1,64], index: 3, kind: input, shape index: {}]
  %s4 = inlined_call_operand.vmem [shape: f32[32,64], index: 4, kind: output, shape index: {}]
  %s5 = sld [smem:[#allocation0]]
  $region26: #{evo_encoder_forward.18} parent=0
    _
  %s7 = ssub.s32 1, %s5
  %s8 = scalar_select 0, %s7, %s5
  // Predicated region
  $region2: #{evo_encoder_forward.18} parent=0 // pred_check
    _
  $region3: #{evo_encoder_forward.18} parent=0 // pred_check_branch
    %10 = sbr.rel (0) target = $region5
  $region4: #{evo_encoder_forward.18} parent=0 // pred_region
    _
  $region5: #{evo_encoder_forward.18} parent=0 // pred_fallthru
    _
  // Predicated region
  $region6: #{evo_encoder_forward.18} parent=0 // pred_check
    _
  $region7: #{evo_encoder_forward.18} parent=0 // pred_check_branch
    %12 = sbr.rel (0) target = $region9
  $region8: #{evo_encoder_forward.18} parent=0 // pred_region
    _
  $region9: #{evo_encoder_forward.18} parent=0 // pred_fallthru
    _
  // Predicated region
  $region10: #{evo_encoder_forward.18} parent=0 // pred_check
    _
  $region11: #{evo_encoder_forward.18} parent=0 // pred_check_branch
    %14 = sbr.rel (0) target = $region13
  $region12: #{evo_encoder_forward.18} parent=0 // pred_region
    _
  $region13: #{evo_encoder_forward.18} parent=0 // pred_fallthru
    _
  // Predicated region
  $region14: #{evo_encoder_forward.18} parent=0 // pred_check
    _
  $region15: #{evo_encoder_forward.18} parent=0 // pred_check_branch
    %16 = sbr.rel (0) target = $region17
  $region16: #{evo_encoder_forward.18} parent=0 // pred_region
    _
  $region17: #{evo_encoder_forward.18} parent=0 // pred_fallthru
    _
  %v17 = vld [vmem:[%s0] sm:$0xff]
  %v18 = vld [vmem:[%s0 + $0x8] sm:$0xff]
  %v19 = vld [vmem:[%s0 + $0x10] sm:$0xff]
  %v20 = vld [vmem:[%s0 + $0x18] sm:$0xff]
  %v21 = vld [vmem:[%s0 + $0x20] sm:$0xff]
  %v22 = vld [vmem:[%s0 + $0x28] sm:$0xff]
  %v23 = vld [vmem:[%s0 + $0x30] sm:$0xff]
  %v24 = vld [vmem:[%s0 + $0x38] sm:$0xff]
  %v25 = vld [vmem:[%s0 + $0x40] sm:$0xff]
  %v26 = vld [vmem:[%s0 + $0x48] sm:$0xff]
  %v27 = vld [vmem:[%s0 + $0x50] sm:$0xff]
  %v28 = vld [vmem:[%s0 + $0x58] sm:$0xff]
  %v29 = vld [vmem:[%s0 + $0x60] sm:$0xff]
  %v30 = vld [vmem:[%s0 + $0x68] sm:$0xff]
  %v31 = vld [vmem:[%s0 + $0x70] sm:$0xff]
  %v32 = vld [vmem:[%s0 + $0x78] sm:$0xff]
  %v33 = vld [vmem:[%s0 + $0x80] sm:$0xff]
  %v34 = vld [vmem:[%s0 + $0x88] sm:$0xff]
  %v35 = vld [vmem:[%s0 + $0x90] sm:$0xff]
  %v36 = vld [vmem:[%s0 + $0x98] sm:$0xff]
  %v37 = vld [vmem:[%s0 + $0xa0] sm:$0xff]
  %v38 = vld [vmem:[%s0 + $0xa8] sm:$0xff]
  %v39 = vld [vmem:[%s0 + $0xb0] sm:$0xff]
  %v40 = vld [vmem:[%s0 + $0xb8] sm:$0xff]
  %v41 = vld [vmem:[%s0 + $0xc0] sm:$0xff]
  %v42 = vld [vmem:[%s0 + $0xc8] sm:$0xff]
  %v43 = vld [vmem:[%s0 + $0xd0] sm:$0xff]
  %v44 = vld [vmem:[%s0 + $0xd8] sm:$0xff]
  %v45 = vld [vmem:[%s0 + $0xe0] sm:$0xff]
  %v46 = vld [vmem:[%s0 + $0xe8] sm:$0xff]
  %v47 = vld [vmem:[%s0 + $0xf0] sm:$0xff]
  %v48 = vld [vmem:[%s0 + $0xf8] sm:$0xff]
  %v49 = vld [vmem:[%s0 + $0x100] sm:$0xff]
  %v50 = vld [vmem:[%s0 + $0x108] sm:$0xff]
  %v51 = vld [vmem:[%s0 + $0x110] sm:$0xff]
  %v52 = vld [vmem:[%s0 + $0x118] sm:$0xff]
  %v53 = vld [vmem:[%s0 + $0x120] sm:$0xff]
  %v54 = vld [vmem:[%s0 + $0x128] sm:$0xff]
  %v55 = vld [vmem:[%s0 + $0x130] sm:$0xff]
  %v56 = vld [vmem:[%s0 + $0x138] sm:$0xff]
  %v57 = vld [vmem:[%s0 + $0x140] sm:$0xff]
  %v58 = vld [vmem:[%s0 + $0x148] sm:$0xff]
  %v59 = vld [vmem:[%s0 + $0x150] sm:$0xff]
  %v60 = vld [vmem:[%s0 + $0x158] sm:$0xff]
  %v61 = vld [vmem:[%s0 + $0x160] sm:$0xff]
  %v62 = vld [vmem:[%s0 + $0x168] sm:$0xff]
  %v63 = vld [vmem:[%s0 + $0x170] sm:$0xff]
  %v64 = vld [vmem:[%s0 + $0x178] sm:$0xff]
  %v65 = vld [vmem:[%s0 + $0x180] sm:$0xff]
  %v66 = vld [vmem:[%s0 + $0x188] sm:$0xff]
  %v67 = vld [vmem:[%s0 + $0x190] sm:$0xff]
  %v68 = vld [vmem:[%s0 + $0x198] sm:$0xff]
  %v69 = vld [vmem:[%s0 + $0x1a0] sm:$0xff]
  %v70 = vld [vmem:[%s0 + $0x1a8] sm:$0xff]
  %v71 = vld [vmem:[%s0 + $0x1b0] sm:$0xff]
  %v72 = vld [vmem:[%s0 + $0x1b8] sm:$0xff]
  %v73 = vld [vmem:[%s0 + $0x1c0] sm:$0xff]
  %v74 = vld [vmem:[%s0 + $0x1c8] sm:$0xff]
  %v75 = vld [vmem:[%s0 + $0x1d0] sm:$0xff]
  %v76 = vld [vmem:[%s0 + $0x1d8] sm:$0xff]
  %v77 = vld [vmem:[%s0 + $0x1e0] sm:$0xff]
  %v78 = vld [vmem:[%s0 + $0x1e8] sm:$0xff]
  %v79 = vld [vmem:[%s0 + $0x1f0] sm:$0xff]
  %v80 = vld [vmem:[%s0 + $0x1f8] sm:$0xff]
  %v81 = vld [vmem:[%s0 + $0x200] sm:$0xff]
  %v82 = vld [vmem:[%s0 + $0x208] sm:$0xff]
  %v83 = vld [vmem:[%s0 + $0x210] sm:$0xff]
  %v84 = vld [vmem:[%s0 + $0x218] sm:$0xff]
  %v85 = vld [vmem:[%s0 + $0x220] sm:$0xff]
  %v86 = vld [vmem:[%s0 + $0x228] sm:$0xff]
  %v87 = vld [vmem:[%s0 + $0x230] sm:$0xff]
  %v88 = vld [vmem:[%s0 + $0x238] sm:$0xff]
  %v89 = vld [vmem:[%s0 + $0x240] sm:$0xff]
  %v90 = vld [vmem:[%s0 + $0x248] sm:$0xff]
  %v91 = vld [vmem:[%s0 + $0x250] sm:$0xff]
  %v92 = vld [vmem:[%s0 + $0x258] sm:$0xff]
  %v93 = vld [vmem:[%s0 + $0x260] sm:$0xff]
  %v94 = vld [vmem:[%s0 + $0x268] sm:$0xff]
  %v95 = vld [vmem:[%s0 + $0x270] sm:$0xff]
  %v96 = vld [vmem:[%s0 + $0x278] sm:$0xff]
  %v97 = vld [vmem:[%s0 + $0x280] sm:$0xff]
  %v98 = vld [vmem:[%s0 + $0x288] sm:$0xff]
  %v99 = vld [vmem:[%s0 + $0x290] sm:$0xff]
  %v100 = vld [vmem:[%s0 + $0x298] sm:$0xff]
  %v101 = vld [vmem:[%s0 + $0x2a0] sm:$0xff]
  %v102 = vld [vmem:[%s0 + $0x2a8] sm:$0xff]
  %v103 = vld [vmem:[%s0 + $0x2b0] sm:$0xff]
  %v104 = vld [vmem:[%s0 + $0x2b8] sm:$0xff]
  %v105 = vld [vmem:[%s0 + $0x2c0] sm:$0xff]
  %v106 = vld [vmem:[%s0 + $0x2c8] sm:$0xff]
  %v107 = vld [vmem:[%s0 + $0x2d0] sm:$0xff]
  %v108 = vld [vmem:[%s0 + $0x2d8] sm:$0xff]
  %v109 = vld [vmem:[%s0 + $0x2e0] sm:$0xff]
  %v110 = vld [vmem:[%s0 + $0x2e8] sm:$0xff]
  %v111 = vld [vmem:[%s0 + $0x2f0] sm:$0xff]
  %v112 = vld [vmem:[%s0 + $0x2f8] sm:$0xff]
  %v113 = vld [vmem:[%s0 + $0x300] sm:$0xff]
  %v114 = vld [vmem:[%s0 + $0x308] sm:$0xff]
  %v115 = vld [vmem:[%s0 + $0x310] sm:$0xff]
  %v116 = vld [vmem:[%s0 + $0x318] sm:$0xff]
  %v117 = vld [vmem:[%s1] sm:$0xff]
  %v118 = vld [vmem:[%s1 + $0x8] sm:$0xff]
  %v119 = vld [vmem:[%s1 + $0x10] sm:$0xff]
  %v120 = vld [vmem:[%s1 + $0x18] sm:$0xff]
  %v121 = vld [vmem:[%s1 + $0x20] sm:$0xff]
  %v122 = vld [vmem:[%s1 + $0x28] sm:$0xff]
  %v123 = vld [vmem:[%s1 + $0x30] sm:$0xff]
  %v124 = vld [vmem:[%s1 + $0x38] sm:$0xff]
  %v125 = vld [vmem:[%s1 + $0x40] sm:$0xff]
  %v126 = vld [vmem:[%s1 + $0x48] sm:$0xff]
  %v127 = vld [vmem:[%s1 + $0x50] sm:$0xff]
  %v128 = vld [vmem:[%s1 + $0x58] sm:$0xff]
  %v129 = vld [vmem:[%s1 + $0x60] sm:$0xff]
  %v130 = vld [vmem:[%s1 + $0x68] sm:$0xff]
  %v131 = vld [vmem:[%s1 + $0x70] sm:$0xff]
  %v132 = vld [vmem:[%s1 + $0x78] sm:$0xff]
  %v133 = vld [vmem:[%s1 + $0x80] sm:$0xff]
  %v134 = vld [vmem:[%s1 + $0x88] sm:$0xff]
  %v135 = vld [vmem:[%s1 + $0x90] sm:$0xff]
  %v136 = vld [vmem:[%s1 + $0x98] sm:$0xff]
  %v137 = vld [vmem:[%s1 + $0xa0] sm:$0xff]
  %v138 = vld [vmem:[%s1 + $0xa8] sm:$0xff]
  %v139 = vld [vmem:[%s1 + $0xb0] sm:$0xff]
  %v140 = vld [vmem:[%s1 + $0xb8] sm:$0xff]
  %v141 = vld [vmem:[%s1 + $0xc0] sm:$0xff]
  %v142 = vld [vmem:[%s1 + $0xc8] sm:$0xff]
  %v143 = vld [vmem:[%s1 + $0xd0] sm:$0xff]
  %v144 = vld [vmem:[%s1 + $0xd8] sm:$0xff]
  %v145 = vld [vmem:[%s1 + $0xe0] sm:$0xff]
  %v146 = vld [vmem:[%s1 + $0xe8] sm:$0xff]
  %v147 = vld [vmem:[%s1 + $0xf0] sm:$0xff]
  %v148 = vld [vmem:[%s1 + $0xf8] sm:$0xff]
  %v149 = vld [vmem:[%s1 + $0x100] sm:$0xff]
  %v150 = vld [vmem:[%s1 + $0x108] sm:$0xff]
  %v151 = vld [vmem:[%s1 + $0x110] sm:$0xff]
  %v152 = vld [vmem:[%s1 + $0x118] sm:$0xff]
  %v153 = vld [vmem:[%s1 + $0x120] sm:$0xff]
  %v154 = vld [vmem:[%s1 + $0x128] sm:$0xff]
  %v155 = vld [vmem:[%s1 + $0x130] sm:$0xff]
  %v156 = vld [vmem:[%s1 + $0x138] sm:$0xff]
  %v157 = vld [vmem:[%s1 + $0x140] sm:$0xff]
  %v158 = vld [vmem:[%s1 + $0x148] sm:$0xff]
  %v159 = vld [vmem:[%s1 + $0x150] sm:$0xff]
  %v160 = vld [vmem:[%s1 + $0x158] sm:$0xff]
  %v161 = vld [vmem:[%s1 + $0x160] sm:$0xff]
  %v162 = vld [vmem:[%s1 + $0x168] sm:$0xff]
  %v163 = vld [vmem:[%s1 + $0x170] sm:$0xff]
  %v164 = vld [vmem:[%s1 + $0x178] sm:$0xff]
  %v165 = vld [vmem:[%s1 + $0x180] sm:$0xff]
  %v166 = vld [vmem:[%s1 + $0x188] sm:$0xff]
  %v167 = vld [vmem:[%s1 + $0x190] sm:$0xff]
  %v168 = vld [vmem:[%s1 + $0x198] sm:$0xff]
  %v169 = vld [vmem:[%s1 + $0x1a0] sm:$0xff]
  %v170 = vld [vmem:[%s1 + $0x1a8] sm:$0xff]
  %v171 = vld [vmem:[%s1 + $0x1b0] sm:$0xff]
  %v172 = vld [vmem:[%s1 + $0x1b8] sm:$0xff]
  %v173 = vld [vmem:[%s1 + $0x1c0] sm:$0xff]
  %v174 = vld [vmem:[%s1 + $0x1c8] sm:$0xff]
  %v175 = vld [vmem:[%s1 + $0x1d0] sm:$0xff]
  %v176 = vld [vmem:[%s1 + $0x1d8] sm:$0xff]
  %v177 = vld [vmem:[%s1 + $0x1e0] sm:$0xff]
  %v178 = vld [vmem:[%s1 + $0x1e8] sm:$0xff]
  %v179 = vld [vmem:[%s1 + $0x1f0] sm:$0xff]
  %v180 = vld [vmem:[%s1 + $0x1f8] sm:$0xff]
  %v181 = vld [vmem:[%s1 + $0x200] sm:$0xff]
  %v182 = vld [vmem:[%s1 + $0x208] sm:$0xff]
  %v183 = vld [vmem:[%s1 + $0x210] sm:$0xff]
  %v184 = vld [vmem:[%s1 + $0x218] sm:$0xff]
  %v185 = vld [vmem:[%s1 + $0x220] sm:$0xff]
  %v186 = vld [vmem:[%s1 + $0x228] sm:$0xff]
  %v187 = vld [vmem:[%s1 + $0x230] sm:$0xff]
  %v188 = vld [vmem:[%s1 + $0x238] sm:$0xff]
  %v189 = vld [vmem:[%s1 + $0x240] sm:$0xff]
  %v190 = vld [vmem:[%s1 + $0x248] sm:$0xff]
  %v191 = vld [vmem:[%s1 + $0x250] sm:$0xff]
  %v192 = vld [vmem:[%s1 + $0x258] sm:$0xff]
  %v193 = vld [vmem:[%s1 + $0x260] sm:$0xff]
  %v194 = vld [vmem:[%s1 + $0x268] sm:$0xff]
  %v195 = vld [vmem:[%s1 + $0x270] sm:$0xff]
  %v196 = vld [vmem:[%s1 + $0x278] sm:$0xff]
  %v197 = vld [vmem:[%s1 + $0x280] sm:$0xff]
  %v198 = vld [vmem:[%s1 + $0x288] sm:$0xff]
  %v199 = vld [vmem:[%s1 + $0x290] sm:$0xff]
  %v200 = vld [vmem:[%s1 + $0x298] sm:$0xff]
  %v201 = vld [vmem:[%s1 + $0x2a0] sm:$0xff]
  %v202 = vld [vmem:[%s1 + $0x2a8] sm:$0xff]
  %v203 = vld [vmem:[%s1 + $0x2b0] sm:$0xff]
  %v204 = vld [vmem:[%s1 + $0x2b8] sm:$0xff]
  %v205 = vld [vmem:[%s1 + $0x2c0] sm:$0xff]
  %v206 = vld [vmem:[%s1 + $0x2c8] sm:$0xff]
  %v207 = vld [vmem:[%s1 + $0x2d0] sm:$0xff]
  %v208 = vld [vmem:[%s1 + $0x2d8] sm:$0xff]
  %v209 = vld [vmem:[%s1 + $0x2e0] sm:$0xff]
  %v210 = vld [vmem:[%s1 + $0x2e8] sm:$0xff]
  %v211 = vld [vmem:[%s1 + $0x2f0] sm:$0xff]
  %v212 = vld [vmem:[%s1 + $0x2f8] sm:$0xff]
  %v213 = vld [vmem:[%s1 + $0x300] sm:$0xff]
  %v214 = vld [vmem:[%s1 + $0x308] sm:$0xff]
  %v215 = vld [vmem:[%s1 + $0x310] sm:$0xff]
  %v216 = vld [vmem:[%s1 + $0x318] sm:$0xff]
  %v217 = vld [vmem:[%s1 + $0x320] sm:$0xff]
  %v218 = vld [vmem:[%s1 + $0x328] sm:$0xff]
  %v219 = vld [vmem:[%s1 + $0x330] sm:$0xff]
  %v220 = vld [vmem:[%s1 + $0x338] sm:$0xff]
  %v221 = vld [vmem:[%s1 + $0x340] sm:$0xff]
  %v222 = vld [vmem:[%s1 + $0x348] sm:$0xff]
  %v223 = vld [vmem:[%s1 + $0x350] sm:$0xff]
  %v224 = vld [vmem:[%s1 + $0x358] sm:$0xff]
  %v225 = vld [vmem:[%s1 + $0x360] sm:$0xff]
  %v226 = vld [vmem:[%s1 + $0x368] sm:$0xff]
  %v227 = vld [vmem:[%s1 + $0x370] sm:$0xff]
  %v228 = vld [vmem:[%s1 + $0x378] sm:$0xff]
  %v229 = vld [vmem:[%s1 + $0x380] sm:$0xff]
  %v230 = vld [vmem:[%s1 + $0x388] sm:$0xff]
  %v231 = vld [vmem:[%s1 + $0x390] sm:$0xff]
  %v232 = vld [vmem:[%s1 + $0x398] sm:$0xff]
  %v233 = vld [vmem:[%s1 + $0x3a0] sm:$0xff]
  %v234 = vld [vmem:[%s1 + $0x3a8] sm:$0xff]
  %v235 = vld [vmem:[%s1 + $0x3b0] sm:$0xff]
  %v236 = vld [vmem:[%s1 + $0x3b8] sm:$0xff]
  %v237 = vld [vmem:[%s1 + $0x3c0] sm:$0xff]
  %v238 = vld [vmem:[%s1 + $0x3c8] sm:$0xff]
  %v239 = vld [vmem:[%s1 + $0x3d0] sm:$0xff]
  %v240 = vld [vmem:[%s1 + $0x3d8] sm:$0xff]
  %v241 = vld [vmem:[%s1 + $0x3e0] sm:$0xff]
  %v242 = vld [vmem:[%s1 + $0x3e8] sm:$0xff]
  %v243 = vld [vmem:[%s1 + $0x3f0] sm:$0xff]
  %v244 = vld [vmem:[%s1 + $0x3f8] sm:$0xff]
  %v245 = vld [vmem:[%s1 + $0x400] sm:$0xff]
  %v246 = vld [vmem:[%s1 + $0x408] sm:$0xff]
  %v247 = vld [vmem:[%s1 + $0x410] sm:$0xff]
  %v248 = vld [vmem:[%s1 + $0x418] sm:$0xff]
  %v249 = vld [vmem:[%s1 + $0x420] sm:$0xff]
  %v250 = vld [vmem:[%s1 + $0x428] sm:$0xff]
  %v251 = vld [vmem:[%s1 + $0x430] sm:$0xff]
  %v252 = vld [vmem:[%s1 + $0x438] sm:$0xff]
  %v253 = vld [vmem:[%s1 + $0x440] sm:$0xff]
  %v254 = vld [vmem:[%s1 + $0x448] sm:$0xff]
  %v255 = vld [vmem:[%s1 + $0x450] sm:$0xff]
  %v256 = vld [vmem:[%s1 + $0x458] sm:$0xff]
  %v257 = vld [vmem:[%s1 + $0x460] sm:$0xff]
  %v258 = vld [vmem:[%s1 + $0x468] sm:$0xff]
  %v259 = vld [vmem:[%s1 + $0x470] sm:$0xff]
  %v260 = vld [vmem:[%s1 + $0x478] sm:$0xff]
  %v261 = vld [vmem:[%s1 + $0x480] sm:$0xff]
  %v262 = vld [vmem:[%s1 + $0x488] sm:$0xff]
  %v263 = vld [vmem:[%s1 + $0x490] sm:$0xff]
  %v264 = vld [vmem:[%s1 + $0x498] sm:$0xff]
  %v265 = vld [vmem:[%s1 + $0x4a0] sm:$0xff]
  %v266 = vld [vmem:[%s1 + $0x4a8] sm:$0xff]
  %v267 = vld [vmem:[%s1 + $0x4b0] sm:$0xff]
  %v268 = vld [vmem:[%s1 + $0x4b8] sm:$0xff]
  %v269 = vld [vmem:[%s1 + $0x4c0] sm:$0xff]
  %v270 = vld [vmem:[%s1 + $0x4c8] sm:$0xff]
  %v271 = vld [vmem:[%s1 + $0x4d0] sm:$0xff]
  %v272 = vld [vmem:[%s1 + $0x4d8] sm:$0xff]
  %v273 = vld [vmem:[%s1 + $0x4e0] sm:$0xff]
  %v274 = vld [vmem:[%s1 + $0x4e8] sm:$0xff]
  %v275 = vld [vmem:[%s1 + $0x4f0] sm:$0xff]
  %v276 = vld [vmem:[%s1 + $0x4f8] sm:$0xff]
  %v277 = vld [vmem:[%s1 + $0x500] sm:$0xff]
  %v278 = vld [vmem:[%s1 + $0x508] sm:$0xff]
  %v279 = vld [vmem:[%s1 + $0x510] sm:$0xff]
  %v280 = vld [vmem:[%s1 + $0x518] sm:$0xff]
  %v281 = vld [vmem:[%s1 + $0x520] sm:$0xff]
  %v282 = vld [vmem:[%s1 + $0x528] sm:$0xff]
  %v283 = vld [vmem:[%s1 + $0x530] sm:$0xff]
  %v284 = vld [vmem:[%s1 + $0x538] sm:$0xff]
  %v285 = vld [vmem:[%s1 + $0x540] sm:$0xff]
  %v286 = vld [vmem:[%s1 + $0x548] sm:$0xff]
  %v287 = vld [vmem:[%s1 + $0x550] sm:$0xff]
  %v288 = vld [vmem:[%s1 + $0x558] sm:$0xff]
  %v289 = vld [vmem:[%s1 + $0x560] sm:$0xff]
  %v290 = vld [vmem:[%s1 + $0x568] sm:$0xff]
  %v291 = vld [vmem:[%s1 + $0x570] sm:$0xff]
  %v292 = vld [vmem:[%s1 + $0x578] sm:$0xff]
  %v293 = vld [vmem:[%s1 + $0x580] sm:$0xff]
  %v294 = vld [vmem:[%s1 + $0x588] sm:$0xff]
  %v295 = vld [vmem:[%s1 + $0x590] sm:$0xff]
  %v296 = vld [vmem:[%s1 + $0x598] sm:$0xff]
  %v297 = vld [vmem:[%s1 + $0x5a0] sm:$0xff]
  %v298 = vld [vmem:[%s1 + $0x5a8] sm:$0xff]
  %v299 = vld [vmem:[%s1 + $0x5b0] sm:$0xff]
  %v300 = vld [vmem:[%s1 + $0x5b8] sm:$0xff]
  %v301 = vld [vmem:[%s1 + $0x5c0] sm:$0xff]
  %v302 = vld [vmem:[%s1 + $0x5c8] sm:$0xff]
  %v303 = vld [vmem:[%s1 + $0x5d0] sm:$0xff]
  %v304 = vld [vmem:[%s1 + $0x5d8] sm:$0xff]
  %v305 = vld [vmem:[%s1 + $0x5e0] sm:$0xff]
  %v306 = vld [vmem:[%s1 + $0x5e8] sm:$0xff]
  %v307 = vld [vmem:[%s1 + $0x5f0] sm:$0xff]
  %v308 = vld [vmem:[%s1 + $0x5f8] sm:$0xff]
  %v309 = vld [vmem:[%s1 + $0x600] sm:$0xff]
  %v310 = vld [vmem:[%s1 + $0x608] sm:$0xff]
  %v311 = vld [vmem:[%s1 + $0x610] sm:$0xff]
  %v312 = vld [vmem:[%s1 + $0x618] sm:$0xff]
  %v313 = vld [vmem:[%s1 + $0x620] sm:$0xff]
  %v314 = vld [vmem:[%s1 + $0x628] sm:$0xff]
  %v315 = vld [vmem:[%s1 + $0x630] sm:$0xff]
  %v316 = vld [vmem:[%s1 + $0x638] sm:$0xff]
  %v317 = vld [vmem:[%s1 + $0x640] sm:$0xff]
  %v318 = vld [vmem:[%s1 + $0x648] sm:$0xff]
  %v319 = vld [vmem:[%s1 + $0x650] sm:$0xff]
  %v320 = vld [vmem:[%s1 + $0x658] sm:$0xff]
  %v321 = vld [vmem:[%s1 + $0x660] sm:$0xff]
  %v322 = vld [vmem:[%s1 + $0x668] sm:$0xff]
  %v323 = vld [vmem:[%s1 + $0x670] sm:$0xff]
  %v324 = vld [vmem:[%s1 + $0x678] sm:$0xff]
  %v325 = vld [vmem:[%s1 + $0x680] sm:$0xff]
  %v326 = vld [vmem:[%s1 + $0x688] sm:$0xff]
  %v327 = vld [vmem:[%s1 + $0x690] sm:$0xff]
  %v328 = vld [vmem:[%s1 + $0x698] sm:$0xff]
  %v329 = vld [vmem:[%s1 + $0x6a0] sm:$0xff]
  %v330 = vld [vmem:[%s1 + $0x6a8] sm:$0xff]
  %v331 = vld [vmem:[%s1 + $0x6b0] sm:$0xff]
  %v332 = vld [vmem:[%s1 + $0x6b8] sm:$0xff]
  %v333 = vld [vmem:[%s1 + $0x6c0] sm:$0xff]
  %v334 = vld [vmem:[%s1 + $0x6c8] sm:$0xff]
  %v335 = vld [vmem:[%s1 + $0x6d0] sm:$0xff]
  %v336 = vld [vmem:[%s1 + $0x6d8] sm:$0xff]
  %v337 = vld [vmem:[%s1 + $0x6e0] sm:$0xff]
  %v338 = vld [vmem:[%s1 + $0x6e8] sm:$0xff]
  %v339 = vld [vmem:[%s1 + $0x6f0] sm:$0xff]
  %v340 = vld [vmem:[%s1 + $0x6f8] sm:$0xff]
  %v341 = vld [vmem:[%s1 + $0x700] sm:$0xff]
  %v342 = vld [vmem:[%s1 + $0x708] sm:$0xff]
  %v343 = vld [vmem:[%s1 + $0x710] sm:$0xff]
  %v344 = vld [vmem:[%s1 + $0x718] sm:$0xff]
  %v345 = vld [vmem:[%s1 + $0x720] sm:$0xff]
  %v346 = vld [vmem:[%s1 + $0x728] sm:$0xff]
  %v347 = vld [vmem:[%s1 + $0x730] sm:$0xff]
  %v348 = vld [vmem:[%s1 + $0x738] sm:$0xff]
  %v349 = vld [vmem:[%s1 + $0x740] sm:$0xff]
  %v350 = vld [vmem:[%s1 + $0x748] sm:$0xff]
  %v351 = vld [vmem:[%s1 + $0x750] sm:$0xff]
  %v352 = vld [vmem:[%s1 + $0x758] sm:$0xff]
  %v353 = vld [vmem:[%s1 + $0x760] sm:$0xff]
  %v354 = vld [vmem:[%s1 + $0x768] sm:$0xff]
  %v355 = vld [vmem:[%s1 + $0x770] sm:$0xff]
  %v356 = vld [vmem:[%s1 + $0x778] sm:$0xff]
  %v357 = vld [vmem:[%s1 + $0x780] sm:$0xff]
  %v358 = vld [vmem:[%s1 + $0x788] sm:$0xff]
  %v359 = vld [vmem:[%s1 + $0x790] sm:$0xff]
  %v360 = vld [vmem:[%s1 + $0x798] sm:$0xff]
  %v361 = vld [vmem:[%s1 + $0x7a0] sm:$0xff]
  %v362 = vld [vmem:[%s1 + $0x7a8] sm:$0xff]
  %v363 = vld [vmem:[%s1 + $0x7b0] sm:$0xff]
  %v364 = vld [vmem:[%s1 + $0x7b8] sm:$0xff]
  %v365 = vld [vmem:[%s1 + $0x7c0] sm:$0xff]
  %v366 = vld [vmem:[%s1 + $0x7c8] sm:$0xff]
  %v367 = vld [vmem:[%s1 + $0x7d0] sm:$0xff]
  %v368 = vld [vmem:[%s1 + $0x7d8] sm:$0xff]
  %v369 = vld [vmem:[%s1 + $0x7e0] sm:$0xff]
  %v370 = vld [vmem:[%s1 + $0x7e8] sm:$0xff]
  %v371 = vld [vmem:[%s1 + $0x7f0] sm:$0xff]
  %v372 = vld [vmem:[%s1 + $0x7f8] sm:$0xff]
  %v373 = vld [vmem:[%s1 + $0x800] sm:$0xff]
  %v374 = vld [vmem:[%s1 + $0x808] sm:$0xff]
  %v375 = vld [vmem:[%s1 + $0x810] sm:$0xff]
  %v376 = vld [vmem:[%s1 + $0x818] sm:$0xff]
  %v377 = vld [vmem:[%s1 + $0x820] sm:$0xff]
  %v378 = vld [vmem:[%s1 + $0x828] sm:$0xff]
  %v379 = vld [vmem:[%s1 + $0x830] sm:$0xff]
  %v380 = vld [vmem:[%s1 + $0x838] sm:$0xff]
  %v381 = vld [vmem:[%s1 + $0x840] sm:$0xff]
  %v382 = vld [vmem:[%s1 + $0x848] sm:$0xff]
  %v383 = vld [vmem:[%s1 + $0x850] sm:$0xff]
  %v384 = vld [vmem:[%s1 + $0x858] sm:$0xff]
  %v385 = vld [vmem:[%s1 + $0x860] sm:$0xff]
  %v386 = vld [vmem:[%s1 + $0x868] sm:$0xff]
  %v387 = vld [vmem:[%s1 + $0x870] sm:$0xff]
  %v388 = vld [vmem:[%s1 + $0x878] sm:$0xff]
  %v389 = vld [vmem:[%s1 + $0x880] sm:$0xff]
  %v390 = vld [vmem:[%s1 + $0x888] sm:$0xff]
  %v391 = vld [vmem:[%s1 + $0x890] sm:$0xff]
  %v392 = vld [vmem:[%s1 + $0x898] sm:$0xff]
  %v393 = vld [vmem:[%s1 + $0x8a0] sm:$0xff]
  %v394 = vld [vmem:[%s1 + $0x8a8] sm:$0xff]
  %v395 = vld [vmem:[%s1 + $0x8b0] sm:$0xff]
  %v396 = vld [vmem:[%s1 + $0x8b8] sm:$0xff]
  %v397 = vld [vmem:[%s1 + $0x8c0] sm:$0xff]
  %v398 = vld [vmem:[%s1 + $0x8c8] sm:$0xff]
  %v399 = vld [vmem:[%s1 + $0x8d0] sm:$0xff]
  %v400 = vld [vmem:[%s1 + $0x8d8] sm:$0xff]
  %v401 = vld [vmem:[%s1 + $0x8e0] sm:$0xff]
  %v402 = vld [vmem:[%s1 + $0x8e8] sm:$0xff]
  %v403 = vld [vmem:[%s1 + $0x8f0] sm:$0xff]
  %v404 = vld [vmem:[%s1 + $0x8f8] sm:$0xff]
  %v405 = vld [vmem:[%s1 + $0x900] sm:$0xff]
  %v406 = vld [vmem:[%s1 + $0x908] sm:$0xff]
  %v407 = vld [vmem:[%s1 + $0x910] sm:$0xff]
  %v408 = vld [vmem:[%s1 + $0x918] sm:$0xff]
  %v409 = vld [vmem:[%s1 + $0x920] sm:$0xff]
  %v410 = vld [vmem:[%s1 + $0x928] sm:$0xff]
  %v411 = vld [vmem:[%s1 + $0x930] sm:$0xff]
  %v412 = vld [vmem:[%s1 + $0x938] sm:$0xff]
  %v413 = vld [vmem:[%s1 + $0x940] sm:$0xff]
  %v414 = vld [vmem:[%s1 + $0x948] sm:$0xff]
  %v415 = vld [vmem:[%s1 + $0x950] sm:$0xff]
  %v416 = vld [vmem:[%s1 + $0x958] sm:$0xff]
  %v417 = vld [vmem:[%s1 + $0x960] sm:$0xff]
  %v418 = vld [vmem:[%s1 + $0x968] sm:$0xff]
  %v419 = vld [vmem:[%s1 + $0x970] sm:$0xff]
  %v420 = vld [vmem:[%s1 + $0x978] sm:$0xff]
  %v421 = vld [vmem:[%s1 + $0x980] sm:$0xff]
  %v422 = vld [vmem:[%s1 + $0x988] sm:$0xff]
  %v423 = vld [vmem:[%s1 + $0x990] sm:$0xff]
  %v424 = vld [vmem:[%s1 + $0x998] sm:$0xff]
  %v425 = vld [vmem:[%s1 + $0x9a0] sm:$0xff]
  %v426 = vld [vmem:[%s1 + $0x9a8] sm:$0xff]
  %v427 = vld [vmem:[%s1 + $0x9b0] sm:$0xff]
  %v428 = vld [vmem:[%s1 + $0x9b8] sm:$0xff]
  %v429 = vld [vmem:[%s1 + $0x9c0] sm:$0xff]
  %v430 = vld [vmem:[%s1 + $0x9c8] sm:$0xff]
  %v431 = vld [vmem:[%s1 + $0x9d0] sm:$0xff]
  %v432 = vld [vmem:[%s1 + $0x9d8] sm:$0xff]
  %v433 = vld [vmem:[%s1 + $0x9e0] sm:$0xff]
  %v434 = vld [vmem:[%s1 + $0x9e8] sm:$0xff]
  %v435 = vld [vmem:[%s1 + $0x9f0] sm:$0xff]
  %v436 = vld [vmem:[%s1 + $0x9f8] sm:$0xff]
  %v437 = vld [vmem:[%s1 + $0xa00] sm:$0xff]
  %v438 = vld [vmem:[%s1 + $0xa08] sm:$0xff]
  %v439 = vld [vmem:[%s1 + $0xa10] sm:$0xff]
  %v440 = vld [vmem:[%s1 + $0xa18] sm:$0xff]
  %v441 = vld [vmem:[%s1 + $0xa20] sm:$0xff]
  %v442 = vld [vmem:[%s1 + $0xa28] sm:$0xff]
  %v443 = vld [vmem:[%s1 + $0xa30] sm:$0xff]
  %v444 = vld [vmem:[%s1 + $0xa38] sm:$0xff]
  %v445 = vld [vmem:[%s1 + $0xa40] sm:$0xff]
  %v446 = vld [vmem:[%s1 + $0xa48] sm:$0xff]
  %v447 = vld [vmem:[%s1 + $0xa50] sm:$0xff]
  %v448 = vld [vmem:[%s1 + $0xa58] sm:$0xff]
  %v449 = vld [vmem:[%s1 + $0xa60] sm:$0xff]
  %v450 = vld [vmem:[%s1 + $0xa68] sm:$0xff]
  %v451 = vld [vmem:[%s1 + $0xa70] sm:$0xff]
  %v452 = vld [vmem:[%s1 + $0xa78] sm:$0xff]
  %v453 = vld [vmem:[%s1 + $0xa80] sm:$0xff]
  %v454 = vld [vmem:[%s1 + $0xa88] sm:$0xff]
  %v455 = vld [vmem:[%s1 + $0xa90] sm:$0xff]
  %v456 = vld [vmem:[%s1 + $0xa98] sm:$0xff]
  %v457 = vld [vmem:[%s1 + $0xaa0] sm:$0xff]
  %v458 = vld [vmem:[%s1 + $0xaa8] sm:$0xff]
  %v459 = vld [vmem:[%s1 + $0xab0] sm:$0xff]
  %v460 = vld [vmem:[%s1 + $0xab8] sm:$0xff]
  %v461 = vld [vmem:[%s1 + $0xac0] sm:$0xff]
  %v462 = vld [vmem:[%s1 + $0xac8] sm:$0xff]
  %v463 = vld [vmem:[%s1 + $0xad0] sm:$0xff]
  %v464 = vld [vmem:[%s1 + $0xad8] sm:$0xff]
  %v465 = vld [vmem:[%s1 + $0xae0] sm:$0xff]
  %v466 = vld [vmem:[%s1 + $0xae8] sm:$0xff]
  %v467 = vld [vmem:[%s1 + $0xaf0] sm:$0xff]
  %v468 = vld [vmem:[%s1 + $0xaf8] sm:$0xff]
  %v469 = vld [vmem:[%s1 + $0xb00] sm:$0xff]
  %v470 = vld [vmem:[%s1 + $0xb08] sm:$0xff]
  %v471 = vld [vmem:[%s1 + $0xb10] sm:$0xff]
  %v472 = vld [vmem:[%s1 + $0xb18] sm:$0xff]
  %v473 = vld [vmem:[%s1 + $0xb20] sm:$0xff]
  %v474 = vld [vmem:[%s1 + $0xb28] sm:$0xff]
  %v475 = vld [vmem:[%s1 + $0xb30] sm:$0xff]
  %v476 = vld [vmem:[%s1 + $0xb38] sm:$0xff]
  %v477 = vld [vmem:[%s1 + $0xb40] sm:$0xff]
  %v478 = vld [vmem:[%s1 + $0xb48] sm:$0xff]
  %v479 = vld [vmem:[%s1 + $0xb50] sm:$0xff]
  %v480 = vld [vmem:[%s1 + $0xb58] sm:$0xff]
  %v481 = vld [vmem:[%s1 + $0xb60] sm:$0xff]
  %v482 = vld [vmem:[%s1 + $0xb68] sm:$0xff]
  %v483 = vld [vmem:[%s1 + $0xb70] sm:$0xff]
  %v484 = vld [vmem:[%s1 + $0xb78] sm:$0xff]
  %v485 = vld [vmem:[%s1 + $0xb80] sm:$0xff]
  %v486 = vld [vmem:[%s1 + $0xb88] sm:$0xff]
  %v487 = vld [vmem:[%s1 + $0xb90] sm:$0xff]
  %v488 = vld [vmem:[%s1 + $0xb98] sm:$0xff]
  %v489 = vld [vmem:[%s1 + $0xba0] sm:$0xff]
  %v490 = vld [vmem:[%s1 + $0xba8] sm:$0xff]
  %v491 = vld [vmem:[%s1 + $0xbb0] sm:$0xff]
  %v492 = vld [vmem:[%s1 + $0xbb8] sm:$0xff]
  %v493 = vld [vmem:[%s1 + $0xbc0] sm:$0xff]
  %v494 = vld [vmem:[%s1 + $0xbc8] sm:$0xff]
  %v495 = vld [vmem:[%s1 + $0xbd0] sm:$0xff]
  %v496 = vld [vmem:[%s1 + $0xbd8] sm:$0xff]
  %v497 = vld [vmem:[%s1 + $0xbe0] sm:$0xff]
  %v498 = vld [vmem:[%s1 + $0xbe8] sm:$0xff]
  %v499 = vld [vmem:[%s1 + $0xbf0] sm:$0xff]
  %v500 = vld [vmem:[%s1 + $0xbf8] sm:$0xff]
  %v501 = vld [vmem:[%s1 + $0xc00] sm:$0xff]
  %v502 = vld [vmem:[%s1 + $0xc08] sm:$0xff]
  %v503 = vld [vmem:[%s1 + $0xc10] sm:$0xff]
  %v504 = vld [vmem:[%s1 + $0xc18] sm:$0xff]
  %v505 = vld [vmem:[%s1 + $0xc20] sm:$0xff]
  %v506 = vld [vmem:[%s1 + $0xc28] sm:$0xff]
  %v507 = vld [vmem:[%s1 + $0xc30] sm:$0xff]
  %v508 = vld [vmem:[%s1 + $0xc38] sm:$0xff]
  %vm509 = vcmask 523264
  %v511 = vsel %vm509, %v41, 0
  %v514 = vsel %vm509, %v66, 0
  %v517 = vsel %vm509, %v91, 0
  %v520 = vsel %vm509, %v116, 0
  %522 = vmatprep.subr.mxu0 0.0
  %523 = vmatpush1.msra.mxu0 %v117
  %524 = vmatprep.subr.mxu0 0.0
  %525 = vmatpush1.msra.mxu0 %v118
  %526 = vmatprep.subr.mxu0 0.0
  %527 = vmatpush1.msra.mxu0 %v119
  %528 = vmatprep.subr.mxu0 0.0
  %529 = vmatpush1.msra.mxu0 %v120
  %530 = vmatprep.subr.mxu0 0.0
  %531 = vmatpush1.msra.mxu0 %v121
  %532 = vmatprep.subr.mxu0 0.0
  %533 = vmatpush1.msra.mxu0 %v122
  %534 = vmatprep.subr.mxu0 0.0
  %535 = vmatpush1.msra.mxu0 %v123
  %536 = vmatprep.subr.mxu0 0.0
  %537 = vmatpush1.msra.mxu0 %v124
  %538 = vmatprep.subr.mxu0 0.0
  %539 = vmatpush1.msra.mxu0 %v125
  %540 = vmatprep.subr.mxu0 0.0
  %541 = vmatpush1.msra.mxu0 %v126
  %542 = vmatprep.subr.mxu0 0.0
  %543 = vmatpush1.msra.mxu0 %v127
  %544 = vmatprep.subr.mxu0 0.0
  %545 = vmatpush1.msra.mxu0 %v128
  %546 = vmatprep.subr.mxu0 0.0
  %547 = vmatpush1.msra.mxu0 %v129
  %548 = vmatprep.subr.mxu0 0.0
  %549 = vmatpush1.msra.mxu0 %v130
  %550 = vmatprep.subr.mxu0 0.0
  %551 = vmatpush1.msra.mxu0 %v131
  %552 = vmatprep.subr.mxu0 0.0
  %553 = vmatpush1.msra.mxu0 %v132
  %554 = vmatprep.subr.mxu0 0.0
  %555 = vmatpush1.msra.mxu0 %v133
  %556 = vmatprep.subr.mxu0 0.0
  %557 = vmatpush1.msra.mxu0 %v134
  %558 = vmatprep.subr.mxu0 0.0
  %559 = vmatpush1.msra.mxu0 %v135
  %560 = vmatprep.subr.mxu0 0.0
  %561 = vmatpush1.msra.mxu0 %v136
  %562 = vmatprep.subr.mxu0 0.0
  %563 = vmatpush1.msra.mxu0 %v137
  %564 = vmatprep.subr.mxu0 0.0
  %565 = vmatpush1.msra.mxu0 %v138
  %566 = vmatprep.subr.mxu0 0.0
  %567 = vmatpush1.msra.mxu0 %v139
  %568 = vmatprep.subr.mxu0 0.0
  %569 = vmatpush1.msra.mxu0 %v140
  %570 = vmatprep.subr.mxu0 0.0
  %571 = vmatpush1.msra.mxu0 %v141
  %572 = vmatprep.subr.mxu0 0.0
  %573 = vmatpush1.msra.mxu0 %v142
  %574 = vmatprep.subr.mxu0 0.0
  %575 = vmatpush1.msra.mxu0 %v143
  %576 = vmatprep.subr.mxu0 0.0
  %577 = vmatpush1.msra.mxu0 %v144
  %578 = vmatprep.subr.mxu0 0.0
  %579 = vmatpush1.msra.mxu0 %v145
  %580 = vmatprep.subr.mxu0 0.0
  %581 = vmatpush1.msra.mxu0 %v146
  %582 = vmatprep.subr.mxu0 0.0
  %583 = vmatpush1.msra.mxu0 %v147
  %584 = vmatprep.subr.mxu0 0.0
  %585 = vmatpush1.msra.mxu0 %v148
  %586 = vmatprep.mubr.f32.mxu0 %v18
  %587 = vmatmul.mubr.f32.gmra.mrb[0].mxu0 %v17
  %v588 = vpop.f32.mrb[0].mxu0
  %v589 = vadd.f32 0.0, %v588
  %v590 = vpop.f32.mrb[0].mxu0
  %591 = vmatprep.mubr.f32.mxu0 %v43
  %592 = vmatmul.mubr.f32.gmra.mrb[0].mxu0 %v42
  %v593 = vpop.f32.mrb[0].mxu0
  %v594 = vadd.f32 0.0, %v593
  %v595 = vpop.f32.mrb[0].mxu0
  %596 = vmatprep.mubr.f32.mxu0 %v68
  %597 = vmatmul.mubr.f32.gmra.mrb[0].mxu0 %v67
  %v598 = vpop.f32.mrb[0].mxu0
  %v599 = vadd.f32 0.0, %v598
  %v600 = vpop.f32.mrb[0].mxu0
  %601 = vmatprep.mubr.f32.mxu0 %v93
  %602 = vmatmul.mubr.f32.gmra.mrb[0].mxu0 %v92
  %v603 = vpop.f32.mrb[0].mxu0
  %v604 = vadd.f32 0.0, %v603
  %v605 = vpop.f32.mrb[0].mxu0
  %606 = vdwg.mxu0
  %607 = vmatprep.subr.mxu0 0.0
  %608 = vmatpush1.msra.mxu0 %v149
  %609 = vmatprep.subr.mxu0 0.0
  %610 = vmatpush1.msra.mxu0 %v150
  %611 = vmatprep.subr.mxu0 0.0
  %612 = vmatpush1.msra.mxu0 %v151
  %613 = vmatprep.subr.mxu0 0.0
  %614 = vmatpush1.msra.mxu0 %v152
  %615 = vmatprep.subr.mxu0 0.0
  %616 = vmatpush1.msra.mxu0 %v153
  %617 = vmatprep.subr.mxu0 0.0
  %618 = vmatpush1.msra.mxu0 %v154
  %619 = vmatprep.subr.mxu0 0.0
  %620 = vmatpush1.msra.mxu0 %v155
  %621 = vmatprep.subr.mxu0 0.0
  %622 = vmatpush1.msra.mxu0 %v156
  %623 = vmatprep.subr.mxu0 0.0
  %624 = vmatpush1.msra.mxu0 %v157
  %625 = vmatprep.subr.mxu0 0.0
  %626 = vmatpush1.msra.mxu0 %v158
  %627 = vmatprep.subr.mxu0 0.0
  %628 = vmatpush1.msra.mxu0 %v159
  %629 = vmatprep.subr.mxu0 0.0
  %630 = vmatpush1.msra.mxu0 %v160
  %631 = vmatprep.subr.mxu0 0.0
  %632 = vmatpush1.msra.mxu0 %v161
  %633 = vmatprep.subr.mxu0 0.0
  %634 = vmatpush1.msra.mxu0 %v162
  %635 = vmatprep.subr.mxu0 0.0
  %636 = vmatpush1.msra.mxu0 %v163
  %637 = vmatprep.subr.mxu0 0.0
  %638 = vmatpush1.msra.mxu0 %v164
  %639 = vmatprep.subr.mxu0 0.0
  %640 = vmatpush1.msra.mxu0 %v165
  %641 = vmatprep.subr.mxu0 0.0
  %642 = vmatpush1.msra.mxu0 %v166
  %643 = vmatprep.subr.mxu0 0.0
  %644 = vmatpush1.msra.mxu0 %v167
  %645 = vmatprep.subr.mxu0 0.0
  %646 = vmatpush1.msra.mxu0 %v168
  %647 = vmatprep.subr.mxu0 0.0
  %648 = vmatpush1.msra.mxu0 %v169
  %649 = vmatprep.subr.mxu0 0.0
  %650 = vmatpush1.msra.mxu0 %v170
  %651 = vmatprep.subr.mxu0 0.0
  %652 = vmatpush1.msra.mxu0 %v171
  %653 = vmatprep.subr.mxu0 0.0
  %654 = vmatpush1.msra.mxu0 %v172
  %655 = vmatprep.subr.mxu0 0.0
  %656 = vmatpush1.msra.mxu0 %v173
  %657 = vmatprep.subr.mxu0 0.0
  %658 = vmatpush1.msra.mxu0 %v174
  %659 = vmatprep.subr.mxu0 0.0
  %660 = vmatpush1.msra.mxu0 %v175
  %661 = vmatprep.subr.mxu0 0.0
  %662 = vmatpush1.msra.mxu0 %v176
  %663 = vmatprep.subr.mxu0 0.0
  %664 = vmatpush1.msra.mxu0 %v177
  %665 = vmatprep.subr.mxu0 0.0
  %666 = vmatpush1.msra.mxu0 %v178
  %667 = vmatprep.subr.mxu0 0.0
  %668 = vmatpush1.msra.mxu0 %v179
  %669 = vmatprep.subr.mxu0 0.0
  %670 = vmatpush1.msra.mxu0 %v180
  %671 = vmatprep.mubr.f32.mxu0 %v20
  %672 = vmatmul.mubr.f32.gmra.mrb[0].mxu0 %v19
  %v673 = vpop.f32.mrb[0].mxu0
  %v674 = vadd.f32 %v589, %v673
  %v675 = vpop.f32.mrb[0].mxu0
  %676 = vmatprep.mubr.f32.mxu0 %v45
  %677 = vmatmul.mubr.f32.gmra.mrb[0].mxu0 %v44
  %v678 = vpop.f32.mrb[0].mxu0
  %v679 = vadd.f32 %v594, %v678
  %v680 = vpop.f32.mrb[0].mxu0
  %681 = vmatprep.mubr.f32.mxu0 %v70
  %682 = vmatmul.mubr.f32.gmra.mrb[0].mxu0 %v69
  %v683 = vpop.f32.mrb[0].mxu0
  %v684 = vadd.f32 %v599, %v683
  %v685 = vpop.f32.mrb[0].mxu0
  %686 = vmatprep.mubr.f32.mxu0 %v95
  %687 = vmatmul.mubr.f32.gmra.mrb[0].mxu0 %v94
  %v688 = vpop.f32.mrb[0].mxu0
  %v689 = vadd.f32 %v604, %v688
  %v690 = vpop.f32.mrb[0].mxu0
  %691 = vdwg.mxu0
  %692 = vmatprep.subr.mxu0 0.0
  %693 = vmatpush1.msra.mxu0 %v181
  %694 = vmatprep.subr.mxu0 0.0
  %695 = vmatpush1.msra.mxu0 %v182
  %696 = vmatprep.subr.mxu0 0.0
  %697 = vmatpush1.msra.mxu0 %v183
  %698 = vmatprep.subr.mxu0 0.0
  %699 = vmatpush1.msra.mxu0 %v184
  %700 = vmatprep.subr.mxu0 0.0
  %701 = vmatpush1.msra.mxu0 %v185
  %702 = vmatprep.subr.mxu0 0.0
  %703 = vmatpush1.msra.mxu0 %v186
  %704 = vmatprep.subr.mxu0 0.0
  %705 = vmatpush1.msra.mxu0 %v187
  %706 = vmatprep.subr.mxu0 0.0
  %707 = vmatpush1.msra.mxu0 %v188
  %708 = vmatprep.subr.mxu0 0.0
  %709 = vmatpush1.msra.mxu0 %v189
  %710 = vmatprep.subr.mxu0 0.0
  %711 = vmatpush1.msra.mxu0 %v190
  %712 = vmatprep.subr.mxu0 0.0
  %713 = vmatpush1.msra.mxu0 %v191
  %714 = vmatprep.subr.mxu0 0.0
  %715 = vmatpush1.msra.mxu0 %v192
  %716 = vmatprep.subr.mxu0 0.0
  %717 = vmatpush1.msra.mxu0 %v193
  %718 = vmatprep.subr.mxu0 0.0
  %719 = vmatpush1.msra.mxu0 %v194
  %720 = vmatprep.subr.mxu0 0.0
  %721 = vmatpush1.msra.mxu0 %v195
  %722 = vmatprep.subr.mxu0 0.0
  %723 = vmatpush1.msra.mxu0 %v196
  %724 = vmatprep.subr.mxu0 0.0
  %725 = vmatpush1.msra.mxu0 %v197
  %726 = vmatprep.subr.mxu0 0.0
  %727 = vmatpush1.msra.mxu0 %v198
  %728 = vmatprep.subr.mxu0 0.0
  %729 = vmatpush1.msra.mxu0 %v199
  %730 = vmatprep.subr.mxu0 0.0
  %731 = vmatpush1.msra.mxu0 %v200
  %732 = vmatprep.subr.mxu0 0.0
  %733 = vmatpush1.msra.mxu0 %v201
  %734 = vmatprep.subr.mxu0 0.0
  %735 = vmatpush1.msra.mxu0 %v202
  %736 = vmatprep.subr.mxu0 0.0
  %737 = vmatpush1.msra.mxu0 %v203
  %738 = vmatprep.subr.mxu0 0.0
  %739 = vmatpush1.msra.mxu0 %v204
  %740 = vmatprep.subr.mxu0 0.0
  %741 = vmatpush1.msra.mxu0 %v205
  %742 = vmatprep.subr.mxu0 0.0
  %743 = vmatpush1.msra.mxu0 %v206
  %744 = vmatprep.subr.mxu0 0.0
  %745 = vmatpush1.msra.mxu0 %v207
  %746 = vmatprep.subr.mxu0 0.0
  %747 = vmatpush1.msra.mxu0 %v208
  %748 = vmatprep.subr.mxu0 0.0
  %749 = vmatpush1.msra.mxu0 %v209
  %750 = vmatprep.subr.mxu0 0.0
  %751 = vmatpush1.msra.mxu0 %v210
  %752 = vmatprep.subr.mxu0 0.0
  %753 = vmatpush1.msra.mxu0 %v211
  %754 = vmatprep.subr.mxu0 0.0
  %755 = vmatpush1.msra.mxu0 %v212
  %756 = vmatprep.mubr.f32.mxu0 %v22
  %757 = vmatmul.mubr.f32.gmra.mrb[0].mxu0 %v21
  %v758 = vpop.f32.mrb[0].mxu0
  %v759 = vadd.f32 %v674, %v758
  %v760 = vpop.f32.mrb[0].mxu0
  %761 = vmatprep.mubr.f32.mxu0 %v47
  %762 = vmatmul.mubr.f32.gmra.mrb[0].mxu0 %v46
  %v763 = vpop.f32.mrb[0].mxu0
  %v764 = vadd.f32 %v679, %v763
  %v765 = vpop.f32.mrb[0].mxu0
  %766 = vmatprep.mubr.f32.mxu0 %v72
  %767 = vmatmul.mubr.f32.gmra.mrb[0].mxu0 %v71
  %v768 = vpop.f32.mrb[0].mxu0
  %v769 = vadd.f32 %v684, %v768
  %v770 = vpop.f32.mrb[0].mxu0
  %771 = vmatprep.mubr.f32.mxu0 %v97
  %772 = vmatmul.mubr.f32.gmra.mrb[0].mxu0 %v96
  %v773 = vpop.f32.mrb[0].mxu0
  %v774 = vadd.f32 %v689, %v773
  %v775 = vpop.f32.mrb[0].mxu0
  %776 = vdwg.mxu0
  %777 = vmatprep.subr.mxu0 0.0
  %778 = vmatpush1.msra.mxu0 %v213
  %779 = vmatprep.subr.mxu0 0.0
  %780 = vmatpush1.msra.mxu0 %v214
  %781 = vmatprep.subr.mxu0 0.0
  %782 = vmatpush1.msra.mxu0 %v215
  %783 = vmatprep.subr.mxu0 0.0
  %784 = vmatpush1.msra.mxu0 %v216
  %785 = vmatprep.subr.mxu0 0.0
  %786 = vmatpush1.msra.mxu0 %v217
  %787 = vmatprep.subr.mxu0 0.0
  %788 = vmatpush1.msra.mxu0 %v218
  %789 = vmatprep.subr.mxu0 0.0
  %790 = vmatpush1.msra.mxu0 %v219
  %791 = vmatprep.subr.mxu0 0.0
  %792 = vmatpush1.msra.mxu0 %v220
  %793 = vmatprep.subr.mxu0 0.0
  %794 = vmatpush1.msra.mxu0 %v221
  %795 = vmatprep.subr.mxu0 0.0
  %796 = vmatpush1.msra.mxu0 %v222
  %797 = vmatprep.subr.mxu0 0.0
  %798 = vmatpush1.msra.mxu0 %v223
  %799 = vmatprep.subr.mxu0 0.0
  %800 = vmatpush1.msra.mxu0 %v224
  %801 = vmatprep.subr.mxu0 0.0
  %802 = vmatpush1.msra.mxu0 %v225
  %803 = vmatprep.subr.mxu0 0.0
  %804 = vmatpush1.msra.mxu0 %v226
  %805 = vmatprep.subr.mxu0 0.0
  %806 = vmatpush1.msra.mxu0 %v227
  %807 = vmatprep.subr.mxu0 0.0
  %808 = vmatpush1.msra.mxu0 %v228
  %809 = vmatprep.subr.mxu0 0.0
  %810 = vmatpush1.msra.mxu0 %v229
  %811 = vmatprep.subr.mxu0 0.0
  %812 = vmatpush1.msra.mxu0 %v230
  %813 = vmatprep.subr.mxu0 0.0
  %814 = vmatpush1.msra.mxu0 %v231
  %815 = vmatprep.subr.mxu0 0.0
  %816 = vmatpush1.msra.mxu0 %v232
  %817 = vmatprep.subr.mxu0 0.0
  %818 = vmatpush1.msra.mxu0 %v233
  %819 = vmatprep.subr.mxu0 0.0
  %820 = vmatpush1.msra.mxu0 %v234
  %821 = vmatprep.subr.mxu0 0.0
  %822 = vmatpush1.msra.mxu0 %v235
  %823 = vmatprep.subr.mxu0 0.0
  %824 = vmatpush1.msra.mxu0 %v236
  %825 = vmatprep.subr.mxu0 0.0
  %826 = vmatpush1.msra.mxu0 %v237
  %827 = vmatprep.subr.mxu0 0.0
  %828 = vmatpush1.msra.mxu0 %v238
  %829 = vmatprep.subr.mxu0 0.0
  %830 = vmatpush1.msra.mxu0 %v239
  %831 = vmatprep.subr.mxu0 0.0
  %832 = vmatpush1.msra.mxu0 %v240
  %833 = vmatprep.subr.mxu0 0.0
  %834 = vmatpush1.msra.mxu0 %v241
  %835 = vmatprep.subr.mxu0 0.0
  %836 = vmatpush1.msra.mxu0 %v242
  %837 = vmatprep.subr.mxu0 0.0
  %838 = vmatpush1.msra.mxu0 %v243
  %839 = vmatprep.subr.mxu0 0.0
  %840 = vmatpush1.msra.mxu0 %v244
  %841 = vmatprep.mubr.f32.mxu0 %v24
  %842 = vmatmul.mubr.f32.gmra.mrb[0].mxu0 %v23
  %v843 = vpop.f32.mrb[0].mxu0
  %v844 = vadd.f32 %v759, %v843
  %v845 = vpop.f32.mrb[0].mxu0
  %846 = vmatprep.mubr.f32.mxu0 %v49
  %847 = vmatmul.mubr.f32.gmra.mrb[0].mxu0 %v48
  %v848 = vpop.f32.mrb[0].mxu0
  %v849 = vadd.f32 %v764, %v848
  %v850 = vpop.f32.mrb[0].mxu0
  %851 = vmatprep.mubr.f32.mxu0 %v74
  %852 = vmatmul.mubr.f32.gmra.mrb[0].mxu0 %v73
  %v853 = vpop.f32.mrb[0].mxu0
  %v854 = vadd.f32 %v769, %v853
  %v855 = vpop.f32.mrb[0].mxu0
  %856 = vmatprep.mubr.f32.mxu0 %v99
  %857 = vmatmul.mubr.f32.gmra.mrb[0].mxu0 %v98
  %v858 = vpop.f32.mrb[0].mxu0
  %v859 = vadd.f32 %v774, %v858
  %v860 = vpop.f32.mrb[0].mxu0
  %861 = vdwg.mxu0
  %862 = vmatprep.subr.mxu0 0.0
  %863 = vmatpush1.msra.mxu0 %v245
  %864 = vmatprep.subr.mxu0 0.0
  %865 = vmatpush1.msra.mxu0 %v246
  %866 = vmatprep.subr.mxu0 0.0
  %867 = vmatpush1.msra.mxu0 %v247
  %868 = vmatprep.subr.mxu0 0.0
  %869 = vmatpush1.msra.mxu0 %v248
  %870 = vmatprep.subr.mxu0 0.0
  %871 = vmatpush1.msra.mxu0 %v249
  %872 = vmatprep.subr.mxu0 0.0
  %873 = vmatpush1.msra.mxu0 %v250
  %874 = vmatprep.subr.mxu0 0.0
  %875 = vmatpush1.msra.mxu0 %v251
  %876 = vmatprep.subr.mxu0 0.0
  %877 = vmatpush1.msra.mxu0 %v252
  %878 = vmatprep.subr.mxu0 0.0
  %879 = vmatpush1.msra.mxu0 %v253
  %880 = vmatprep.subr.mxu0 0.0
  %881 = vmatpush1.msra.mxu0 %v254
  %882 = vmatprep.subr.mxu0 0.0
  %883 = vmatpush1.msra.mxu0 %v255
  %884 = vmatprep.subr.mxu0 0.0
  %885 = vmatpush1.msra.mxu0 %v256
  %886 = vmatprep.subr.mxu0 0.0
  %887 = vmatpush1.msra.mxu0 %v257
  %888 = vmatprep.subr.mxu0 0.0
  %889 = vmatpush1.msra.mxu0 %v258
  %890 = vmatprep.subr.mxu0 0.0
  %891 = vmatpush1.msra.mxu0 %v259
  %892 = vmatprep.subr.mxu0 0.0
  %893 = vmatpush1.msra.mxu0 %v260
  %894 = vmatprep.subr.mxu0 0.0
  %895 = vmatpush1.msra.mxu0 %v261
  %896 = vmatprep.subr.mxu0 0.0
  %897 = vmatpush1.msra.mxu0 %v262
  %898 = vmatprep.subr.mxu0 0.0
  %899 = vmatpush1.msra.mxu0 %v263
  %900 = vmatprep.subr.mxu0 0.0
  %901 = vmatpush1.msra.mxu0 %v264
  %902 = vmatprep.subr.mxu0 0.0
  %903 = vmatpush1.msra.mxu0 %v265
  %904 = vmatprep.subr.mxu0 0.0
  %905 = vmatpush1.msra.mxu0 %v266
  %906 = vmatprep.subr.mxu0 0.0
  %907 = vmatpush1.msra.mxu0 %v267
  %908 = vmatprep.subr.mxu0 0.0
  %909 = vmatpush1.msra.mxu0 %v268
  %910 = vmatprep.subr.mxu0 0.0
  %911 = vmatpush1.msra.mxu0 %v269
  %912 = vmatprep.subr.mxu0 0.0
  %913 = vmatpush1.msra.mxu0 %v270
  %914 = vmatprep.subr.mxu0 0.0
  %915 = vmatpush1.msra.mxu0 %v271
  %916 = vmatprep.subr.mxu0 0.0
  %917 = vmatpush1.msra.mxu0 %v272
  %918 = vmatprep.subr.mxu0 0.0
  %919 = vmatpush1.msra.mxu0 %v273
  %920 = vmatprep.subr.mxu0 0.0
  %921 = vmatpush1.msra.mxu0 %v274
  %922 = vmatprep.subr.mxu0 0.0
  %923 = vmatpush1.msra.mxu0 %v275
  %924 = vmatprep.subr.mxu0 0.0
  %925 = vmatpush1.msra.mxu0 %v276
  %926 = vmatprep.mubr.f32.mxu0 %v26
  %927 = vmatmul.mubr.f32.gmra.mrb[0].mxu0 %v25
  %v928 = vpop.f32.mrb[0].mxu0
  %v929 = vadd.f32 %v844, %v928
  %v930 = vpop.f32.mrb[0].mxu0
  %931 = vmatprep.mubr.f32.mxu0 %v51
  %932 = vmatmul.mubr.f32.gmra.mrb[0].mxu0 %v50
  %v933 = vpop.f32.mrb[0].mxu0
  %v934 = vadd.f32 %v849, %v933
  %v935 = vpop.f32.mrb[0].mxu0
  %936 = vmatprep.mubr.f32.mxu0 %v76
  %937 = vmatmul.mubr.f32.gmra.mrb[0].mxu0 %v75
  %v938 = vpop.f32.mrb[0].mxu0
  %v939 = vadd.f32 %v854, %v938
  %v940 = vpop.f32.mrb[0].mxu0
  %941 = vmatprep.mubr.f32.mxu0 %v101
  %942 = vmatmul.mubr.f32.gmra.mrb[0].mxu0 %v100
  %v943 = vpop.f32.mrb[0].mxu0
  %v944 = vadd.f32 %v859, %v943
  %v945 = vpop.f32.mrb[0].mxu0
  %946 = vdwg.mxu0
  %947 = vmatprep.subr.mxu0 0.0
  %948 = vmatpush1.msra.mxu0 %v277
  %949 = vmatprep.subr.mxu0 0.0
  %950 = vmatpush1.msra.mxu0 %v278
  %951 = vmatprep.subr.mxu0 0.0
  %952 = vmatpush1.msra.mxu0 %v279
  %953 = vmatprep.subr.mxu0 0.0
  %954 = vmatpush1.msra.mxu0 %v280
  %955 = vmatprep.subr.mxu0 0.0
  %956 = vmatpush1.msra.mxu0 %v281
  %957 = vmatprep.subr.mxu0 0.0
  %958 = vmatpush1.msra.mxu0 %v282
  %959 = vmatprep.subr.mxu0 0.0
  %960 = vmatpush1.msra.mxu0 %v283
  %961 = vmatprep.subr.mxu0 0.0
  %962 = vmatpush1.msra.mxu0 %v284
  %963 = vmatprep.subr.mxu0 0.0
  %964 = vmatpush1.msra.mxu0 %v285
  %965 = vmatprep.subr.mxu0 0.0
  %966 = vmatpush1.msra.mxu0 %v286
  %967 = vmatprep.subr.mxu0 0.0
  %968 = vmatpush1.msra.mxu0 %v287
  %969 = vmatprep.subr.mxu0 0.0
  %970 = vmatpush1.msra.mxu0 %v288
  %971 = vmatprep.subr.mxu0 0.0
  %972 = vmatpush1.msra.mxu0 %v289
  %973 = vmatprep.subr.mxu0 0.0
  %974 = vmatpush1.msra.mxu0 %v290
  %975 = vmatprep.subr.mxu0 0.0
  %976 = vmatpush1.msra.mxu0 %v291
  %977 = vmatprep.subr.mxu0 0.0
  %978 = vmatpush1.msra.mxu0 %v292
  %979 = vmatprep.subr.mxu0 0.0
  %980 = vmatpush1.msra.mxu0 %v293
  %981 = vmatprep.subr.mxu0 0.0
  %982 = vmatpush1.msra.mxu0 %v294
  %983 = vmatprep.subr.mxu0 0.0
  %984 = vmatpush1.msra.mxu0 %v295
  %985 = vmatprep.subr.mxu0 0.0
  %986 = vmatpush1.msra.mxu0 %v296
  %987 = vmatprep.subr.mxu0 0.0
  %988 = vmatpush1.msra.mxu0 %v297
  %989 = vmatprep.subr.mxu0 0.0
  %990 = vmatpush1.msra.mxu0 %v298
  %991 = vmatprep.subr.mxu0 0.0
  %992 = vmatpush1.msra.mxu0 %v299
  %993 = vmatprep.subr.mxu0 0.0
  %994 = vmatpush1.msra.mxu0 %v300
  %995 = vmatprep.subr.mxu0 0.0
  %996 = vmatpush1.msra.mxu0 %v301
  %997 = vmatprep.subr.mxu0 0.0
  %998 = vmatpush1.msra.mxu0 %v302
  %999 = vmatprep.subr.mxu0 0.0
  %1000 = vmatpush1.msra.mxu0 %v303
  %1001 = vmatprep.subr.mxu0 0.0
  %1002 = vmatpush1.msra.mxu0 %v304
  %1003 = vmatprep.subr.mxu0 0.0
  %1004 = vmatpush1.msra.mxu0 %v305
  %1005 = vmatprep.subr.mxu0 0.0
  %1006 = vmatpush1.msra.mxu0 %v306
  %1007 = vmatprep.subr.mxu0 0.0
  %1008 = vmatpush1.msra.mxu0 %v307
  %1009 = vmatprep.subr.mxu0 0.0
  %1010 = vmatpush1.msra.mxu0 %v308
  %1011 = vmatprep.mubr.f32.mxu0 %v28
  %1012 = vmatmul.mubr.f32.gmra.mrb[0].mxu0 %v27
  %v1013 = vpop.f32.mrb[0].mxu0
  %v1014 = vadd.f32 %v929, %v1013
  %v1015 = vpop.f32.mrb[0].mxu0
  %1016 = vmatprep.mubr.f32.mxu0 %v53
  %1017 = vmatmul.mubr.f32.gmra.mrb[0].mxu0 %v52
  %v1018 = vpop.f32.mrb[0].mxu0
  %v1019 = vadd.f32 %v934, %v1018
  %v1020 = vpop.f32.mrb[0].mxu0
  %1021 = vmatprep.mubr.f32.mxu0 %v78
  %1022 = vmatmul.mubr.f32.gmra.mrb[0].mxu0 %v77
  %v1023 = vpop.f32.mrb[0].mxu0
  %v1024 = vadd.f32 %v939, %v1023
  %v1025 = vpop.f32.mrb[0].mxu0
  %1026 = vmatprep.mubr.f32.mxu0 %v103
  %1027 = vmatmul.mubr.f32.gmra.mrb[0].mxu0 %v102
  %v1028 = vpop.f32.mrb[0].mxu0
  %v1029 = vadd.f32 %v944, %v1028
  %v1030 = vpop.f32.mrb[0].mxu0
  %1031 = vdwg.mxu0
  %1032 = vmatprep.subr.mxu0 0.0
  %1033 = vmatpush1.msra.mxu0 %v309
  %1034 = vmatprep.subr.mxu0 0.0
  %1035 = vmatpush1.msra.mxu0 %v310
  %1036 = vmatprep.subr.mxu0 0.0
  %1037 = vmatpush1.msra.mxu0 %v311
  %1038 = vmatprep.subr.mxu0 0.0
  %1039 = vmatpush1.msra.mxu0 %v312
  %1040 = vmatprep.subr.mxu0 0.0
  %1041 = vmatpush1.msra.mxu0 %v313
  %1042 = vmatprep.subr.mxu0 0.0
  %1043 = vmatpush1.msra.mxu0 %v314
  %1044 = vmatprep.subr.mxu0 0.0
  %1045 = vmatpush1.msra.mxu0 %v315
  %1046 = vmatprep.subr.mxu0 0.0
  %1047 = vmatpush1.msra.mxu0 %v316
  %1048 = vmatprep.subr.mxu0 0.0
  %1049 = vmatpush1.msra.mxu0 %v317
  %1050 = vmatprep.subr.mxu0 0.0
  %1051 = vmatpush1.msra.mxu0 %v318
  %1052 = vmatprep.subr.mxu0 0.0
  %1053 = vmatpush1.msra.mxu0 %v319
  %1054 = vmatprep.subr.mxu0 0.0
  %1055 = vmatpush1.msra.mxu0 %v320
  %1056 = vmatprep.subr.mxu0 0.0
  %1057 = vmatpush1.msra.mxu0 %v321
  %1058 = vmatprep.subr.mxu0 0.0
  %1059 = vmatpush1.msra.mxu0 %v322
  %1060 = vmatprep.subr.mxu0 0.0
  %1061 = vmatpush1.msra.mxu0 %v323
  %1062 = vmatprep.subr.mxu0 0.0
  %1063 = vmatpush1.msra.mxu0 %v324
  %1064 = vmatprep.subr.mxu0 0.0
  %1065 = vmatpush1.msra.mxu0 %v325
  %1066 = vmatprep.subr.mxu0 0.0
  %1067 = vmatpush1.msra.mxu0 %v326
  %1068 = vmatprep.subr.mxu0 0.0
  %1069 = vmatpush1.msra.mxu0 %v327
  %1070 = vmatprep.subr.mxu0 0.0
  %1071 = vmatpush1.msra.mxu0 %v328
  %1072 = vmatprep.subr.mxu0 0.0
  %1073 = vmatpush1.msra.mxu0 %v329
  %1074 = vmatprep.subr.mxu0 0.0
  %1075 = vmatpush1.msra.mxu0 %v330
  %1076 = vmatprep.subr.mxu0 0.0
  %1077 = vmatpush1.msra.mxu0 %v331
  %1078 = vmatprep.subr.mxu0 0.0
  %1079 = vmatpush1.msra.mxu0 %v332
  %1080 = vmatprep.subr.mxu0 0.0
  %1081 = vmatpush1.msra.mxu0 %v333
  %1082 = vmatprep.subr.mxu0 0.0
  %1083 = vmatpush1.msra.mxu0 %v334
  %1084 = vmatprep.subr.mxu0 0.0
  %1085 = vmatpush1.msra.mxu0 %v335
  %1086 = vmatprep.subr.mxu0 0.0
  %1087 = vmatpush1.msra.mxu0 %v336
  %1088 = vmatprep.subr.mxu0 0.0
  %1089 = vmatpush1.msra.mxu0 %v337
  %1090 = vmatprep.subr.mxu0 0.0
  %1091 = vmatpush1.msra.mxu0 %v338
  %1092 = vmatprep.subr.mxu0 0.0
  %1093 = vmatpush1.msra.mxu0 %v339
  %1094 = vmatprep.subr.mxu0 0.0
  %1095 = vmatpush1.msra.mxu0 %v340
  %1096 = vmatprep.mubr.f32.mxu0 %v30
  %1097 = vmatmul.mubr.f32.gmra.mrb[0].mxu0 %v29
  %v1098 = vpop.f32.mrb[0].mxu0
  %v1099 = vadd.f32 %v1014, %v1098
  %v1100 = vpop.f32.mrb[0].mxu0
  %1101 = vmatprep.mubr.f32.mxu0 %v55
  %1102 = vmatmul.mubr.f32.gmra.mrb[0].mxu0 %v54
  %v1103 = vpop.f32.mrb[0].mxu0
  %v1104 = vadd.f32 %v1019, %v1103
  %v1105 = vpop.f32.mrb[0].mxu0
  %1106 = vmatprep.mubr.f32.mxu0 %v80
  %1107 = vmatmul.mubr.f32.gmra.mrb[0].mxu0 %v79
  %v1108 = vpop.f32.mrb[0].mxu0
  %v1109 = vadd.f32 %v1024, %v1108
  %v1110 = vpop.f32.mrb[0].mxu0
  %1111 = vmatprep.mubr.f32.mxu0 %v105
  %1112 = vmatmul.mubr.f32.gmra.mrb[0].mxu0 %v104
  %v1113 = vpop.f32.mrb[0].mxu0
  %v1114 = vadd.f32 %v1029, %v1113
  %v1115 = vpop.f32.mrb[0].mxu0
  %1116 = vdwg.mxu0
  %1117 = vmatprep.subr.mxu0 0.0
  %1118 = vmatpush1.msra.mxu0 %v341
  %1119 = vmatprep.subr.mxu0 0.0
  %1120 = vmatpush1.msra.mxu0 %v342
  %1121 = vmatprep.subr.mxu0 0.0
  %1122 = vmatpush1.msra.mxu0 %v343
  %1123 = vmatprep.subr.mxu0 0.0
  %1124 = vmatpush1.msra.mxu0 %v344
  %1125 = vmatprep.subr.mxu0 0.0
  %1126 = vmatpush1.msra.mxu0 %v345
  %1127 = vmatprep.subr.mxu0 0.0
  %1128 = vmatpush1.msra.mxu0 %v346
  %1129 = vmatprep.subr.mxu0 0.0
  %1130 = vmatpush1.msra.mxu0 %v347
  %1131 = vmatprep.subr.mxu0 0.0
  %1132 = vmatpush1.msra.mxu0 %v348
  %1133 = vmatprep.subr.mxu0 0.0
  %1134 = vmatpush1.msra.mxu0 %v349
  %1135 = vmatprep.subr.mxu0 0.0
  %1136 = vmatpush1.msra.mxu0 %v350
  %1137 = vmatprep.subr.mxu0 0.0
  %1138 = vmatpush1.msra.mxu0 %v351
  %1139 = vmatprep.subr.mxu0 0.0
  %1140 = vmatpush1.msra.mxu0 %v352
  %1141 = vmatprep.subr.mxu0 0.0
  %1142 = vmatpush1.msra.mxu0 %v353
  %1143 = vmatprep.subr.mxu0 0.0
  %1144 = vmatpush1.msra.mxu0 %v354
  %1145 = vmatprep.subr.mxu0 0.0
  %1146 = vmatpush1.msra.mxu0 %v355
  %1147 = vmatprep.subr.mxu0 0.0
  %1148 = vmatpush1.msra.mxu0 %v356
  %1149 = vmatprep.subr.mxu0 0.0
  %1150 = vmatpush1.msra.mxu0 %v357
  %1151 = vmatprep.subr.mxu0 0.0
  %1152 = vmatpush1.msra.mxu0 %v358
  %1153 = vmatprep.subr.mxu0 0.0
  %1154 = vmatpush1.msra.mxu0 %v359
  %1155 = vmatprep.subr.mxu0 0.0
  %1156 = vmatpush1.msra.mxu0 %v360
  %1157 = vmatprep.subr.mxu0 0.0
  %1158 = vmatpush1.msra.mxu0 %v361
  %1159 = vmatprep.subr.mxu0 0.0
  %1160 = vmatpush1.msra.mxu0 %v362
  %1161 = vmatprep.subr.mxu0 0.0
  %1162 = vmatpush1.msra.mxu0 %v363
  %1163 = vmatprep.subr.mxu0 0.0
  %1164 = vmatpush1.msra.mxu0 %v364
  %1165 = vmatprep.subr.mxu0 0.0
  %1166 = vmatpush1.msra.mxu0 %v365
  %1167 = vmatprep.subr.mxu0 0.0
  %1168 = vmatpush1.msra.mxu0 %v366
  %1169 = vmatprep.subr.mxu0 0.0
  %1170 = vmatpush1.msra.mxu0 %v367
  %1171 = vmatprep.subr.mxu0 0.0
  %1172 = vmatpush1.msra.mxu0 %v368
  %1173 = vmatprep.subr.mxu0 0.0
  %1174 = vmatpush1.msra.mxu0 %v369
  %1175 = vmatprep.subr.mxu0 0.0
  %1176 = vmatpush1.msra.mxu0 %v370
  %1177 = vmatprep.subr.mxu0 0.0
  %1178 = vmatpush1.msra.mxu0 %v371
  %1179 = vmatprep.subr.mxu0 0.0
  %1180 = vmatpush1.msra.mxu0 %v372
  %1181 = vmatprep.mubr.f32.mxu0 %v32
  %1182 = vmatmul.mubr.f32.gmra.mrb[0].mxu0 %v31
  %v1183 = vpop.f32.mrb[0].mxu0
  %v1184 = vadd.f32 %v1099, %v1183
  %v1185 = vpop.f32.mrb[0].mxu0
  %1186 = vmatprep.mubr.f32.mxu0 %v57
  %1187 = vmatmul.mubr.f32.gmra.mrb[0].mxu0 %v56
  %v1188 = vpop.f32.mrb[0].mxu0
  %v1189 = vadd.f32 %v1104, %v1188
  %v1190 = vpop.f32.mrb[0].mxu0
  %1191 = vmatprep.mubr.f32.mxu0 %v82
  %1192 = vmatmul.mubr.f32.gmra.mrb[0].mxu0 %v81
  %v1193 = vpop.f32.mrb[0].mxu0
  %v1194 = vadd.f32 %v1109, %v1193
  %v1195 = vpop.f32.mrb[0].mxu0
  %1196 = vmatprep.mubr.f32.mxu0 %v107
  %1197 = vmatmul.mubr.f32.gmra.mrb[0].mxu0 %v106
  %v1198 = vpop.f32.mrb[0].mxu0
  %v1199 = vadd.f32 %v1114, %v1198
  %v1200 = vpop.f32.mrb[0].mxu0
  %1201 = vdwg.mxu0
  %1202 = vmatprep.subr.mxu0 0.0
  %1203 = vmatpush1.msra.mxu0 %v373
  %1204 = vmatprep.subr.mxu0 0.0
  %1205 = vmatpush1.msra.mxu0 %v374
  %1206 = vmatprep.subr.mxu0 0.0
  %1207 = vmatpush1.msra.mxu0 %v375
  %1208 = vmatprep.subr.mxu0 0.0
  %1209 = vmatpush1.msra.mxu0 %v376
  %1210 = vmatprep.subr.mxu0 0.0
  %1211 = vmatpush1.msra.mxu0 %v377
  %1212 = vmatprep.subr.mxu0 0.0
  %1213 = vmatpush1.msra.mxu0 %v378
  %1214 = vmatprep.subr.mxu0 0.0
  %1215 = vmatpush1.msra.mxu0 %v379
  %1216 = vmatprep.subr.mxu0 0.0
  %1217 = vmatpush1.msra.mxu0 %v380
  %1218 = vmatprep.subr.mxu0 0.0
  %1219 = vmatpush1.msra.mxu0 %v381
  %1220 = vmatprep.subr.mxu0 0.0
  %1221 = vmatpush1.msra.mxu0 %v382
  %1222 = vmatprep.subr.mxu0 0.0
  %1223 = vmatpush1.msra.mxu0 %v383
  %1224 = vmatprep.subr.mxu0 0.0
  %1225 = vmatpush1.msra.mxu0 %v384
  %1226 = vmatprep.subr.mxu0 0.0
  %1227 = vmatpush1.msra.mxu0 %v385
  %1228 = vmatprep.subr.mxu0 0.0
  %1229 = vmatpush1.msra.mxu0 %v386
  %1230 = vmatprep.subr.mxu0 0.0
  %1231 = vmatpush1.msra.mxu0 %v387
  %1232 = vmatprep.subr.mxu0 0.0
  %1233 = vmatpush1.msra.mxu0 %v388
  %1234 = vmatprep.subr.mxu0 0.0
  %1235 = vmatpush1.msra.mxu0 %v389
  %1236 = vmatprep.subr.mxu0 0.0
  %1237 = vmatpush1.msra.mxu0 %v390
  %1238 = vmatprep.subr.mxu0 0.0
  %1239 = vmatpush1.msra.mxu0 %v391
  %1240 = vmatprep.subr.mxu0 0.0
  %1241 = vmatpush1.msra.mxu0 %v392
  %1242 = vmatprep.subr.mxu0 0.0
  %1243 = vmatpush1.msra.mxu0 %v393
  %1244 = vmatprep.subr.mxu0 0.0
  %1245 = vmatpush1.msra.mxu0 %v394
  %1246 = vmatprep.subr.mxu0 0.0
  %1247 = vmatpush1.msra.mxu0 %v395
  %1248 = vmatprep.subr.mxu0 0.0
  %1249 = vmatpush1.msra.mxu0 %v396
  %1250 = vmatprep.subr.mxu0 0.0
  %1251 = vmatpush1.msra.mxu0 %v397
  %1252 = vmatprep.subr.mxu0 0.0
  %1253 = vmatpush1.msra.mxu0 %v398
  %1254 = vmatprep.subr.mxu0 0.0
  %1255 = vmatpush1.msra.mxu0 %v399
  %1256 = vmatprep.subr.mxu0 0.0
  %1257 = vmatpush1.msra.mxu0 %v400
  %1258 = vmatprep.subr.mxu0 0.0
  %1259 = vmatpush1.msra.mxu0 %v401
  %1260 = vmatprep.subr.mxu0 0.0
  %1261 = vmatpush1.msra.mxu0 %v402
  %1262 = vmatprep.subr.mxu0 0.0
  %1263 = vmatpush1.msra.mxu0 %v403
  %1264 = vmatprep.subr.mxu0 0.0
  %1265 = vmatpush1.msra.mxu0 %v404
  %1266 = vmatprep.mubr.f32.mxu0 %v34
  %1267 = vmatmul.mubr.f32.gmra.mrb[0].mxu0 %v33
  %v1268 = vpop.f32.mrb[0].mxu0
  %v1269 = vadd.f32 %v1184, %v1268
  %v1270 = vpop.f32.mrb[0].mxu0
  %1271 = vmatprep.mubr.f32.mxu0 %v59
  %1272 = vmatmul.mubr.f32.gmra.mrb[0].mxu0 %v58
  %v1273 = vpop.f32.mrb[0].mxu0
  %v1274 = vadd.f32 %v1189, %v1273
  %v1275 = vpop.f32.mrb[0].mxu0
  %1276 = vmatprep.mubr.f32.mxu0 %v84
  %1277 = vmatmul.mubr.f32.gmra.mrb[0].mxu0 %v83
  %v1278 = vpop.f32.mrb[0].mxu0
  %v1279 = vadd.f32 %v1194, %v1278
  %v1280 = vpop.f32.mrb[0].mxu0
  %1281 = vmatprep.mubr.f32.mxu0 %v109
  %1282 = vmatmul.mubr.f32.gmra.mrb[0].mxu0 %v108
  %v1283 = vpop.f32.mrb[0].mxu0
  %v1284 = vadd.f32 %v1199, %v1283
  %v1285 = vpop.f32.mrb[0].mxu0
  %1286 = vdwg.mxu0
  %1287 = vmatprep.subr.mxu0 0.0
  %1288 = vmatpush1.msra.mxu0 %v405
  %1289 = vmatprep.subr.mxu0 0.0
  %1290 = vmatpush1.msra.mxu0 %v406
  %1291 = vmatprep.subr.mxu0 0.0
  %1292 = vmatpush1.msra.mxu0 %v407
  %1293 = vmatprep.subr.mxu0 0.0
  %1294 = vmatpush1.msra.mxu0 %v408
  %1295 = vmatprep.subr.mxu0 0.0
  %1296 = vmatpush1.msra.mxu0 %v409
  %1297 = vmatprep.subr.mxu0 0.0
  %1298 = vmatpush1.msra.mxu0 %v410
  %1299 = vmatprep.subr.mxu0 0.0
  %1300 = vmatpush1.msra.mxu0 %v411
  %1301 = vmatprep.subr.mxu0 0.0
  %1302 = vmatpush1.msra.mxu0 %v412
  %1303 = vmatprep.subr.mxu0 0.0
  %1304 = vmatpush1.msra.mxu0 %v413
  %1305 = vmatprep.subr.mxu0 0.0
  %1306 = vmatpush1.msra.mxu0 %v414
  %1307 = vmatprep.subr.mxu0 0.0
  %1308 = vmatpush1.msra.mxu0 %v415
  %1309 = vmatprep.subr.mxu0 0.0
  %1310 = vmatpush1.msra.mxu0 %v416
  %1311 = vmatprep.subr.mxu0 0.0
  %1312 = vmatpush1.msra.mxu0 %v417
  %1313 = vmatprep.subr.mxu0 0.0
  %1314 = vmatpush1.msra.mxu0 %v418
  %1315 = vmatprep.subr.mxu0 0.0
  %1316 = vmatpush1.msra.mxu0 %v419
  %1317 = vmatprep.subr.mxu0 0.0
  %1318 = vmatpush1.msra.mxu0 %v420
  %1319 = vmatprep.subr.mxu0 0.0
  %1320 = vmatpush1.msra.mxu0 %v421
  %1321 = vmatprep.subr.mxu0 0.0
  %1322 = vmatpush1.msra.mxu0 %v422
  %1323 = vmatprep.subr.mxu0 0.0
  %1324 = vmatpush1.msra.mxu0 %v423
  %1325 = vmatprep.subr.mxu0 0.0
  %1326 = vmatpush1.msra.mxu0 %v424
  %1327 = vmatprep.subr.mxu0 0.0
  %1328 = vmatpush1.msra.mxu0 %v425
  %1329 = vmatprep.subr.mxu0 0.0
  %1330 = vmatpush1.msra.mxu0 %v426
  %1331 = vmatprep.subr.mxu0 0.0
  %1332 = vmatpush1.msra.mxu0 %v427
  %1333 = vmatprep.subr.mxu0 0.0
  %1334 = vmatpush1.msra.mxu0 %v428
  %1335 = vmatprep.subr.mxu0 0.0
  %1336 = vmatpush1.msra.mxu0 %v429
  %1337 = vmatprep.subr.mxu0 0.0
  %1338 = vmatpush1.msra.mxu0 %v430
  %1339 = vmatprep.subr.mxu0 0.0
  %1340 = vmatpush1.msra.mxu0 %v431
  %1341 = vmatprep.subr.mxu0 0.0
  %1342 = vmatpush1.msra.mxu0 %v432
  %1343 = vmatprep.subr.mxu0 0.0
  %1344 = vmatpush1.msra.mxu0 %v433
  %1345 = vmatprep.subr.mxu0 0.0
  %1346 = vmatpush1.msra.mxu0 %v434
  %1347 = vmatprep.subr.mxu0 0.0
  %1348 = vmatpush1.msra.mxu0 %v435
  %1349 = vmatprep.subr.mxu0 0.0
  %1350 = vmatpush1.msra.mxu0 %v436
  %1351 = vmatprep.mubr.f32.mxu0 %v36
  %1352 = vmatmul.mubr.f32.gmra.mrb[0].mxu0 %v35
  %v1353 = vpop.f32.mrb[0].mxu0
  %v1354 = vadd.f32 %v1269, %v1353
  %v1355 = vpop.f32.mrb[0].mxu0
  %1356 = vmatprep.mubr.f32.mxu0 %v61
  %1357 = vmatmul.mubr.f32.gmra.mrb[0].mxu0 %v60
  %v1358 = vpop.f32.mrb[0].mxu0
  %v1359 = vadd.f32 %v1274, %v1358
  %v1360 = vpop.f32.mrb[0].mxu0
  %1361 = vmatprep.mubr.f32.mxu0 %v86
  %1362 = vmatmul.mubr.f32.gmra.mrb[0].mxu0 %v85
  %v1363 = vpop.f32.mrb[0].mxu0
  %v1364 = vadd.f32 %v1279, %v1363
  %v1365 = vpop.f32.mrb[0].mxu0
  %1366 = vmatprep.mubr.f32.mxu0 %v111
  %1367 = vmatmul.mubr.f32.gmra.mrb[0].mxu0 %v110
  %v1368 = vpop.f32.mrb[0].mxu0
  %v1369 = vadd.f32 %v1284, %v1368
  %v1370 = vpop.f32.mrb[0].mxu0
  %1371 = vdwg.mxu0
  %1372 = vmatprep.subr.mxu0 0.0
  %1373 = vmatpush1.msra.mxu0 %v437
  %1374 = vmatprep.subr.mxu0 0.0
  %1375 = vmatpush1.msra.mxu0 %v438
  %1376 = vmatprep.subr.mxu0 0.0
  %1377 = vmatpush1.msra.mxu0 %v439
  %1378 = vmatprep.subr.mxu0 0.0
  %1379 = vmatpush1.msra.mxu0 %v440
  %1380 = vmatprep.subr.mxu0 0.0
  %1381 = vmatpush1.msra.mxu0 %v441
  %1382 = vmatprep.subr.mxu0 0.0
  %1383 = vmatpush1.msra.mxu0 %v442
  %1384 = vmatprep.subr.mxu0 0.0
  %1385 = vmatpush1.msra.mxu0 %v443
  %1386 = vmatprep.subr.mxu0 0.0
  %1387 = vmatpush1.msra.mxu0 %v444
  %1388 = vmatprep.subr.mxu0 0.0
  %1389 = vmatpush1.msra.mxu0 %v445
  %1390 = vmatprep.subr.mxu0 0.0
  %1391 = vmatpush1.msra.mxu0 %v446
  %1392 = vmatprep.subr.mxu0 0.0
  %1393 = vmatpush1.msra.mxu0 %v447
  %1394 = vmatprep.subr.mxu0 0.0
  %1395 = vmatpush1.msra.mxu0 %v448
  %1396 = vmatprep.subr.mxu0 0.0
  %1397 = vmatpush1.msra.mxu0 %v449
  %1398 = vmatprep.subr.mxu0 0.0
  %1399 = vmatpush1.msra.mxu0 %v450
  %1400 = vmatprep.subr.mxu0 0.0
  %1401 = vmatpush1.msra.mxu0 %v451
  %1402 = vmatprep.subr.mxu0 0.0
  %1403 = vmatpush1.msra.mxu0 %v452
  %1404 = vmatprep.subr.mxu0 0.0
  %1405 = vmatpush1.msra.mxu0 %v453
  %1406 = vmatprep.subr.mxu0 0.0
  %1407 = vmatpush1.msra.mxu0 %v454
  %1408 = vmatprep.subr.mxu0 0.0
  %1409 = vmatpush1.msra.mxu0 %v455
  %1410 = vmatprep.subr.mxu0 0.0
  %1411 = vmatpush1.msra.mxu0 %v456
  %1412 = vmatprep.subr.mxu0 0.0
  %1413 = vmatpush1.msra.mxu0 %v457
  %1414 = vmatprep.subr.mxu0 0.0
  %1415 = vmatpush1.msra.mxu0 %v458
  %1416 = vmatprep.subr.mxu0 0.0
  %1417 = vmatpush1.msra.mxu0 %v459
  %1418 = vmatprep.subr.mxu0 0.0
  %1419 = vmatpush1.msra.mxu0 %v460
  %1420 = vmatprep.subr.mxu0 0.0
  %1421 = vmatpush1.msra.mxu0 %v461
  %1422 = vmatprep.subr.mxu0 0.0
  %1423 = vmatpush1.msra.mxu0 %v462
  %1424 = vmatprep.subr.mxu0 0.0
  %1425 = vmatpush1.msra.mxu0 %v463
  %1426 = vmatprep.subr.mxu0 0.0
  %1427 = vmatpush1.msra.mxu0 %v464
  %1428 = vmatprep.subr.mxu0 0.0
  %1429 = vmatpush1.msra.mxu0 %v465
  %1430 = vmatprep.subr.mxu0 0.0
  %1431 = vmatpush1.msra.mxu0 %v466
  %1432 = vmatprep.subr.mxu0 0.0
  %1433 = vmatpush1.msra.mxu0 %v467
  %1434 = vmatprep.subr.mxu0 0.0
  %1435 = vmatpush1.msra.mxu0 %v468
  %1436 = vmatprep.mubr.f32.mxu0 %v38
  %1437 = vmatmul.mubr.f32.gmra.mrb[0].mxu0 %v37
  %v1438 = vpop.f32.mrb[0].mxu0
  %v1439 = vadd.f32 %v1354, %v1438
  %v1440 = vpop.f32.mrb[0].mxu0
  %1441 = vmatprep.mubr.f32.mxu0 %v63
  %1442 = vmatmul.mubr.f32.gmra.mrb[0].mxu0 %v62
  %v1443 = vpop.f32.mrb[0].mxu0
  %v1444 = vadd.f32 %v1359, %v1443
  %v1445 = vpop.f32.mrb[0].mxu0
  %1446 = vmatprep.mubr.f32.mxu0 %v88
  %1447 = vmatmul.mubr.f32.gmra.mrb[0].mxu0 %v87
  %v1448 = vpop.f32.mrb[0].mxu0
  %v1449 = vadd.f32 %v1364, %v1448
  %v1450 = vpop.f32.mrb[0].mxu0
  %1451 = vmatprep.mubr.f32.mxu0 %v113
  %1452 = vmatmul.mubr.f32.gmra.mrb[0].mxu0 %v112
  %v1453 = vpop.f32.mrb[0].mxu0
  %v1454 = vadd.f32 %v1369, %v1453
  %v1455 = vpop.f32.mrb[0].mxu0
  %1456 = vdwg.mxu0
  %1457 = vmatprep.subr.mxu0 0.0
  %1458 = vmatpush1.msra.mxu0 %v469
  %1459 = vmatprep.subr.mxu0 0.0
  %1460 = vmatpush1.msra.mxu0 %v470
  %1461 = vmatprep.subr.mxu0 0.0
  %1462 = vmatpush1.msra.mxu0 %v471
  %1463 = vmatprep.subr.mxu0 0.0
  %1464 = vmatpush1.msra.mxu0 %v472
  %1465 = vmatprep.subr.mxu0 0.0
  %1466 = vmatpush1.msra.mxu0 %v473
  %1467 = vmatprep.subr.mxu0 0.0
  %1468 = vmatpush1.msra.mxu0 %v474
  %1469 = vmatprep.subr.mxu0 0.0
  %1470 = vmatpush1.msra.mxu0 %v475
  %1471 = vmatprep.subr.mxu0 0.0
  %1472 = vmatpush1.msra.mxu0 %v476
  %1473 = vmatprep.subr.mxu0 0.0
  %1474 = vmatpush1.msra.mxu0 %v477
  %1475 = vmatprep.subr.mxu0 0.0
  %1476 = vmatpush1.msra.mxu0 %v478
  %1477 = vmatprep.subr.mxu0 0.0
  %1478 = vmatpush1.msra.mxu0 %v479
  %1479 = vmatprep.subr.mxu0 0.0
  %1480 = vmatpush1.msra.mxu0 %v480
  %1481 = vmatprep.subr.mxu0 0.0
  %1482 = vmatpush1.msra.mxu0 %v481
  %1483 = vmatprep.subr.mxu0 0.0
  %1484 = vmatpush1.msra.mxu0 %v482
  %1485 = vmatprep.subr.mxu0 0.0
  %1486 = vmatpush1.msra.mxu0 %v483
  %1487 = vmatprep.subr.mxu0 0.0
  %1488 = vmatpush1.msra.mxu0 %v484
  %1489 = vmatprep.subr.mxu0 0.0
  %1490 = vmatpush1.msra.mxu0 %v485
  %1491 = vmatprep.subr.mxu0 0.0
  %1492 = vmatpush1.msra.mxu0 %v486
  %1493 = vmatprep.subr.mxu0 0.0
  %1494 = vmatpush1.msra.mxu0 %v487
  %1495 = vmatprep.subr.mxu0 0.0
  %1496 = vmatpush1.msra.mxu0 %v488
  %1497 = vmatprep.subr.mxu0 0.0
  %1498 = vmatpush1.msra.mxu0 %v489
  %1499 = vmatprep.subr.mxu0 0.0
  %1500 = vmatpush1.msra.mxu0 %v490
  %1501 = vmatprep.subr.mxu0 0.0
  %1502 = vmatpush1.msra.mxu0 %v491
  %1503 = vmatprep.subr.mxu0 0.0
  %1504 = vmatpush1.msra.mxu0 %v492
  %1505 = vmatprep.subr.mxu0 0.0
  %1506 = vmatpush1.msra.mxu0 %v493
  %1507 = vmatprep.subr.mxu0 0.0
  %1508 = vmatpush1.msra.mxu0 %v494
  %1509 = vmatprep.subr.mxu0 0.0
  %1510 = vmatpush1.msra.mxu0 %v495
  %1511 = vmatprep.subr.mxu0 0.0
  %1512 = vmatpush1.msra.mxu0 %v496
  %1513 = vmatprep.subr.mxu0 0.0
  %1514 = vmatpush1.msra.mxu0 %v497
  %1515 = vmatprep.subr.mxu0 0.0
  %1516 = vmatpush1.msra.mxu0 %v498
  %1517 = vmatprep.subr.mxu0 0.0
  %1518 = vmatpush1.msra.mxu0 %v499
  %1519 = vmatprep.subr.mxu0 0.0
  %1520 = vmatpush1.msra.mxu0 %v500
  %1521 = vmatprep.mubr.f32.mxu0 %v40
  %1522 = vmatmul.mubr.f32.gmra.mrb[0].mxu0 %v39
  %v1523 = vpop.f32.mrb[0].mxu0
  %v1524 = vadd.f32 %v1439, %v1523
  %v1525 = vpop.f32.mrb[0].mxu0
  %1526 = vmatprep.mubr.f32.mxu0 %v65
  %1527 = vmatmul.mubr.f32.gmra.mrb[0].mxu0 %v64
  %v1528 = vpop.f32.mrb[0].mxu0
  %v1529 = vadd.f32 %v1444, %v1528
  %v1530 = vpop.f32.mrb[0].mxu0
  %1531 = vmatprep.mubr.f32.mxu0 %v90
  %1532 = vmatmul.mubr.f32.gmra.mrb[0].mxu0 %v89
  %v1533 = vpop.f32.mrb[0].mxu0
  %v1534 = vadd.f32 %v1449, %v1533
  %v1535 = vpop.f32.mrb[0].mxu0
  %1536 = vmatprep.mubr.f32.mxu0 %v115
  %1537 = vmatmul.mubr.f32.gmra.mrb[0].mxu0 %v114
  %v1538 = vpop.f32.mrb[0].mxu0
  %v1539 = vadd.f32 %v1454, %v1538
  %v1540 = vpop.f32.mrb[0].mxu0
  %1541 = vdwg.mxu0
  %1542 = vmatprep.subr.mxu0 0.0
  %1543 = vmatpush1.msra.mxu0 %v501
  %1544 = vmatprep.subr.mxu0 0.0
  %1545 = vmatpush1.msra.mxu0 %v502
  %1546 = vmatprep.subr.mxu0 0.0
  %1547 = vmatpush1.msra.mxu0 %v503
  %1548 = vmatprep.subr.mxu0 0.0
  %1549 = vmatpush1.msra.mxu0 %v504
  %1550 = vmatprep.subr.mxu0 0.0
  %1551 = vmatpush1.msra.mxu0 %v505
  %1552 = vmatprep.subr.mxu0 0.0
  %1553 = vmatpush1.msra.mxu0 %v506
  %1554 = vmatprep.subr.mxu0 0.0
  %1555 = vmatpush1.msra.mxu0 %v507
  %1556 = vmatprep.subr.mxu0 0.0
  %1557 = vmatpush1.msra.mxu0 %v508
  %1558 = vmatprep.subr.mxu0 0.0
  %1559 = vmatpush1.msra.mxu0 0.0
  %1560 = vmatprep.subr.mxu0 0.0
  %1561 = vmatpush1.msra.mxu0 0.0
  %1562 = vmatprep.subr.mxu0 0.0
  %1563 = vmatpush1.msra.mxu0 0.0
  %1564 = vmatprep.subr.mxu0 0.0
  %1565 = vmatpush1.msra.mxu0 0.0
  %1566 = vmatprep.subr.mxu0 0.0
  %1567 = vmatpush1.msra.mxu0 0.0
  %1568 = vmatprep.subr.mxu0 0.0
  %1569 = vmatpush1.msra.mxu0 0.0
  %1570 = vmatprep.subr.mxu0 0.0
  %1571 = vmatpush1.msra.mxu0 0.0
  %1572 = vmatprep.subr.mxu0 0.0
  %1573 = vmatpush1.msra.mxu0 0.0
  %1574 = vmatprep.subr.mxu0 0.0
  %1575 = vmatpush1.msra.mxu0 0.0
  %1576 = vmatprep.subr.mxu0 0.0
  %1577 = vmatpush1.msra.mxu0 0.0
  %1578 = vmatprep.subr.mxu0 0.0
  %1579 = vmatpush1.msra.mxu0 0.0
  %1580 = vmatprep.subr.mxu0 0.0
  %1581 = vmatpush1.msra.mxu0 0.0
  %1582 = vmatprep.subr.mxu0 0.0
  %1583 = vmatpush1.msra.mxu0 0.0
  %1584 = vmatprep.subr.mxu0 0.0
  %1585 = vmatpush1.msra.mxu0 0.0
  %1586 = vmatprep.subr.mxu0 0.0
  %1587 = vmatpush1.msra.mxu0 0.0
  %1588 = vmatprep.subr.mxu0 0.0
  %1589 = vmatpush1.msra.mxu0 0.0
  %1590 = vmatprep.subr.mxu0 0.0
  %1591 = vmatpush1.msra.mxu0 0.0
  %1592 = vmatprep.subr.mxu0 0.0
  %1593 = vmatpush1.msra.mxu0 0.0
  %1594 = vmatprep.subr.mxu0 0.0
  %1595 = vmatpush1.msra.mxu0 0.0
  %1596 = vmatprep.subr.mxu0 0.0
  %1597 = vmatpush1.msra.mxu0 0.0
  %1598 = vmatprep.subr.mxu0 0.0
  %1599 = vmatpush1.msra.mxu0 0.0
  %1600 = vmatprep.subr.mxu0 0.0
  %1601 = vmatpush1.msra.mxu0 0.0
  %1602 = vmatprep.subr.mxu0 0.0
  %1603 = vmatpush1.msra.mxu0 0.0
  %1604 = vmatprep.subr.mxu0 0.0
  %1605 = vmatpush1.msra.mxu0 0.0
  %1606 = vmatprep.mubr.f32.mxu0 0.0
  %1607 = vmatmul.mubr.f32.gmra.mrb[0].mxu0 %v511
  %v1608 = vpop.f32.mrb[0].mxu0
  %v1609 = vadd.f32 %v1524, %v1608
  %v1610 = vpop.f32.mrb[0].mxu0
  %1611 = vmatprep.mubr.f32.mxu0 0.0
  %1612 = vmatmul.mubr.f32.gmra.mrb[0].mxu0 %v514
  %v1613 = vpop.f32.mrb[0].mxu0
  %v1614 = vadd.f32 %v1529, %v1613
  %v1615 = vpop.f32.mrb[0].mxu0
  %1616 = vmatprep.mubr.f32.mxu0 0.0
  %1617 = vmatmul.mubr.f32.gmra.mrb[0].mxu0 %v517
  %v1618 = vpop.f32.mrb[0].mxu0
  %v1619 = vadd.f32 %v1534, %v1618
  %v1620 = vpop.f32.mrb[0].mxu0
  %1621 = vmatprep.mubr.f32.mxu0 0.0
  %1622 = vmatmul.mubr.f32.gmra.mrb[0].mxu0 %v520
  %v1623 = vpop.f32.mrb[0].mxu0
  %v1624 = vadd.f32 %v1539, %v1623
  %v1625 = vpop.f32.mrb[0].mxu0
  %1626 = vdwg.mxu0
  %v1627 = vld [vmem:[%s2] sm:$0x1]
  %v1629 = vlaneseq
  %v1630 = vshrl.u32 %v1629, 7
  %v1631 = vsub.s32 0, %v1630
  %v1632 = vrot.slane %v1627, %v1631
  %v1634 = vmul.f32 %v1609, %v1632
  %v1635 = vmul.f32 %v1614, %v1632
  %v1636 = vmul.f32 %v1619, %v1632
  %v1637 = vmul.f32 %v1624, %v1632
  %v1638 = vld [vmem:[%s3] sm:$0x1]
  %v1640 = vlaneseq
  %v1641 = vshrl.u32 %v1640, 7
  %v1642 = vsub.s32 0, %v1641
  %v1643 = vrot.slane %v1638, %v1642
  %v1645 = vadd.f32 %v1634, %v1643
  %v1646 = vadd.f32 %v1635, %v1643
  %v1647 = vadd.f32 %v1636, %v1643
  %v1648 = vadd.f32 %v1637, %v1643
  %v1649 = vmax.f32 %v1645, 0.0
  %v1650 = vmax.f32 %v1646, 0.0
  %v1651 = vmax.f32 %v1647, 0.0
  %v1652 = vmax.f32 %v1648, 0.0
  %1653 = vst.msk [vmem:[%s4] sm:$0xff] %vm509, %v1649
  %1654 = vst.msk [vmem:[%s4 + $0x8] sm:$0xff] %vm509, %v1650
  %1655 = vst.msk [vmem:[%s4 + $0x10] sm:$0xff] %vm509, %v1651
  %1656 = vst.msk [vmem:[%s4 + $0x18] sm:$0xff] %vm509, %v1652
  // Predicated region
  $region18: #{evo_encoder_forward.18} parent=0 // pred_check
    _
  $region19: #{evo_encoder_forward.18} parent=0 // pred_check_branch
    %1658 = sbr.rel (0) target = $region21
  $region20: #{evo_encoder_forward.18} parent=0 // pred_region
    _
  $region21: #{evo_encoder_forward.18} parent=0 // pred_fallthru
    _
  // Predicated region
  $region22: #{evo_encoder_forward.18} parent=0 // pred_check
    _
  $region23: #{evo_encoder_forward.18} parent=0 // pred_check_branch
    %1660 = sbr.rel (0) target = $region25
  $region24: #{evo_encoder_forward.18} parent=0 // pred_region
    _
  $region25: #{evo_encoder_forward.18} parent=0 // pred_fallthru
    _

</llo_original>
